<compile_context>
chip_gen: v6e
topology: v6e:2x2x1
jax: 0.10.0
libtpu: 0.0.40
codegen_flags: <defaults>
</compile_context>

<pallas_src>
import functools
from collections import namedtuple

import jax
import jax.numpy as jnp
from jax import lax
from jax.experimental import pallas as pl
from jax.experimental.pallas import tpu as pltpu

NeuronState = namedtuple("NeuronState", ["U", "I", "S", "D", "C"])

_LANES = 128


def _stdp_lif_fused_kernel(sin_ref, ps_ref, ns_ref, w_in_ref, init_ref,
                           trace_ref, w_out_ref,
                           w_scr, u_scr, i_scr, s_scr, c_scr,
                           *, T, TB, alpha, beta, delay, th,
                           a_plus, a_minus, tau_plus, tau_minus, w_max, norm):
    blk = pl.program_id(0)

    @pl.when(blk == 0)
    def _init():
        w_scr[...] = w_in_ref[...]
        u_scr[...] = init_ref[:, 0:1]
        i_scr[...] = init_ref[:, 1:2]
        s_scr[...] = init_ref[:, 2:3]
        c_scr[...] = init_ref[:, 3:4]

    bias = init_ref[:, 4:5]                                      # (1, 1)
    lane = lax.broadcasted_iota(jnp.int32, (1, _LANES), 1)       # hoisted

    # Static unroll over the TB-step time tile; all Ref indices are static.
    for t in range(TB):
        gt = blk * TB + t
        valid = gt < T            # tail guard (T is padded up to TB multiple)

        U0 = u_scr[...]
        I0 = i_scr[...]
        S0 = s_scr[...]
        C0 = c_scr[...]
        W = w_scr[...]                                           # (R, 128)

        sin = sin_ref[t]                                         # (R, 128)
        ps = ps_ref[t]
        ns = ns_ref[t]

        # ---- LIF dynamics (LIFDensePopulation.forward) ----
        U_pre = alpha * U0 + I0 - S0 * U0
        # matvec kept on the VPU: lane reduce then sublane reduce.
        part = jnp.sum(sin * W, axis=-1, keepdims=True)          # (R, 1)
        fc = jnp.sum(part, axis=0, keepdims=True)                # (1, 1)
        I_pre = beta * I0 + fc + bias
        S_new = (U_pre > th).astype(jnp.float32)

        if delay != 0:   # static Python branch (mirrors `if state.D != 0`)
            in_pause = C0 > 0.0
            U_new = jnp.where(in_pause, U0, U_pre)
            I_new = jnp.where(in_pause,
                              jnp.where(C0 == 1.0, 0.0, I0),
                              jnp.where(S_new > 0.0, I0, I_pre))
            C_new = jnp.where(in_pause, C0 - 1.0,
                              jnp.where(S_new > 0.0, float(delay), 0.0))
            S_ret = (C0 == 1.0).astype(jnp.float32)
        else:
            U_new, I_new, C_new, S_ret = U_pre, I_pre, C0, S_new

        # ---- STDP on weight row 0 ----
        # TODO(synk): PyTorch upcasts the exp() term to double before clipping;
        # we stay in float32 on TPU.
        fired = S_ret != 0.0                                     # (1,1) bool
        rewards = jnp.where(jnp.logical_and(ps != 0.0, fired),
                            a_plus * jnp.exp(-ps / tau_plus), 0.0)
        penalties = jnp.where(
            jnp.logical_and(fired, jnp.logical_and(ns != 0.0, ps == 0.0)),
            a_minus * jnp.exp(-ns / tau_minus), 0.0)
        # LTP/LTD conditions are mutually exclusive per lane, so the two
        # sequential clips fuse into one (exact for W in [0, w_max], which
        # the module's __init__ and the clip itself guarantee).
        W_new = jnp.clip(W + rewards - penalties, 0.0, w_max)
        if norm:
            # TODO(synk): PyTorch divides by sum(W) with no epsilon; faithful.
            W_new = W_new / jnp.sum(W_new)

        # Commit carried state only for valid (non-padded) timesteps.
        u_scr[...] = jnp.where(valid, U_new, U0)
        i_scr[...] = jnp.where(valid, I_new, I0)
        s_scr[...] = jnp.where(valid, S_ret, S0)
        c_scr[...] = jnp.where(valid, C_new, C0)
        w_scr[...] = jnp.where(valid, W_new, W)

        # Lane-dense (1,128) trace row: lanes 0..3 = U, I, S, C.
        row = (jnp.where(lane == 0, U_new, 0.0)
               + jnp.where(lane == 1, I_new, 0.0)
               + jnp.where(lane == 2, S_ret, 0.0)
               + jnp.where(lane == 3, C_new, 0.0))
        trace_ref[t:t + 1, :] = row

    @pl.when(blk == pl.num_programs(0) - 1)
    def _finalize():
        w_out_ref[...] = w_scr[...]


@functools.lru_cache(maxsize=None)
def _build_fused_call(T, R, TB, alpha, beta, delay, th, a_plus, a_minus,
                      tau_plus, tau_minus, w_max, norm):
    n_blk = (T + TB - 1) // TB
    T_pad = n_blk * TB
    kern = functools.partial(
        _stdp_lif_fused_kernel, T=T, TB=TB, alpha=alpha, beta=beta,
        delay=delay, th=th, a_plus=a_plus, a_minus=a_minus,
        tau_plus=tau_plus, tau_minus=tau_minus, w_max=w_max, norm=norm)

    f = pl.pallas_call(
        kern,
        out_shape=(jax.ShapeDtypeStruct((T_pad, _LANES), jnp.float32),   # trace
                   jax.ShapeDtypeStruct((R, _LANES), jnp.float32)),      # W row
        grid=(n_blk,),
        in_specs=[
            pl.BlockSpec((TB, R, _LANES), lambda i: (i, 0, 0)),  # Sin stream
            pl.BlockSpec((TB, R, _LANES), lambda i: (i, 0, 0)),  # PSpikes
            pl.BlockSpec((TB, R, _LANES), lambda i: (i, 0, 0)),  # NSpikes
            pl.BlockSpec((R, _LANES), lambda i: (0, 0)),         # W row (once)
            pl.BlockSpec((1, 8), lambda i: (0, 0)),              # packed state+b
        ],
        out_specs=(
            pl.BlockSpec((TB, _LANES), lambda i: (i, 0)),        # per-step trace
            pl.BlockSpec((R, _LANES), lambda i: (0, 0)),         # final W row
        ),
        scratch_shapes=[
            pltpu.VMEM((R, _LANES), jnp.float32),   # carried weight row
            pltpu.VMEM((1, 1), jnp.float32),        # U
            pltpu.VMEM((1, 1), jnp.float32),        # I
            pltpu.VMEM((1, 1), jnp.float32),        # S
            pltpu.VMEM((1, 1), jnp.float32),        # C
        ],
        input_output_aliases={3: 1},   # W input buffer reused for final W
        compiler_params=pltpu.CompilerParams(
            dimension_semantics=("arbitrary",)),
    )
    return jax.jit(f, donate_argnums=(3,))


def stdp_lif_forward_fused(Sin, PSpikes, NSpikes, W, b, state, *,
                           alpha=0.9, beta=0.85, delay=0, th=1.0,
                           a_plus=0.03125, a_minus=0.0265625,
                           tau_plus=16.8, tau_minus=33.7, w_max=1.0,
                           norm=False, time_block=8):
    """Run T fused timesteps of STDPLIFDensePopulation.forward.

    Sin / PSpikes / NSpikes: (T, in_channels). Returns (final NeuronState,
    new weight matrix (1, in_channels), per-step trace (T, 4) = [U, I, S, C]).
    """
    out_channels, in_channels = W.shape
    assert out_channels == 1, "module only ever updates fc_layer.weight[0]"
    T = int(Sin.shape[0])

    R = (in_channels + _LANES - 1) // _LANES
    in_pad = R * _LANES
    TB = int(time_block)
    n_blk = (T + TB - 1) // TB
    T_pad = n_blk * TB

    def tile_stream(x):
        x = jnp.asarray(x, jnp.float32).reshape(T, in_channels)
        x = jnp.pad(x, ((0, T_pad - T), (0, in_pad - in_channels)))
        return x.reshape(T_pad, R, _LANES)

    sin3 = tile_stream(Sin)
    ps3 = tile_stream(PSpikes)
    ns3 = tile_stream(NSpikes)

    w_tiled = jnp.pad(jnp.asarray(W, jnp.float32).reshape(in_channels),
                      (0, in_pad - in_channels)).reshape(R, _LANES)

    init = jnp.concatenate([
        jnp.asarray(state.U, jnp.float32).reshape(1, 1),
        jnp.asarray(state.I, jnp.float32).reshape(1, 1),
        jnp.asarray(state.S, jnp.float32).reshape(1, 1),
        jnp.asarray(state.C, jnp.float32).reshape(1, 1),
        jnp.asarray(b, jnp.float32).reshape(1, 1),
        jnp.zeros((1, 3), jnp.float32)], axis=1)                 # (1, 8)

    f = _build_fused_call(T, R, TB, float(alpha), float(beta), int(delay),
                          float(th), float(a_plus), float(a_minus),
                          float(tau_plus), float(tau_minus), float(w_max),
                          bool(norm))
    trace_pad, w_final = f(sin3, ps3, ns3, w_tiled, init)

    trace = trace_pad[:T, :4]                                    # (T, 4)
    new_W = w_final.reshape(in_pad)[:in_channels].reshape(1, in_channels)
    fin = trace[T - 1]
    new_state = NeuronState(U=fin[0].reshape(1, 1), I=fin[1].reshape(1, 1),
                            S=fin[2].reshape(1, 1), D=int(delay),
                            C=fin[3].reshape(1, 1))
    return new_state, new_W, trace


def _reference_forward_seq(Sin, PSpikes, NSpikes, W, b, state, *,
                           alpha=0.9, beta=0.85, delay=0, th=1.0,
                           a_plus=0.03125, a_minus=0.0265625,
                           tau_plus=16.8, tau_minus=33.7, w_max=1.0,
                           norm=False):
    """Literal pure-jnp transcription of the PyTorch module, looped over T."""
    U = jnp.asarray(state.U, jnp.float32).reshape(1, 1)
    I = jnp.asarray(state.I, jnp.float32).reshape(1, 1)
    S = jnp.asarray(state.S, jnp.float32).reshape(1, 1)
    C = jnp.asarray(state.C, jnp.float32).reshape(1, 1)
    w = jnp.asarray(W, jnp.float32).reshape(-1)
    bias = jnp.asarray(b, jnp.float32).reshape(())
    T = Sin.shape[0]
    rows = []
    for t in range(T):
        sin = jnp.asarray(Sin[t], jnp.float32).reshape(-1)
        ps = jnp.asarray(PSpikes[t], jnp.float32).reshape(-1)
        ns = jnp.asarray(NSpikes[t], jnp.float32).reshape(-1)

        U_t = alpha * U + I - S * U
        I_t = beta * I + jnp.sum(sin * w) + bias
        S_t = (U_t > th).astype(jnp.float32)
        delayedS = S_t
        C_t = C
        if delay != 0:
            S_m = S_t * (C <= 0).astype(jnp.float32)
            delayedC = (C > 0).astype(jnp.float32)
            delayedS = (C == 1).astype(jnp.float32)
            pause = (C > 0).astype(jnp.float32)
            play = (pause == 0).astype(jnp.float32)
            prevU = U * pause
            U_t = U_t * play + prevU
            prevI = I * (pause + (S_m - delayedS))
            I_t = I_t * (play - S_m) + prevI
            C_t = (C - 1) * delayedC + delay * S_m
        U, I, S, C = U_t, I_t, delayedS, C_t

        fired = S[0, 0] != 0.0
        rew = jnp.where((ps != 0.0) & fired,
                        a_plus * jnp.exp(-ps / tau_plus), 0.0)
        w = jnp.clip(w + rew, 0.0, w_max)
        pen = jnp.where(fired & ((ns != 0.0) & (ps == 0.0)),
                        a_minus * jnp.exp(-ns / tau_minus), 0.0)
        w = jnp.clip(w - pen, 0.0, w_max)
        if norm:
            w = w / jnp.sum(w)
        rows.append(jnp.stack([U[0, 0], I[0, 0], S[0, 0], C[0, 0]]))
    final = NeuronState(U=U, I=I, S=S, D=delay, C=C)
    return final, w.reshape(1, -1), jnp.stack(rows)


if __name__ == "__main__":
    root_key = jax.random.PRNGKey(0)

    def run_case(key, T, in_channels, delay):
        k1, k2, k3 = jax.random.split(key, 3)
        Sin = (jax.random.uniform(k1, (T, in_channels)) < 0.3).astype(jnp.float32)
        # PSpikes / NSpikes: nonnegative spike-timing values (0 == "no spike")
        PSpikes = jnp.floor(
            jax.random.uniform(k2, (T, in_channels)) * 5.0).astype(jnp.float32)
        NSpikes = jnp.floor(
            jax.random.uniform(k3, (T, in_channels)) * 5.0).astype(jnp.float32)

        # Deterministic params mirroring __init__: weight=0.13, bias=0.
        W = jnp.full((1, in_channels), 0.13, dtype=jnp.float32)
        b = jnp.zeros((1,), dtype=jnp.float32)
        state0 = NeuronState(U=jnp.zeros((1, 1), jnp.float32),
                             I=jnp.zeros((1, 1), jnp.float32),
                             S=jnp.zeros((1, 1), jnp.float32),
                             D=delay,
                             C=jnp.zeros((1, 1), jnp.float32))

        # Reference first (kernel call donates its own padded copy of W).
        ref_state, ref_W, ref_trace = _reference_forward_seq(
            Sin, PSpikes, NSpikes, W, b, state0, delay=delay)

        new_state, new_W, trace = stdp_lif_forward_fused(
            Sin, PSpikes, NSpikes, W, b, state0, delay=delay)
        jax.block_until_ready((new_state.U, new_state.I, new_state.S,
                               new_state.C, new_W, trace))

        assert jnp.allclose(trace, ref_trace, rtol=2e-5, atol=2e-5), "trace"
        assert jnp.allclose(new_W, ref_W, rtol=2e-5, atol=2e-5), "weights"
        assert jnp.allclose(new_state.U, ref_state.U, rtol=2e-5, atol=2e-5)
        assert jnp.allclose(new_state.I, ref_state.I, rtol=2e-5, atol=2e-5)
        assert jnp.allclose(new_state.S, ref_state.S, rtol=2e-5, atol=2e-5)
        assert jnp.allclose(new_state.C, ref_state.C, rtol=2e-5, atol=2e-5)

    kA, kB = jax.random.split(root_key)
    # case 1: lane padding (100 -> 128) + ragged time tail (13 % 8 != 0), no delay
    run_case(kA, T=13, in_channels=100, delay=0)
    # case 2: two 128-lane tiles (R=2) + the refractory/delay path
    run_case(kB, T=24, in_channels=256, delay=3)

    print("KERNEL_OK")
</pallas_src>

<mosaic_0001>
module attributes {stable_mosaic.version = 11 : i64} {
  func.func @_stdp_lif_fused_kernel(%arg0: i32, %arg1: memref<8x1x128xf32, #tpu.memory_space<vmem>>, %arg2: memref<8x1x128xf32, #tpu.memory_space<vmem>>, %arg3: memref<8x1x128xf32, #tpu.memory_space<vmem>>, %arg4: memref<1x128xf32, #tpu.memory_space<vmem>>, %arg5: memref<1x8xf32, #tpu.memory_space<vmem>>, %arg6: memref<8x128xf32, #tpu.memory_space<vmem>>, %arg7: memref<1x128xf32, #tpu.memory_space<vmem>>, %arg8: memref<1x128xf32, #tpu.memory_space<vmem>>, %arg9: memref<1x1xf32, #tpu.memory_space<vmem>>, %arg10: memref<1x1xf32, #tpu.memory_space<vmem>>, %arg11: memref<1x1xf32, #tpu.memory_space<vmem>>, %arg12: memref<1x1xf32, #tpu.memory_space<vmem>>) attributes {dimension_semantics = [#tpu.dimension_semantics<arbitrary>], iteration_bounds = array<i64: 2>, scalar_prefetch = 0 : i64, scratch_operands = 5 : i64, tpu.core_type = #tpu.core_type<tc>, window_params = [{transform_indices = @transform_0, window_bounds = array<i64: 8, 1, 128>}, {transform_indices = @transform_1, window_bounds = array<i64: 8, 1, 128>}, {transform_indices = @transform_2, window_bounds = array<i64: 8, 1, 128>}, {pipeline_mode = #tpu.pipeline_mode<synchronous>, transform_indices = @transform_3, window_bounds = array<i64: 1, 128>}, {pipeline_mode = #tpu.pipeline_mode<synchronous>, transform_indices = @transform_4, window_bounds = array<i64: 1, 8>}, {transform_indices = @transform_5, window_bounds = array<i64: 8, 128>}, {pipeline_mode = #tpu.pipeline_mode<synchronous>, transform_indices = @transform_6, window_bounds = array<i64: 1, 128>}]} {
    %c0_i32 = arith.constant 0 : i32
    %0 = arith.cmpi eq, %arg0, %c0_i32 : i32
    %1 = arith.extui %0 : i1 to i32
    %c0_i32_0 = arith.constant 0 : i32
    %2 = arith.cmpi ne, %1, %c0_i32_0 : i32
    scf.if %2 {
      %c0_475 = arith.constant 0 : index
      %c0_476 = arith.constant 0 : index
      %864 = vector.load %arg4[%c0_475, %c0_476] : memref<1x128xf32, #tpu.memory_space<vmem>>, vector<1x128xf32>
      %c0_477 = arith.constant 0 : index
      %c0_478 = arith.constant 0 : index
      %865 = vector.load %arg8[%c0_477, %c0_478] : memref<1x128xf32, #tpu.memory_space<vmem>>, vector<1x128xf32>
      tpu.vector_store %arg8[%c0_477, %c0_478], %864 {strides = array<i32>} : memref<1x128xf32, #tpu.memory_space<vmem>>, vector<1x128xf32>,
      %c0_479 = arith.constant 0 : index
      %c0_480 = arith.constant 0 : index
      %866 = vector.load %arg5[%c0_479, %c0_480] : memref<1x8xf32, #tpu.memory_space<vmem>>, vector<1x1xf32>
      %c0_481 = arith.constant 0 : index
      %c0_482 = arith.constant 0 : index
      %867 = vector.load %arg9[%c0_481, %c0_482] : memref<1x1xf32, #tpu.memory_space<vmem>>, vector<1x1xf32>
      tpu.vector_store %arg9[%c0_481, %c0_482], %866 {strides = array<i32>} : memref<1x1xf32, #tpu.memory_space<vmem>>, vector<1x1xf32>,
      %c0_483 = arith.constant 0 : index
      %c1_484 = arith.constant 1 : index
      %868 = vector.load %arg5[%c0_483, %c1_484] : memref<1x8xf32, #tpu.memory_space<vmem>>, vector<1x1xf32>
      %c0_485 = arith.constant 0 : index
      %c0_486 = arith.constant 0 : index
      %869 = vector.load %arg10[%c0_485, %c0_486] : memref<1x1xf32, #tpu.memory_space<vmem>>, vector<1x1xf32>
      tpu.vector_store %arg10[%c0_485, %c0_486], %868 {strides = array<i32>} : memref<1x1xf32, #tpu.memory_space<vmem>>, vector<1x1xf32>,
      %c0_487 = arith.constant 0 : index
      %c2_488 = arith.constant 2 : index
      %870 = vector.load %arg5[%c0_487, %c2_488] : memref<1x8xf32, #tpu.memory_space<vmem>>, vector<1x1xf32>
      %c0_489 = arith.constant 0 : index
      %c0_490 = arith.constant 0 : index
      %871 = vector.load %arg11[%c0_489, %c0_490] : memref<1x1xf32, #tpu.memory_space<vmem>>, vector<1x1xf32>
      tpu.vector_store %arg11[%c0_489, %c0_490], %870 {strides = array<i32>} : memref<1x1xf32, #tpu.memory_space<vmem>>, vector<1x1xf32>,
      %c0_491 = arith.constant 0 : index
      %c3_492 = arith.constant 3 : index
      %872 = vector.load %arg5[%c0_491, %c3_492] : memref<1x8xf32, #tpu.memory_space<vmem>>, vector<1x1xf32>
      %c0_493 = arith.constant 0 : index
      %c0_494 = arith.constant 0 : index
      %873 = vector.load %arg12[%c0_493, %c0_494] : memref<1x1xf32, #tpu.memory_space<vmem>>, vector<1x1xf32>
      tpu.vector_store %arg12[%c0_493, %c0_494], %872 {strides = array<i32>} : memref<1x1xf32, #tpu.memory_space<vmem>>, vector<1x1xf32>,
    } else {
    }
    %c0 = arith.constant 0 : index
    %c4 = arith.constant 4 : index
    %3 = vector.load %arg5[%c0, %c4] : memref<1x8xf32, #tpu.memory_space<vmem>>, vector<1x1xf32>
    %4 = tpu.iota {dimensions = array<i32: 1>} : vector<1x128xi32>
    %c8_i32 = arith.constant 8 : i32
    %5 = arith.muli %arg0, %c8_i32 : i32
    %c0_i32_1 = arith.constant 0 : i32
    %6 = arith.addi %5, %c0_i32_1 : i32
    %c13_i32 = arith.constant 13 : i32
    %7 = arith.cmpi slt, %6, %c13_i32 : i32
    %c0_2 = arith.constant 0 : index
    %c0_3 = arith.constant 0 : index
    %8 = vector.load %arg9[%c0_2, %c0_3] : memref<1x1xf32, #tpu.memory_space<vmem>>, vector<1x1xf32>
    %c0_4 = arith.constant 0 : index
    %c0_5 = arith.constant 0 : index
    %9 = vector.load %arg10[%c0_4, %c0_5] : memref<1x1xf32, #tpu.memory_space<vmem>>, vector<1x1xf32>
    %c0_6 = arith.constant 0 : index
    %c0_7 = arith.constant 0 : index
    %10 = vector.load %arg11[%c0_6, %c0_7] : memref<1x1xf32, #tpu.memory_space<vmem>>, vector<1x1xf32>
    %c0_8 = arith.constant 0 : index
    %c0_9 = arith.constant 0 : index
    %11 = vector.load %arg12[%c0_8, %c0_9] : memref<1x1xf32, #tpu.memory_space<vmem>>, vector<1x1xf32>
    %c0_10 = arith.constant 0 : index
    %c0_11 = arith.constant 0 : index
    %12 = vector.load %arg8[%c0_10, %c0_11] : memref<1x128xf32, #tpu.memory_space<vmem>>, vector<1x128xf32>
    %c0_12 = arith.constant 0 : index
    %c0_13 = arith.constant 0 : index
    %c0_14 = arith.constant 0 : index
    %13 = vector.load %arg1[%c0_12, %c0_13, %c0_14] : memref<8x1x128xf32, #tpu.memory_space<vmem>>, vector<1x1x128xf32>
    %14 = vector.shape_cast %13 : vector<1x1x128xf32> to vector<1x128xf32>
    %c0_15 = arith.constant 0 : index
    %c0_16 = arith.constant 0 : index
    %c0_17 = arith.constant 0 : index
    %15 = vector.load %arg2[%c0_15, %c0_16, %c0_17] : memref<8x1x128xf32, #tpu.memory_space<vmem>>, vector<1x1x128xf32>
    %16 = vector.shape_cast %15 : vector<1x1x128xf32> to vector<1x128xf32>
    %c0_18 = arith.constant 0 : index
    %c0_19 = arith.constant 0 : index
    %c0_20 = arith.constant 0 : index
    %17 = vector.load %arg3[%c0_18, %c0_19, %c0_20] : memref<8x1x128xf32, #tpu.memory_space<vmem>>, vector<1x1x128xf32>
    %18 = vector.shape_cast %17 : vector<1x1x128xf32> to vector<1x128xf32>
    %cst = arith.constant 0.899999976 : f32
    %19 = vector.broadcast %cst : f32 to vector<1x1xf32>
    %20 = arith.mulf %19, %8 : vector<1x1xf32>
    %21 = arith.addf %20, %9 : vector<1x1xf32>
    %22 = arith.mulf %10, %8 : vector<1x1xf32>
    %23 = arith.subf %21, %22 : vector<1x1xf32>
    %24 = arith.mulf %14, %12 : vector<1x128xf32>
    %cst_21 = arith.constant dense<0.000000e+00> : vector<1xf32>
    %25 = vector.multi_reduction <add>, %24, %cst_21 [1] : vector<1x128xf32> to vector<1xf32>
    %26 = vector.shape_cast %25 : vector<1xf32> to vector<1x1xf32>
    %cst_22 = arith.constant dense<0.000000e+00> : vector<1xf32>
    %27 = vector.multi_reduction <add>, %26, %cst_22 [0] : vector<1x1xf32> to vector<1xf32>
    %28 = vector.shape_cast %27 : vector<1xf32> to vector<1x1xf32>
    %cst_23 = arith.constant 8.500000e-01 : f32
    %29 = vector.broadcast %cst_23 : f32 to vector<1x1xf32>
    %30 = arith.mulf %29, %9 : vector<1x1xf32>
    %31 = arith.addf %30, %28 : vector<1x1xf32>
    %32 = arith.addf %31, %3 : vector<1x1xf32>
    %cst_24 = arith.constant 1.000000e+00 : f32
    %33 = vector.broadcast %cst_24 : f32 to vector<1x1xf32>
    %34 = arith.cmpf ogt, %23, %33 : vector<1x1xf32>
    %35 = arith.extui %34 : vector<1x1xi1> to vector<1x1xi32>
    %36 = arith.sitofp %35 : vector<1x1xi32> to vector<1x1xf32>
    %cst_25 = arith.constant 0.000000e+00 : f32
    %37 = vector.broadcast %cst_25 : f32 to vector<1x1xf32>
    %38 = arith.cmpf one, %36, %37 : vector<1x1xf32>
    %cst_26 = arith.constant 0.000000e+00 : f32
    %39 = vector.broadcast %cst_26 : f32 to vector<1x128xf32>
    %40 = arith.cmpf one, %16, %39 : vector<1x128xf32>
    %41 = vector.broadcast %38 : vector<1x1xi1> to vector<1x128xi1>
    %42 = arith.andi %40, %41 : vector<1x128xi1>
    %cst_27 = arith.constant 0.000000e+00 : f32
    %43 = vector.broadcast %cst_27 : f32 to vector<1x128xf32>
    %44 = arith.subf %43, %16 : vector<1x128xf32>
    %cst_28 = arith.constant 1.680000e+01 : f32
    %45 = vector.broadcast %cst_28 : f32 to vector<1x128xf32>
    %46 = arith.divf %44, %45 : vector<1x128xf32>
    %47 = math.exp %46 : vector<1x128xf32>
    %cst_29 = arith.constant 3.125000e-02 : f32
    %48 = vector.broadcast %cst_29 : f32 to vector<1x128xf32>
    %49 = arith.mulf %48, %47 : vector<1x128xf32>
    %cst_30 = arith.constant 0.000000e+00 : f32
    %50 = vector.broadcast %cst_30 : f32 to vector<1x128xf32>
    %51 = arith.select %42, %49, %50 : vector<1x128xi1>, vector<1x128xf32>
    %cst_31 = arith.constant 0.000000e+00 : f32
    %52 = vector.broadcast %cst_31 : f32 to vector<1x128xf32>
    %53 = arith.cmpf one, %18, %52 : vector<1x128xf32>
    %cst_32 = arith.constant 0.000000e+00 : f32
    %54 = vector.broadcast %cst_32 : f32 to vector<1x128xf32>
    %55 = arith.cmpf oeq, %16, %54 : vector<1x128xf32>
    %56 = arith.andi %53, %55 : vector<1x128xi1>
    %57 = vector.broadcast %38 : vector<1x1xi1> to vector<1x128xi1>
    %58 = arith.andi %57, %56 : vector<1x128xi1>
    %cst_33 = arith.constant 0.000000e+00 : f32
    %59 = vector.broadcast %cst_33 : f32 to vector<1x128xf32>
    %60 = arith.subf %59, %18 : vector<1x128xf32>
    %cst_34 = arith.constant 3.370000e+01 : f32
    %61 = vector.broadcast %cst_34 : f32 to vector<1x128xf32>
    %62 = arith.divf %60, %61 : vector<1x128xf32>
    %63 = math.exp %62 : vector<1x128xf32>
    %cst_35 = arith.constant 2.656250e-02 : f32
    %64 = vector.broadcast %cst_35 : f32 to vector<1x128xf32>
    %65 = arith.mulf %64, %63 : vector<1x128xf32>
    %cst_36 = arith.constant 0.000000e+00 : f32
    %66 = vector.broadcast %cst_36 : f32 to vector<1x128xf32>
    %67 = arith.select %58, %65, %66 : vector<1x128xi1>, vector<1x128xf32>
    %68 = arith.addf %12, %51 : vector<1x128xf32>
    %69 = arith.subf %68, %67 : vector<1x128xf32>
    %cst_37 = arith.constant 0.000000e+00 : f32
    %cst_38 = arith.constant 1.000000e+00 : f32
    %70 = vector.broadcast %cst_37 : f32 to vector<1x128xf32>
    %71 = arith.maximumf %70, %69 : vector<1x128xf32>
    %72 = vector.broadcast %cst_38 : f32 to vector<1x128xf32>
    %73 = arith.minimumf %72, %71 : vector<1x128xf32>
    %74 = arith.select %7, %23, %8 : vector<1x1xf32>
    %c0_39 = arith.constant 0 : index
    %c0_40 = arith.constant 0 : index
    %75 = vector.load %arg9[%c0_39, %c0_40] : memref<1x1xf32, #tpu.memory_space<vmem>>, vector<1x1xf32>
    tpu.vector_store %arg9[%c0_39, %c0_40], %74 {strides = array<i32>} : memref<1x1xf32, #tpu.memory_space<vmem>>, vector<1x1xf32>,
    %76 = arith.select %7, %32, %9 : vector<1x1xf32>
    %c0_41 = arith.constant 0 : index
    %c0_42 = arith.constant 0 : index
    %77 = vector.load %arg10[%c0_41, %c0_42] : memref<1x1xf32, #tpu.memory_space<vmem>>, vector<1x1xf32>
    tpu.vector_store %arg10[%c0_41, %c0_42], %76 {strides = array<i32>} : memref<1x1xf32, #tpu.memory_space<vmem>>, vector<1x1xf32>,
    %78 = arith.select %7, %36, %10 : vector<1x1xf32>
    %c0_43 = arith.constant 0 : index
    %c0_44 = arith.constant 0 : index
    %79 = vector.load %arg11[%c0_43, %c0_44] : memref<1x1xf32, #tpu.memory_space<vmem>>, vector<1x1xf32>
    tpu.vector_store %arg11[%c0_43, %c0_44], %78 {strides = array<i32>} : memref<1x1xf32, #tpu.memory_space<vmem>>, vector<1x1xf32>,
    %80 = arith.select %7, %11, %11 : vector<1x1xf32>
    %c0_45 = arith.constant 0 : index
    %c0_46 = arith.constant 0 : index
    %81 = vector.load %arg12[%c0_45, %c0_46] : memref<1x1xf32, #tpu.memory_space<vmem>>, vector<1x1xf32>
    tpu.vector_store %arg12[%c0_45, %c0_46], %80 {strides = array<i32>} : memref<1x1xf32, #tpu.memory_space<vmem>>, vector<1x1xf32>,
    %82 = arith.select %7, %73, %12 : vector<1x128xf32>
    %c0_47 = arith.constant 0 : index
    %c0_48 = arith.constant 0 : index
    %83 = vector.load %arg8[%c0_47, %c0_48] : memref<1x128xf32, #tpu.memory_space<vmem>>, vector<1x128xf32>
    tpu.vector_store %arg8[%c0_47, %c0_48], %82 {strides = array<i32>} : memref<1x128xf32, #tpu.memory_space<vmem>>, vector<1x128xf32>,
    %c0_i32_49 = arith.constant 0 : i32
    %84 = vector.broadcast %c0_i32_49 : i32 to vector<1x128xi32>
    %85 = arith.cmpi eq, %4, %84 : vector<1x128xi32>
    %cst_50 = arith.constant 0.000000e+00 : f32
    %86 = vector.shape_cast %23 : vector<1x1xf32> to vector<1x1xf32>
    %87 = vector.broadcast %86 : vector<1x1xf32> to vector<1x128xf32>
    %88 = vector.broadcast %cst_50 : f32 to vector<1x128xf32>
    %89 = arith.select %85, %87, %88 : vector<1x128xi1>, vector<1x128xf32>
    %c1_i32 = arith.constant 1 : i32
    %90 = vector.broadcast %c1_i32 : i32 to vector<1x128xi32>
    %91 = arith.cmpi eq, %4, %90 : vector<1x128xi32>
    %cst_51 = arith.constant 0.000000e+00 : f32
    %92 = vector.shape_cast %32 : vector<1x1xf32> to vector<1x1xf32>
    %93 = vector.broadcast %92 : vector<1x1xf32> to vector<1x128xf32>
    %94 = vector.broadcast %cst_51 : f32 to vector<1x128xf32>
    %95 = arith.select %91, %93, %94 : vector<1x128xi1>, vector<1x128xf32>
    %96 = arith.addf %89, %95 : vector<1x128xf32>
    %c2_i32 = arith.constant 2 : i32
    %97 = vector.broadcast %c2_i32 : i32 to vector<1x128xi32>
    %98 = arith.cmpi eq, %4, %97 : vector<1x128xi32>
    %cst_52 = arith.constant 0.000000e+00 : f32
    %99 = vector.shape_cast %36 : vector<1x1xf32> to vector<1x1xf32>
    %100 = vector.broadcast %99 : vector<1x1xf32> to vector<1x128xf32>
    %101 = vector.broadcast %cst_52 : f32 to vector<1x128xf32>
    %102 = arith.select %98, %100, %101 : vector<1x128xi1>, vector<1x128xf32>
    %103 = arith.addf %96, %102 : vector<1x128xf32>
    %c3_i32 = arith.constant 3 : i32
    %104 = vector.broadcast %c3_i32 : i32 to vector<1x128xi32>
    %105 = arith.cmpi eq, %4, %104 : vector<1x128xi32>
    %cst_53 = arith.constant 0.000000e+00 : f32
    %106 = vector.shape_cast %11 : vector<1x1xf32> to vector<1x1xf32>
    %107 = vector.broadcast %106 : vector<1x1xf32> to vector<1x128xf32>
    %108 = vector.broadcast %cst_53 : f32 to vector<1x128xf32>
    %109 = arith.select %105, %107, %108 : vector<1x128xi1>, vector<1x128xf32>
    %110 = arith.addf %103, %109 : vector<1x128xf32>
    %c0_54 = arith.constant 0 : index
    %c0_55 = arith.constant 0 : index
    %111 = vector.load %arg6[%c0_54, %c0_55] : memref<8x128xf32, #tpu.memory_space<vmem>>, vector<1x128xf32>
    tpu.vector_store %arg6[%c0_54, %c0_55], %110 {strides = array<i32>} : memref<8x128xf32, #tpu.memory_space<vmem>>, vector<1x128xf32>,
    %c8_i32_56 = arith.constant 8 : i32
    %112 = arith.muli %arg0, %c8_i32_56 : i32
    %c1_i32_57 = arith.constant 1 : i32
    %113 = arith.addi %112, %c1_i32_57 : i32
    %c13_i32_58 = arith.constant 13 : i32
    %114 = arith.cmpi slt, %113, %c13_i32_58 : i32
    %c0_59 = arith.constant 0 : index
    %c0_60 = arith.constant 0 : index
    %115 = vector.load %arg9[%c0_59, %c0_60] : memref<1x1xf32, #tpu.memory_space<vmem>>, vector<1x1xf32>
    %c0_61 = arith.constant 0 : index
    %c0_62 = arith.constant 0 : index
    %116 = vector.load %arg10[%c0_61, %c0_62] : memref<1x1xf32, #tpu.memory_space<vmem>>, vector<1x1xf32>
    %c0_63 = arith.constant 0 : index
    %c0_64 = arith.constant 0 : index
    %117 = vector.load %arg11[%c0_63, %c0_64] : memref<1x1xf32, #tpu.memory_space<vmem>>, vector<1x1xf32>
    %c0_65 = arith.constant 0 : index
    %c0_66 = arith.constant 0 : index
    %118 = vector.load %arg12[%c0_65, %c0_66] : memref<1x1xf32, #tpu.memory_space<vmem>>, vector<1x1xf32>
    %c0_67 = arith.constant 0 : index
    %c0_68 = arith.constant 0 : index
    %119 = vector.load %arg8[%c0_67, %c0_68] : memref<1x128xf32, #tpu.memory_space<vmem>>, vector<1x128xf32>
    %c1 = arith.constant 1 : index
    %c0_69 = arith.constant 0 : index
    %c0_70 = arith.constant 0 : index
    %120 = vector.load %arg1[%c1, %c0_69, %c0_70] : memref<8x1x128xf32, #tpu.memory_space<vmem>>, vector<1x1x128xf32>
    %121 = vector.shape_cast %120 : vector<1x1x128xf32> to vector<1x128xf32>
    %c1_71 = arith.constant 1 : index
    %c0_72 = arith.constant 0 : index
    %c0_73 = arith.constant 0 : index
    %122 = vector.load %arg2[%c1_71, %c0_72, %c0_73] : memref<8x1x128xf32, #tpu.memory_space<vmem>>, vector<1x1x128xf32>
    %123 = vector.shape_cast %122 : vector<1x1x128xf32> to vector<1x128xf32>
    %c1_74 = arith.constant 1 : index
    %c0_75 = arith.constant 0 : index
    %c0_76 = arith.constant 0 : index
    %124 = vector.load %arg3[%c1_74, %c0_75, %c0_76] : memref<8x1x128xf32, #tpu.memory_space<vmem>>, vector<1x1x128xf32>
    %125 = vector.shape_cast %124 : vector<1x1x128xf32> to vector<1x128xf32>
    %cst_77 = arith.constant 0.899999976 : f32
    %126 = vector.broadcast %cst_77 : f32 to vector<1x1xf32>
    %127 = arith.mulf %126, %115 : vector<1x1xf32>
    %128 = arith.addf %127, %116 : vector<1x1xf32>
    %129 = arith.mulf %117, %115 : vector<1x1xf32>
    %130 = arith.subf %128, %129 : vector<1x1xf32>
    %131 = arith.mulf %121, %119 : vector<1x128xf32>
    %cst_78 = arith.constant dense<0.000000e+00> : vector<1xf32>
    %132 = vector.multi_reduction <add>, %131, %cst_78 [1] : vector<1x128xf32> to vector<1xf32>
    %133 = vector.shape_cast %132 : vector<1xf32> to vector<1x1xf32>
    %cst_79 = arith.constant dense<0.000000e+00> : vector<1xf32>
    %134 = vector.multi_reduction <add>, %133, %cst_79 [0] : vector<1x1xf32> to vector<1xf32>
    %135 = vector.shape_cast %134 : vector<1xf32> to vector<1x1xf32>
    %cst_80 = arith.constant 8.500000e-01 : f32
    %136 = vector.broadcast %cst_80 : f32 to vector<1x1xf32>
    %137 = arith.mulf %136, %116 : vector<1x1xf32>
    %138 = arith.addf %137, %135 : vector<1x1xf32>
    %139 = arith.addf %138, %3 : vector<1x1xf32>
    %cst_81 = arith.constant 1.000000e+00 : f32
    %140 = vector.broadcast %cst_81 : f32 to vector<1x1xf32>
    %141 = arith.cmpf ogt, %130, %140 : vector<1x1xf32>
    %142 = arith.extui %141 : vector<1x1xi1> to vector<1x1xi32>
    %143 = arith.sitofp %142 : vector<1x1xi32> to vector<1x1xf32>
    %cst_82 = arith.constant 0.000000e+00 : f32
    %144 = vector.broadcast %cst_82 : f32 to vector<1x1xf32>
    %145 = arith.cmpf one, %143, %144 : vector<1x1xf32>
    %cst_83 = arith.constant 0.000000e+00 : f32
    %146 = vector.broadcast %cst_83 : f32 to vector<1x128xf32>
    %147 = arith.cmpf one, %123, %146 : vector<1x128xf32>
    %148 = vector.broadcast %145 : vector<1x1xi1> to vector<1x128xi1>
    %149 = arith.andi %147, %148 : vector<1x128xi1>
    %cst_84 = arith.constant 0.000000e+00 : f32
    %150 = vector.broadcast %cst_84 : f32 to vector<1x128xf32>
    %151 = arith.subf %150, %123 : vector<1x128xf32>
    %cst_85 = arith.constant 1.680000e+01 : f32
    %152 = vector.broadcast %cst_85 : f32 to vector<1x128xf32>
    %153 = arith.divf %151, %152 : vector<1x128xf32>
    %154 = math.exp %153 : vector<1x128xf32>
    %cst_86 = arith.constant 3.125000e-02 : f32
    %155 = vector.broadcast %cst_86 : f32 to vector<1x128xf32>
    %156 = arith.mulf %155, %154 : vector<1x128xf32>
    %cst_87 = arith.constant 0.000000e+00 : f32
    %157 = vector.broadcast %cst_87 : f32 to vector<1x128xf32>
    %158 = arith.select %149, %156, %157 : vector<1x128xi1>, vector<1x128xf32>
    %cst_88 = arith.constant 0.000000e+00 : f32
    %159 = vector.broadcast %cst_88 : f32 to vector<1x128xf32>
    %160 = arith.cmpf one, %125, %159 : vector<1x128xf32>
    %cst_89 = arith.constant 0.000000e+00 : f32
    %161 = vector.broadcast %cst_89 : f32 to vector<1x128xf32>
    %162 = arith.cmpf oeq, %123, %161 : vector<1x128xf32>
    %163 = arith.andi %160, %162 : vector<1x128xi1>
    %164 = vector.broadcast %145 : vector<1x1xi1> to vector<1x128xi1>
    %165 = arith.andi %164, %163 : vector<1x128xi1>
    %cst_90 = arith.constant 0.000000e+00 : f32
    %166 = vector.broadcast %cst_90 : f32 to vector<1x128xf32>
    %167 = arith.subf %166, %125 : vector<1x128xf32>
    %cst_91 = arith.constant 3.370000e+01 : f32
    %168 = vector.broadcast %cst_91 : f32 to vector<1x128xf32>
    %169 = arith.divf %167, %168 : vector<1x128xf32>
    %170 = math.exp %169 : vector<1x128xf32>
    %cst_92 = arith.constant 2.656250e-02 : f32
    %171 = vector.broadcast %cst_92 : f32 to vector<1x128xf32>
    %172 = arith.mulf %171, %170 : vector<1x128xf32>
    %cst_93 = arith.constant 0.000000e+00 : f32
    %173 = vector.broadcast %cst_93 : f32 to vector<1x128xf32>
    %174 = arith.select %165, %172, %173 : vector<1x128xi1>, vector<1x128xf32>
    %175 = arith.addf %119, %158 : vector<1x128xf32>
    %176 = arith.subf %175, %174 : vector<1x128xf32>
    %cst_94 = arith.constant 0.000000e+00 : f32
    %cst_95 = arith.constant 1.000000e+00 : f32
    %177 = vector.broadcast %cst_94 : f32 to vector<1x128xf32>
    %178 = arith.maximumf %177, %176 : vector<1x128xf32>
    %179 = vector.broadcast %cst_95 : f32 to vector<1x128xf32>
    %180 = arith.minimumf %179, %178 : vector<1x128xf32>
    %181 = arith.select %114, %130, %115 : vector<1x1xf32>
    %c0_96 = arith.constant 0 : index
    %c0_97 = arith.constant 0 : index
    %182 = vector.load %arg9[%c0_96, %c0_97] : memref<1x1xf32, #tpu.memory_space<vmem>>, vector<1x1xf32>
    tpu.vector_store %arg9[%c0_96, %c0_97], %181 {strides = array<i32>} : memref<1x1xf32, #tpu.memory_space<vmem>>, vector<1x1xf32>,
    %183 = arith.select %114, %139, %116 : vector<1x1xf32>
    %c0_98 = arith.constant 0 : index
    %c0_99 = arith.constant 0 : index
    %184 = vector.load %arg10[%c0_98, %c0_99] : memref<1x1xf32, #tpu.memory_space<vmem>>, vector<1x1xf32>
    tpu.vector_store %arg10[%c0_98, %c0_99], %183 {strides = array<i32>} : memref<1x1xf32, #tpu.memory_space<vmem>>, vector<1x1xf32>,
    %185 = arith.select %114, %143, %117 : vector<1x1xf32>
    %c0_100 = arith.constant 0 : index
    %c0_101 = arith.constant 0 : index
    %186 = vector.load %arg11[%c0_100, %c0_101] : memref<1x1xf32, #tpu.memory_space<vmem>>, vector<1x1xf32>
    tpu.vector_store %arg11[%c0_100, %c0_101], %185 {strides = array<i32>} : memref<1x1xf32, #tpu.memory_space<vmem>>, vector<1x1xf32>,
    %187 = arith.select %114, %118, %118 : vector<1x1xf32>
    %c0_102 = arith.constant 0 : index
    %c0_103 = arith.constant 0 : index
    %188 = vector.load %arg12[%c0_102, %c0_103] : memref<1x1xf32, #tpu.memory_space<vmem>>, vector<1x1xf32>
    tpu.vector_store %arg12[%c0_102, %c0_103], %187 {strides = array<i32>} : memref<1x1xf32, #tpu.memory_space<vmem>>, vector<1x1xf32>,
    %189 = arith.select %114, %180, %119 : vector<1x128xf32>
    %c0_104 = arith.constant 0 : index
    %c0_105 = arith.constant 0 : index
    %190 = vector.load %arg8[%c0_104, %c0_105] : memref<1x128xf32, #tpu.memory_space<vmem>>, vector<1x128xf32>
    tpu.vector_store %arg8[%c0_104, %c0_105], %189 {strides = array<i32>} : memref<1x128xf32, #tpu.memory_space<vmem>>, vector<1x128xf32>,
    %c0_i32_106 = arith.constant 0 : i32
    %191 = vector.broadcast %c0_i32_106 : i32 to vector<1x128xi32>
    %192 = arith.cmpi eq, %4, %191 : vector<1x128xi32>
    %cst_107 = arith.constant 0.000000e+00 : f32
    %193 = vector.shape_cast %130 : vector<1x1xf32> to vector<1x1xf32>
    %194 = vector.broadcast %193 : vector<1x1xf32> to vector<1x128xf32>
    %195 = vector.broadcast %cst_107 : f32 to vector<1x128xf32>
    %196 = arith.select %192, %194, %195 : vector<1x128xi1>, vector<1x128xf32>
    %c1_i32_108 = arith.constant 1 : i32
    %197 = vector.broadcast %c1_i32_108 : i32 to vector<1x128xi32>
    %198 = arith.cmpi eq, %4, %197 : vector<1x128xi32>
    %cst_109 = arith.constant 0.000000e+00 : f32
    %199 = vector.shape_cast %139 : vector<1x1xf32> to vector<1x1xf32>
    %200 = vector.broadcast %199 : vector<1x1xf32> to vector<1x128xf32>
    %201 = vector.broadcast %cst_109 : f32 to vector<1x128xf32>
    %202 = arith.select %198, %200, %201 : vector<1x128xi1>, vector<1x128xf32>
    %203 = arith.addf %196, %202 : vector<1x128xf32>
    %c2_i32_110 = arith.constant 2 : i32
    %204 = vector.broadcast %c2_i32_110 : i32 to vector<1x128xi32>
    %205 = arith.cmpi eq, %4, %204 : vector<1x128xi32>
    %cst_111 = arith.constant 0.000000e+00 : f32
    %206 = vector.shape_cast %143 : vector<1x1xf32> to vector<1x1xf32>
    %207 = vector.broadcast %206 : vector<1x1xf32> to vector<1x128xf32>
    %208 = vector.broadcast %cst_111 : f32 to vector<1x128xf32>
    %209 = arith.select %205, %207, %208 : vector<1x128xi1>, vector<1x128xf32>
    %210 = arith.addf %203, %209 : vector<1x128xf32>
    %c3_i32_112 = arith.constant 3 : i32
    %211 = vector.broadcast %c3_i32_112 : i32 to vector<1x128xi32>
    %212 = arith.cmpi eq, %4, %211 : vector<1x128xi32>
    %cst_113 = arith.constant 0.000000e+00 : f32
    %213 = vector.shape_cast %118 : vector<1x1xf32> to vector<1x1xf32>
    %214 = vector.broadcast %213 : vector<1x1xf32> to vector<1x128xf32>
    %215 = vector.broadcast %cst_113 : f32 to vector<1x128xf32>
    %216 = arith.select %212, %214, %215 : vector<1x128xi1>, vector<1x128xf32>
    %217 = arith.addf %210, %216 : vector<1x128xf32>
    %c1_114 = arith.constant 1 : index
    %c0_115 = arith.constant 0 : index
    %218 = vector.load %arg6[%c1_114, %c0_115] : memref<8x128xf32, #tpu.memory_space<vmem>>, vector<1x128xf32>
    tpu.vector_store %arg6[%c1_114, %c0_115], %217 {strides = array<i32>} : memref<8x128xf32, #tpu.memory_space<vmem>>, vector<1x128xf32>,
    %c8_i32_116 = arith.constant 8 : i32
    %219 = arith.muli %arg0, %c8_i32_116 : i32
    %c2_i32_117 = arith.constant 2 : i32
    %220 = arith.addi %219, %c2_i32_117 : i32
    %c13_i32_118 = arith.constant 13 : i32
    %221 = arith.cmpi slt, %220, %c13_i32_118 : i32
    %c0_119 = arith.constant 0 : index
    %c0_120 = arith.constant 0 : index
    %222 = vector.load %arg9[%c0_119, %c0_120] : memref<1x1xf32, #tpu.memory_space<vmem>>, vector<1x1xf32>
    %c0_121 = arith.constant 0 : index
    %c0_122 = arith.constant 0 : index
    %223 = vector.load %arg10[%c0_121, %c0_122] : memref<1x1xf32, #tpu.memory_space<vmem>>, vector<1x1xf32>
    %c0_123 = arith.constant 0 : index
    %c0_124 = arith.constant 0 : index
    %224 = vector.load %arg11[%c0_123, %c0_124] : memref<1x1xf32, #tpu.memory_space<vmem>>, vector<1x1xf32>
    %c0_125 = arith.constant 0 : index
    %c0_126 = arith.constant 0 : index
    %225 = vector.load %arg12[%c0_125, %c0_126] : memref<1x1xf32, #tpu.memory_space<vmem>>, vector<1x1xf32>
    %c0_127 = arith.constant 0 : index
    %c0_128 = arith.constant 0 : index
    %226 = vector.load %arg8[%c0_127, %c0_128] : memref<1x128xf32, #tpu.memory_space<vmem>>, vector<1x128xf32>
    %c2 = arith.constant 2 : index
    %c0_129 = arith.constant 0 : index
    %c0_130 = arith.constant 0 : index
    %227 = vector.load %arg1[%c2, %c0_129, %c0_130] : memref<8x1x128xf32, #tpu.memory_space<vmem>>, vector<1x1x128xf32>
    %228 = vector.shape_cast %227 : vector<1x1x128xf32> to vector<1x128xf32>
    %c2_131 = arith.constant 2 : index
    %c0_132 = arith.constant 0 : index
    %c0_133 = arith.constant 0 : index
    %229 = vector.load %arg2[%c2_131, %c0_132, %c0_133] : memref<8x1x128xf32, #tpu.memory_space<vmem>>, vector<1x1x128xf32>
    %230 = vector.shape_cast %229 : vector<1x1x128xf32> to vector<1x128xf32>
    %c2_134 = arith.constant 2 : index
    %c0_135 = arith.constant 0 : index
    %c0_136 = arith.constant 0 : index
    %231 = vector.load %arg3[%c2_134, %c0_135, %c0_136] : memref<8x1x128xf32, #tpu.memory_space<vmem>>, vector<1x1x128xf32>
    %232 = vector.shape_cast %231 : vector<1x1x128xf32> to vector<1x128xf32>
    %cst_137 = arith.constant 0.899999976 : f32
    %233 = vector.broadcast %cst_137 : f32 to vector<1x1xf32>
    %234 = arith.mulf %233, %222 : vector<1x1xf32>
    %235 = arith.addf %234, %223 : vector<1x1xf32>
    %236 = arith.mulf %224, %222 : vector<1x1xf32>
    %237 = arith.subf %235, %236 : vector<1x1xf32>
    %238 = arith.mulf %228, %226 : vector<1x128xf32>
    %cst_138 = arith.constant dense<0.000000e+00> : vector<1xf32>
    %239 = vector.multi_reduction <add>, %238, %cst_138 [1] : vector<1x128xf32> to vector<1xf32>
    %240 = vector.shape_cast %239 : vector<1xf32> to vector<1x1xf32>
    %cst_139 = arith.constant dense<0.000000e+00> : vector<1xf32>
    %241 = vector.multi_reduction <add>, %240, %cst_139 [0] : vector<1x1xf32> to vector<1xf32>
    %242 = vector.shape_cast %241 : vector<1xf32> to vector<1x1xf32>
    %cst_140 = arith.constant 8.500000e-01 : f32
    %243 = vector.broadcast %cst_140 : f32 to vector<1x1xf32>
    %244 = arith.mulf %243, %223 : vector<1x1xf32>
    %245 = arith.addf %244, %242 : vector<1x1xf32>
    %246 = arith.addf %245, %3 : vector<1x1xf32>
    %cst_141 = arith.constant 1.000000e+00 : f32
    %247 = vector.broadcast %cst_141 : f32 to vector<1x1xf32>
    %248 = arith.cmpf ogt, %237, %247 : vector<1x1xf32>
    %249 = arith.extui %248 : vector<1x1xi1> to vector<1x1xi32>
    %250 = arith.sitofp %249 : vector<1x1xi32> to vector<1x1xf32>
    %cst_142 = arith.constant 0.000000e+00 : f32
    %251 = vector.broadcast %cst_142 : f32 to vector<1x1xf32>
    %252 = arith.cmpf one, %250, %251 : vector<1x1xf32>
    %cst_143 = arith.constant 0.000000e+00 : f32
    %253 = vector.broadcast %cst_143 : f32 to vector<1x128xf32>
    %254 = arith.cmpf one, %230, %253 : vector<1x128xf32>
    %255 = vector.broadcast %252 : vector<1x1xi1> to vector<1x128xi1>
    %256 = arith.andi %254, %255 : vector<1x128xi1>
    %cst_144 = arith.constant 0.000000e+00 : f32
    %257 = vector.broadcast %cst_144 : f32 to vector<1x128xf32>
    %258 = arith.subf %257, %230 : vector<1x128xf32>
    %cst_145 = arith.constant 1.680000e+01 : f32
    %259 = vector.broadcast %cst_145 : f32 to vector<1x128xf32>
    %260 = arith.divf %258, %259 : vector<1x128xf32>
    %261 = math.exp %260 : vector<1x128xf32>
    %cst_146 = arith.constant 3.125000e-02 : f32
    %262 = vector.broadcast %cst_146 : f32 to vector<1x128xf32>
    %263 = arith.mulf %262, %261 : vector<1x128xf32>
    %cst_147 = arith.constant 0.000000e+00 : f32
    %264 = vector.broadcast %cst_147 : f32 to vector<1x128xf32>
    %265 = arith.select %256, %263, %264 : vector<1x128xi1>, vector<1x128xf32>
    %cst_148 = arith.constant 0.000000e+00 : f32
    %266 = vector.broadcast %cst_148 : f32 to vector<1x128xf32>
    %267 = arith.cmpf one, %232, %266 : vector<1x128xf32>
    %cst_149 = arith.constant 0.000000e+00 : f32
    %268 = vector.broadcast %cst_149 : f32 to vector<1x128xf32>
    %269 = arith.cmpf oeq, %230, %268 : vector<1x128xf32>
    %270 = arith.andi %267, %269 : vector<1x128xi1>
    %271 = vector.broadcast %252 : vector<1x1xi1> to vector<1x128xi1>
    %272 = arith.andi %271, %270 : vector<1x128xi1>
    %cst_150 = arith.constant 0.000000e+00 : f32
    %273 = vector.broadcast %cst_150 : f32 to vector<1x128xf32>
    %274 = arith.subf %273, %232 : vector<1x128xf32>
    %cst_151 = arith.constant 3.370000e+01 : f32
    %275 = vector.broadcast %cst_151 : f32 to vector<1x128xf32>
    %276 = arith.divf %274, %275 : vector<1x128xf32>
    %277 = math.exp %276 : vector<1x128xf32>
    %cst_152 = arith.constant 2.656250e-02 : f32
    %278 = vector.broadcast %cst_152 : f32 to vector<1x128xf32>
    %279 = arith.mulf %278, %277 : vector<1x128xf32>
    %cst_153 = arith.constant 0.000000e+00 : f32
    %280 = vector.broadcast %cst_153 : f32 to vector<1x128xf32>
    %281 = arith.select %272, %279, %280 : vector<1x128xi1>, vector<1x128xf32>
    %282 = arith.addf %226, %265 : vector<1x128xf32>
    %283 = arith.subf %282, %281 : vector<1x128xf32>
    %cst_154 = arith.constant 0.000000e+00 : f32
    %cst_155 = arith.constant 1.000000e+00 : f32
    %284 = vector.broadcast %cst_154 : f32 to vector<1x128xf32>
    %285 = arith.maximumf %284, %283 : vector<1x128xf32>
    %286 = vector.broadcast %cst_155 : f32 to vector<1x128xf32>
    %287 = arith.minimumf %286, %285 : vector<1x128xf32>
    %288 = arith.select %221, %237, %222 : vector<1x1xf32>
    %c0_156 = arith.constant 0 : index
    %c0_157 = arith.constant 0 : index
    %289 = vector.load %arg9[%c0_156, %c0_157] : memref<1x1xf32, #tpu.memory_space<vmem>>, vector<1x1xf32>
    tpu.vector_store %arg9[%c0_156, %c0_157], %288 {strides = array<i32>} : memref<1x1xf32, #tpu.memory_space<vmem>>, vector<1x1xf32>,
    %290 = arith.select %221, %246, %223 : vector<1x1xf32>
    %c0_158 = arith.constant 0 : index
    %c0_159 = arith.constant 0 : index
    %291 = vector.load %arg10[%c0_158, %c0_159] : memref<1x1xf32, #tpu.memory_space<vmem>>, vector<1x1xf32>
    tpu.vector_store %arg10[%c0_158, %c0_159], %290 {strides = array<i32>} : memref<1x1xf32, #tpu.memory_space<vmem>>, vector<1x1xf32>,
    %292 = arith.select %221, %250, %224 : vector<1x1xf32>
    %c0_160 = arith.constant 0 : index
    %c0_161 = arith.constant 0 : index
    %293 = vector.load %arg11[%c0_160, %c0_161] : memref<1x1xf32, #tpu.memory_space<vmem>>, vector<1x1xf32>
    tpu.vector_store %arg11[%c0_160, %c0_161], %292 {strides = array<i32>} : memref<1x1xf32, #tpu.memory_space<vmem>>, vector<1x1xf32>,
    %294 = arith.select %221, %225, %225 : vector<1x1xf32>
    %c0_162 = arith.constant 0 : index
    %c0_163 = arith.constant 0 : index
    %295 = vector.load %arg12[%c0_162, %c0_163] : memref<1x1xf32, #tpu.memory_space<vmem>>, vector<1x1xf32>
    tpu.vector_store %arg12[%c0_162, %c0_163], %294 {strides = array<i32>} : memref<1x1xf32, #tpu.memory_space<vmem>>, vector<1x1xf32>,
    %296 = arith.select %221, %287, %226 : vector<1x128xf32>
    %c0_164 = arith.constant 0 : index
    %c0_165 = arith.constant 0 : index
    %297 = vector.load %arg8[%c0_164, %c0_165] : memref<1x128xf32, #tpu.memory_space<vmem>>, vector<1x128xf32>
    tpu.vector_store %arg8[%c0_164, %c0_165], %296 {strides = array<i32>} : memref<1x128xf32, #tpu.memory_space<vmem>>, vector<1x128xf32>,
    %c0_i32_166 = arith.constant 0 : i32
    %298 = vector.broadcast %c0_i32_166 : i32 to vector<1x128xi32>
    %299 = arith.cmpi eq, %4, %298 : vector<1x128xi32>
    %cst_167 = arith.constant 0.000000e+00 : f32
    %300 = vector.shape_cast %237 : vector<1x1xf32> to vector<1x1xf32>
    %301 = vector.broadcast %300 : vector<1x1xf32> to vector<1x128xf32>
    %302 = vector.broadcast %cst_167 : f32 to vector<1x128xf32>
    %303 = arith.select %299, %301, %302 : vector<1x128xi1>, vector<1x128xf32>
    %c1_i32_168 = arith.constant 1 : i32
    %304 = vector.broadcast %c1_i32_168 : i32 to vector<1x128xi32>
    %305 = arith.cmpi eq, %4, %304 : vector<1x128xi32>
    %cst_169 = arith.constant 0.000000e+00 : f32
    %306 = vector.shape_cast %246 : vector<1x1xf32> to vector<1x1xf32>
    %307 = vector.broadcast %306 : vector<1x1xf32> to vector<1x128xf32>
    %308 = vector.broadcast %cst_169 : f32 to vector<1x128xf32>
    %309 = arith.select %305, %307, %308 : vector<1x128xi1>, vector<1x128xf32>
    %310 = arith.addf %303, %309 : vector<1x128xf32>
    %c2_i32_170 = arith.constant 2 : i32
    %311 = vector.broadcast %c2_i32_170 : i32 to vector<1x128xi32>
    %312 = arith.cmpi eq, %4, %311 : vector<1x128xi32>
    %cst_171 = arith.constant 0.000000e+00 : f32
    %313 = vector.shape_cast %250 : vector<1x1xf32> to vector<1x1xf32>
    %314 = vector.broadcast %313 : vector<1x1xf32> to vector<1x128xf32>
    %315 = vector.broadcast %cst_171 : f32 to vector<1x128xf32>
    %316 = arith.select %312, %314, %315 : vector<1x128xi1>, vector<1x128xf32>
    %317 = arith.addf %310, %316 : vector<1x128xf32>
    %c3_i32_172 = arith.constant 3 : i32
    %318 = vector.broadcast %c3_i32_172 : i32 to vector<1x128xi32>
    %319 = arith.cmpi eq, %4, %318 : vector<1x128xi32>
    %cst_173 = arith.constant 0.000000e+00 : f32
    %320 = vector.shape_cast %225 : vector<1x1xf32> to vector<1x1xf32>
    %321 = vector.broadcast %320 : vector<1x1xf32> to vector<1x128xf32>
    %322 = vector.broadcast %cst_173 : f32 to vector<1x128xf32>
    %323 = arith.select %319, %321, %322 : vector<1x128xi1>, vector<1x128xf32>
    %324 = arith.addf %317, %323 : vector<1x128xf32>
    %c2_174 = arith.constant 2 : index
    %c0_175 = arith.constant 0 : index
    %325 = vector.load %arg6[%c2_174, %c0_175] : memref<8x128xf32, #tpu.memory_space<vmem>>, vector<1x128xf32>
    tpu.vector_store %arg6[%c2_174, %c0_175], %324 {strides = array<i32>} : memref<8x128xf32, #tpu.memory_space<vmem>>, vector<1x128xf32>,
    %c8_i32_176 = arith.constant 8 : i32
    %326 = arith.muli %arg0, %c8_i32_176 : i32
    %c3_i32_177 = arith.constant 3 : i32
    %327 = arith.addi %326, %c3_i32_177 : i32
    %c13_i32_178 = arith.constant 13 : i32
    %328 = arith.cmpi slt, %327, %c13_i32_178 : i32
    %c0_179 = arith.constant 0 : index
    %c0_180 = arith.constant 0 : index
    %329 = vector.load %arg9[%c0_179, %c0_180] : memref<1x1xf32, #tpu.memory_space<vmem>>, vector<1x1xf32>
    %c0_181 = arith.constant 0 : index
    %c0_182 = arith.constant 0 : index
    %330 = vector.load %arg10[%c0_181, %c0_182] : memref<1x1xf32, #tpu.memory_space<vmem>>, vector<1x1xf32>
    %c0_183 = arith.constant 0 : index
    %c0_184 = arith.constant 0 : index
    %331 = vector.load %arg11[%c0_183, %c0_184] : memref<1x1xf32, #tpu.memory_space<vmem>>, vector<1x1xf32>
    %c0_185 = arith.constant 0 : index
    %c0_186 = arith.constant 0 : index
    %332 = vector.load %arg12[%c0_185, %c0_186] : memref<1x1xf32, #tpu.memory_space<vmem>>, vector<1x1xf32>
    %c0_187 = arith.constant 0 : index
    %c0_188 = arith.constant 0 : index
    %333 = vector.load %arg8[%c0_187, %c0_188] : memref<1x128xf32, #tpu.memory_space<vmem>>, vector<1x128xf32>
    %c3 = arith.constant 3 : index
    %c0_189 = arith.constant 0 : index
    %c0_190 = arith.constant 0 : index
    %334 = vector.load %arg1[%c3, %c0_189, %c0_190] : memref<8x1x128xf32, #tpu.memory_space<vmem>>, vector<1x1x128xf32>
    %335 = vector.shape_cast %334 : vector<1x1x128xf32> to vector<1x128xf32>
    %c3_191 = arith.constant 3 : index
    %c0_192 = arith.constant 0 : index
    %c0_193 = arith.constant 0 : index
    %336 = vector.load %arg2[%c3_191, %c0_192, %c0_193] : memref<8x1x128xf32, #tpu.memory_space<vmem>>, vector<1x1x128xf32>
    %337 = vector.shape_cast %336 : vector<1x1x128xf32> to vector<1x128xf32>
    %c3_194 = arith.constant 3 : index
    %c0_195 = arith.constant 0 : index
    %c0_196 = arith.constant 0 : index
    %338 = vector.load %arg3[%c3_194, %c0_195, %c0_196] : memref<8x1x128xf32, #tpu.memory_space<vmem>>, vector<1x1x128xf32>
    %339 = vector.shape_cast %338 : vector<1x1x128xf32> to vector<1x128xf32>
    %cst_197 = arith.constant 0.899999976 : f32
    %340 = vector.broadcast %cst_197 : f32 to vector<1x1xf32>
    %341 = arith.mulf %340, %329 : vector<1x1xf32>
    %342 = arith.addf %341, %330 : vector<1x1xf32>
    %343 = arith.mulf %331, %329 : vector<1x1xf32>
    %344 = arith.subf %342, %343 : vector<1x1xf32>
    %345 = arith.mulf %335, %333 : vector<1x128xf32>
    %cst_198 = arith.constant dense<0.000000e+00> : vector<1xf32>
    %346 = vector.multi_reduction <add>, %345, %cst_198 [1] : vector<1x128xf32> to vector<1xf32>
    %347 = vector.shape_cast %346 : vector<1xf32> to vector<1x1xf32>
    %cst_199 = arith.constant dense<0.000000e+00> : vector<1xf32>
    %348 = vector.multi_reduction <add>, %347, %cst_199 [0] : vector<1x1xf32> to vector<1xf32>
    %349 = vector.shape_cast %348 : vector<1xf32> to vector<1x1xf32>
    %cst_200 = arith.constant 8.500000e-01 : f32
    %350 = vector.broadcast %cst_200 : f32 to vector<1x1xf32>
    %351 = arith.mulf %350, %330 : vector<1x1xf32>
    %352 = arith.addf %351, %349 : vector<1x1xf32>
    %353 = arith.addf %352, %3 : vector<1x1xf32>
    %cst_201 = arith.constant 1.000000e+00 : f32
    %354 = vector.broadcast %cst_201 : f32 to vector<1x1xf32>
    %355 = arith.cmpf ogt, %344, %354 : vector<1x1xf32>
    %356 = arith.extui %355 : vector<1x1xi1> to vector<1x1xi32>
    %357 = arith.sitofp %356 : vector<1x1xi32> to vector<1x1xf32>
    %cst_202 = arith.constant 0.000000e+00 : f32
    %358 = vector.broadcast %cst_202 : f32 to vector<1x1xf32>
    %359 = arith.cmpf one, %357, %358 : vector<1x1xf32>
    %cst_203 = arith.constant 0.000000e+00 : f32
    %360 = vector.broadcast %cst_203 : f32 to vector<1x128xf32>
    %361 = arith.cmpf one, %337, %360 : vector<1x128xf32>
    %362 = vector.broadcast %359 : vector<1x1xi1> to vector<1x128xi1>
    %363 = arith.andi %361, %362 : vector<1x128xi1>
    %cst_204 = arith.constant 0.000000e+00 : f32
    %364 = vector.broadcast %cst_204 : f32 to vector<1x128xf32>
    %365 = arith.subf %364, %337 : vector<1x128xf32>
    %cst_205 = arith.constant 1.680000e+01 : f32
    %366 = vector.broadcast %cst_205 : f32 to vector<1x128xf32>
    %367 = arith.divf %365, %366 : vector<1x128xf32>
    %368 = math.exp %367 : vector<1x128xf32>
    %cst_206 = arith.constant 3.125000e-02 : f32
    %369 = vector.broadcast %cst_206 : f32 to vector<1x128xf32>
    %370 = arith.mulf %369, %368 : vector<1x128xf32>
    %cst_207 = arith.constant 0.000000e+00 : f32
    %371 = vector.broadcast %cst_207 : f32 to vector<1x128xf32>
    %372 = arith.select %363, %370, %371 : vector<1x128xi1>, vector<1x128xf32>
    %cst_208 = arith.constant 0.000000e+00 : f32
    %373 = vector.broadcast %cst_208 : f32 to vector<1x128xf32>
    %374 = arith.cmpf one, %339, %373 : vector<1x128xf32>
    %cst_209 = arith.constant 0.000000e+00 : f32
    %375 = vector.broadcast %cst_209 : f32 to vector<1x128xf32>
    %376 = arith.cmpf oeq, %337, %375 : vector<1x128xf32>
    %377 = arith.andi %374, %376 : vector<1x128xi1>
    %378 = vector.broadcast %359 : vector<1x1xi1> to vector<1x128xi1>
    %379 = arith.andi %378, %377 : vector<1x128xi1>
    %cst_210 = arith.constant 0.000000e+00 : f32
    %380 = vector.broadcast %cst_210 : f32 to vector<1x128xf32>
    %381 = arith.subf %380, %339 : vector<1x128xf32>
    %cst_211 = arith.constant 3.370000e+01 : f32
    %382 = vector.broadcast %cst_211 : f32 to vector<1x128xf32>
    %383 = arith.divf %381, %382 : vector<1x128xf32>
    %384 = math.exp %383 : vector<1x128xf32>
    %cst_212 = arith.constant 2.656250e-02 : f32
    %385 = vector.broadcast %cst_212 : f32 to vector<1x128xf32>
    %386 = arith.mulf %385, %384 : vector<1x128xf32>
    %cst_213 = arith.constant 0.000000e+00 : f32
    %387 = vector.broadcast %cst_213 : f32 to vector<1x128xf32>
    %388 = arith.select %379, %386, %387 : vector<1x128xi1>, vector<1x128xf32>
    %389 = arith.addf %333, %372 : vector<1x128xf32>
    %390 = arith.subf %389, %388 : vector<1x128xf32>
    %cst_214 = arith.constant 0.000000e+00 : f32
    %cst_215 = arith.constant 1.000000e+00 : f32
    %391 = vector.broadcast %cst_214 : f32 to vector<1x128xf32>
    %392 = arith.maximumf %391, %390 : vector<1x128xf32>
    %393 = vector.broadcast %cst_215 : f32 to vector<1x128xf32>
    %394 = arith.minimumf %393, %392 : vector<1x128xf32>
    %395 = arith.select %328, %344, %329 : vector<1x1xf32>
    %c0_216 = arith.constant 0 : index
    %c0_217 = arith.constant 0 : index
    %396 = vector.load %arg9[%c0_216, %c0_217] : memref<1x1xf32, #tpu.memory_space<vmem>>, vector<1x1xf32>
    tpu.vector_store %arg9[%c0_216, %c0_217], %395 {strides = array<i32>} : memref<1x1xf32, #tpu.memory_space<vmem>>, vector<1x1xf32>,
    %397 = arith.select %328, %353, %330 : vector<1x1xf32>
    %c0_218 = arith.constant 0 : index
    %c0_219 = arith.constant 0 : index
    %398 = vector.load %arg10[%c0_218, %c0_219] : memref<1x1xf32, #tpu.memory_space<vmem>>, vector<1x1xf32>
    tpu.vector_store %arg10[%c0_218, %c0_219], %397 {strides = array<i32>} : memref<1x1xf32, #tpu.memory_space<vmem>>, vector<1x1xf32>,
    %399 = arith.select %328, %357, %331 : vector<1x1xf32>
    %c0_220 = arith.constant 0 : index
    %c0_221 = arith.constant 0 : index
    %400 = vector.load %arg11[%c0_220, %c0_221] : memref<1x1xf32, #tpu.memory_space<vmem>>, vector<1x1xf32>
    tpu.vector_store %arg11[%c0_220, %c0_221], %399 {strides = array<i32>} : memref<1x1xf32, #tpu.memory_space<vmem>>, vector<1x1xf32>,
    %401 = arith.select %328, %332, %332 : vector<1x1xf32>
    %c0_222 = arith.constant 0 : index
    %c0_223 = arith.constant 0 : index
    %402 = vector.load %arg12[%c0_222, %c0_223] : memref<1x1xf32, #tpu.memory_space<vmem>>, vector<1x1xf32>
    tpu.vector_store %arg12[%c0_222, %c0_223], %401 {strides = array<i32>} : memref<1x1xf32, #tpu.memory_space<vmem>>, vector<1x1xf32>,
    %403 = arith.select %328, %394, %333 : vector<1x128xf32>
    %c0_224 = arith.constant 0 : index
    %c0_225 = arith.constant 0 : index
    %404 = vector.load %arg8[%c0_224, %c0_225] : memref<1x128xf32, #tpu.memory_space<vmem>>, vector<1x128xf32>
    tpu.vector_store %arg8[%c0_224, %c0_225], %403 {strides = array<i32>} : memref<1x128xf32, #tpu.memory_space<vmem>>, vector<1x128xf32>,
    %c0_i32_226 = arith.constant 0 : i32
    %405 = vector.broadcast %c0_i32_226 : i32 to vector<1x128xi32>
    %406 = arith.cmpi eq, %4, %405 : vector<1x128xi32>
    %cst_227 = arith.constant 0.000000e+00 : f32
    %407 = vector.shape_cast %344 : vector<1x1xf32> to vector<1x1xf32>
    %408 = vector.broadcast %407 : vector<1x1xf32> to vector<1x128xf32>
    %409 = vector.broadcast %cst_227 : f32 to vector<1x128xf32>
    %410 = arith.select %406, %408, %409 : vector<1x128xi1>, vector<1x128xf32>
    %c1_i32_228 = arith.constant 1 : i32
    %411 = vector.broadcast %c1_i32_228 : i32 to vector<1x128xi32>
    %412 = arith.cmpi eq, %4, %411 : vector<1x128xi32>
    %cst_229 = arith.constant 0.000000e+00 : f32
    %413 = vector.shape_cast %353 : vector<1x1xf32> to vector<1x1xf32>
    %414 = vector.broadcast %413 : vector<1x1xf32> to vector<1x128xf32>
    %415 = vector.broadcast %cst_229 : f32 to vector<1x128xf32>
    %416 = arith.select %412, %414, %415 : vector<1x128xi1>, vector<1x128xf32>
    %417 = arith.addf %410, %416 : vector<1x128xf32>
    %c2_i32_230 = arith.constant 2 : i32
    %418 = vector.broadcast %c2_i32_230 : i32 to vector<1x128xi32>
    %419 = arith.cmpi eq, %4, %418 : vector<1x128xi32>
    %cst_231 = arith.constant 0.000000e+00 : f32
    %420 = vector.shape_cast %357 : vector<1x1xf32> to vector<1x1xf32>
    %421 = vector.broadcast %420 : vector<1x1xf32> to vector<1x128xf32>
    %422 = vector.broadcast %cst_231 : f32 to vector<1x128xf32>
    %423 = arith.select %419, %421, %422 : vector<1x128xi1>, vector<1x128xf32>
    %424 = arith.addf %417, %423 : vector<1x128xf32>
    %c3_i32_232 = arith.constant 3 : i32
    %425 = vector.broadcast %c3_i32_232 : i32 to vector<1x128xi32>
    %426 = arith.cmpi eq, %4, %425 : vector<1x128xi32>
    %cst_233 = arith.constant 0.000000e+00 : f32
    %427 = vector.shape_cast %332 : vector<1x1xf32> to vector<1x1xf32>
    %428 = vector.broadcast %427 : vector<1x1xf32> to vector<1x128xf32>
    %429 = vector.broadcast %cst_233 : f32 to vector<1x128xf32>
    %430 = arith.select %426, %428, %429 : vector<1x128xi1>, vector<1x128xf32>
    %431 = arith.addf %424, %430 : vector<1x128xf32>
    %c3_234 = arith.constant 3 : index
    %c0_235 = arith.constant 0 : index
    %432 = vector.load %arg6[%c3_234, %c0_235] : memref<8x128xf32, #tpu.memory_space<vmem>>, vector<1x128xf32>
    tpu.vector_store %arg6[%c3_234, %c0_235], %431 {strides = array<i32>} : memref<8x128xf32, #tpu.memory_space<vmem>>, vector<1x128xf32>,
    %c8_i32_236 = arith.constant 8 : i32
    %433 = arith.muli %arg0, %c8_i32_236 : i32
    %c4_i32 = arith.constant 4 : i32
    %434 = arith.addi %433, %c4_i32 : i32
    %c13_i32_237 = arith.constant 13 : i32
    %435 = arith.cmpi slt, %434, %c13_i32_237 : i32
    %c0_238 = arith.constant 0 : index
    %c0_239 = arith.constant 0 : index
    %436 = vector.load %arg9[%c0_238, %c0_239] : memref<1x1xf32, #tpu.memory_space<vmem>>, vector<1x1xf32>
    %c0_240 = arith.constant 0 : index
    %c0_241 = arith.constant 0 : index
    %437 = vector.load %arg10[%c0_240, %c0_241] : memref<1x1xf32, #tpu.memory_space<vmem>>, vector<1x1xf32>
    %c0_242 = arith.constant 0 : index
    %c0_243 = arith.constant 0 : index
    %438 = vector.load %arg11[%c0_242, %c0_243] : memref<1x1xf32, #tpu.memory_space<vmem>>, vector<1x1xf32>
    %c0_244 = arith.constant 0 : index
    %c0_245 = arith.constant 0 : index
    %439 = vector.load %arg12[%c0_244, %c0_245] : memref<1x1xf32, #tpu.memory_space<vmem>>, vector<1x1xf32>
    %c0_246 = arith.constant 0 : index
    %c0_247 = arith.constant 0 : index
    %440 = vector.load %arg8[%c0_246, %c0_247] : memref<1x128xf32, #tpu.memory_space<vmem>>, vector<1x128xf32>
    %c4_248 = arith.constant 4 : index
    %c0_249 = arith.constant 0 : index
    %c0_250 = arith.constant 0 : index
    %441 = vector.load %arg1[%c4_248, %c0_249, %c0_250] : memref<8x1x128xf32, #tpu.memory_space<vmem>>, vector<1x1x128xf32>
    %442 = vector.shape_cast %441 : vector<1x1x128xf32> to vector<1x128xf32>
    %c4_251 = arith.constant 4 : index
    %c0_252 = arith.constant 0 : index
    %c0_253 = arith.constant 0 : index
    %443 = vector.load %arg2[%c4_251, %c0_252, %c0_253] : memref<8x1x128xf32, #tpu.memory_space<vmem>>, vector<1x1x128xf32>
    %444 = vector.shape_cast %443 : vector<1x1x128xf32> to vector<1x128xf32>
    %c4_254 = arith.constant 4 : index
    %c0_255 = arith.constant 0 : index
    %c0_256 = arith.constant 0 : index
    %445 = vector.load %arg3[%c4_254, %c0_255, %c0_256] : memref<8x1x128xf32, #tpu.memory_space<vmem>>, vector<1x1x128xf32>
    %446 = vector.shape_cast %445 : vector<1x1x128xf32> to vector<1x128xf32>
    %cst_257 = arith.constant 0.899999976 : f32
    %447 = vector.broadcast %cst_257 : f32 to vector<1x1xf32>
    %448 = arith.mulf %447, %436 : vector<1x1xf32>
    %449 = arith.addf %448, %437 : vector<1x1xf32>
    %450 = arith.mulf %438, %436 : vector<1x1xf32>
    %451 = arith.subf %449, %450 : vector<1x1xf32>
    %452 = arith.mulf %442, %440 : vector<1x128xf32>
    %cst_258 = arith.constant dense<0.000000e+00> : vector<1xf32>
    %453 = vector.multi_reduction <add>, %452, %cst_258 [1] : vector<1x128xf32> to vector<1xf32>
    %454 = vector.shape_cast %453 : vector<1xf32> to vector<1x1xf32>
    %cst_259 = arith.constant dense<0.000000e+00> : vector<1xf32>
    %455 = vector.multi_reduction <add>, %454, %cst_259 [0] : vector<1x1xf32> to vector<1xf32>
    %456 = vector.shape_cast %455 : vector<1xf32> to vector<1x1xf32>
    %cst_260 = arith.constant 8.500000e-01 : f32
    %457 = vector.broadcast %cst_260 : f32 to vector<1x1xf32>
    %458 = arith.mulf %457, %437 : vector<1x1xf32>
    %459 = arith.addf %458, %456 : vector<1x1xf32>
    %460 = arith.addf %459, %3 : vector<1x1xf32>
    %cst_261 = arith.constant 1.000000e+00 : f32
    %461 = vector.broadcast %cst_261 : f32 to vector<1x1xf32>
    %462 = arith.cmpf ogt, %451, %461 : vector<1x1xf32>
    %463 = arith.extui %462 : vector<1x1xi1> to vector<1x1xi32>
    %464 = arith.sitofp %463 : vector<1x1xi32> to vector<1x1xf32>
    %cst_262 = arith.constant 0.000000e+00 : f32
    %465 = vector.broadcast %cst_262 : f32 to vector<1x1xf32>
    %466 = arith.cmpf one, %464, %465 : vector<1x1xf32>
    %cst_263 = arith.constant 0.000000e+00 : f32
    %467 = vector.broadcast %cst_263 : f32 to vector<1x128xf32>
    %468 = arith.cmpf one, %444, %467 : vector<1x128xf32>
    %469 = vector.broadcast %466 : vector<1x1xi1> to vector<1x128xi1>
    %470 = arith.andi %468, %469 : vector<1x128xi1>
    %cst_264 = arith.constant 0.000000e+00 : f32
    %471 = vector.broadcast %cst_264 : f32 to vector<1x128xf32>
    %472 = arith.subf %471, %444 : vector<1x128xf32>
    %cst_265 = arith.constant 1.680000e+01 : f32
    %473 = vector.broadcast %cst_265 : f32 to vector<1x128xf32>
    %474 = arith.divf %472, %473 : vector<1x128xf32>
    %475 = math.exp %474 : vector<1x128xf32>
    %cst_266 = arith.constant 3.125000e-02 : f32
    %476 = vector.broadcast %cst_266 : f32 to vector<1x128xf32>
    %477 = arith.mulf %476, %475 : vector<1x128xf32>
    %cst_267 = arith.constant 0.000000e+00 : f32
    %478 = vector.broadcast %cst_267 : f32 to vector<1x128xf32>
    %479 = arith.select %470, %477, %478 : vector<1x128xi1>, vector<1x128xf32>
    %cst_268 = arith.constant 0.000000e+00 : f32
    %480 = vector.broadcast %cst_268 : f32 to vector<1x128xf32>
    %481 = arith.cmpf one, %446, %480 : vector<1x128xf32>
    %cst_269 = arith.constant 0.000000e+00 : f32
    %482 = vector.broadcast %cst_269 : f32 to vector<1x128xf32>
    %483 = arith.cmpf oeq, %444, %482 : vector<1x128xf32>
    %484 = arith.andi %481, %483 : vector<1x128xi1>
    %485 = vector.broadcast %466 : vector<1x1xi1> to vector<1x128xi1>
    %486 = arith.andi %485, %484 : vector<1x128xi1>
    %cst_270 = arith.constant 0.000000e+00 : f32
    %487 = vector.broadcast %cst_270 : f32 to vector<1x128xf32>
    %488 = arith.subf %487, %446 : vector<1x128xf32>
    %cst_271 = arith.constant 3.370000e+01 : f32
    %489 = vector.broadcast %cst_271 : f32 to vector<1x128xf32>
    %490 = arith.divf %488, %489 : vector<1x128xf32>
    %491 = math.exp %490 : vector<1x128xf32>
    %cst_272 = arith.constant 2.656250e-02 : f32
    %492 = vector.broadcast %cst_272 : f32 to vector<1x128xf32>
    %493 = arith.mulf %492, %491 : vector<1x128xf32>
    %cst_273 = arith.constant 0.000000e+00 : f32
    %494 = vector.broadcast %cst_273 : f32 to vector<1x128xf32>
    %495 = arith.select %486, %493, %494 : vector<1x128xi1>, vector<1x128xf32>
    %496 = arith.addf %440, %479 : vector<1x128xf32>
    %497 = arith.subf %496, %495 : vector<1x128xf32>
    %cst_274 = arith.constant 0.000000e+00 : f32
    %cst_275 = arith.constant 1.000000e+00 : f32
    %498 = vector.broadcast %cst_274 : f32 to vector<1x128xf32>
    %499 = arith.maximumf %498, %497 : vector<1x128xf32>
    %500 = vector.broadcast %cst_275 : f32 to vector<1x128xf32>
    %501 = arith.minimumf %500, %499 : vector<1x128xf32>
    %502 = arith.select %435, %451, %436 : vector<1x1xf32>
    %c0_276 = arith.constant 0 : index
    %c0_277 = arith.constant 0 : index
    %503 = vector.load %arg9[%c0_276, %c0_277] : memref<1x1xf32, #tpu.memory_space<vmem>>, vector<1x1xf32>
    tpu.vector_store %arg9[%c0_276, %c0_277], %502 {strides = array<i32>} : memref<1x1xf32, #tpu.memory_space<vmem>>, vector<1x1xf32>,
    %504 = arith.select %435, %460, %437 : vector<1x1xf32>
    %c0_278 = arith.constant 0 : index
    %c0_279 = arith.constant 0 : index
    %505 = vector.load %arg10[%c0_278, %c0_279] : memref<1x1xf32, #tpu.memory_space<vmem>>, vector<1x1xf32>
    tpu.vector_store %arg10[%c0_278, %c0_279], %504 {strides = array<i32>} : memref<1x1xf32, #tpu.memory_space<vmem>>, vector<1x1xf32>,
    %506 = arith.select %435, %464, %438 : vector<1x1xf32>
    %c0_280 = arith.constant 0 : index
    %c0_281 = arith.constant 0 : index
    %507 = vector.load %arg11[%c0_280, %c0_281] : memref<1x1xf32, #tpu.memory_space<vmem>>, vector<1x1xf32>
    tpu.vector_store %arg11[%c0_280, %c0_281], %506 {strides = array<i32>} : memref<1x1xf32, #tpu.memory_space<vmem>>, vector<1x1xf32>,
    %508 = arith.select %435, %439, %439 : vector<1x1xf32>
    %c0_282 = arith.constant 0 : index
    %c0_283 = arith.constant 0 : index
    %509 = vector.load %arg12[%c0_282, %c0_283] : memref<1x1xf32, #tpu.memory_space<vmem>>, vector<1x1xf32>
    tpu.vector_store %arg12[%c0_282, %c0_283], %508 {strides = array<i32>} : memref<1x1xf32, #tpu.memory_space<vmem>>, vector<1x1xf32>,
    %510 = arith.select %435, %501, %440 : vector<1x128xf32>
    %c0_284 = arith.constant 0 : index
    %c0_285 = arith.constant 0 : index
    %511 = vector.load %arg8[%c0_284, %c0_285] : memref<1x128xf32, #tpu.memory_space<vmem>>, vector<1x128xf32>
    tpu.vector_store %arg8[%c0_284, %c0_285], %510 {strides = array<i32>} : memref<1x128xf32, #tpu.memory_space<vmem>>, vector<1x128xf32>,
    %c0_i32_286 = arith.constant 0 : i32
    %512 = vector.broadcast %c0_i32_286 : i32 to vector<1x128xi32>
    %513 = arith.cmpi eq, %4, %512 : vector<1x128xi32>
    %cst_287 = arith.constant 0.000000e+00 : f32
    %514 = vector.shape_cast %451 : vector<1x1xf32> to vector<1x1xf32>
    %515 = vector.broadcast %514 : vector<1x1xf32> to vector<1x128xf32>
    %516 = vector.broadcast %cst_287 : f32 to vector<1x128xf32>
    %517 = arith.select %513, %515, %516 : vector<1x128xi1>, vector<1x128xf32>
    %c1_i32_288 = arith.constant 1 : i32
    %518 = vector.broadcast %c1_i32_288 : i32 to vector<1x128xi32>
    %519 = arith.cmpi eq, %4, %518 : vector<1x128xi32>
    %cst_289 = arith.constant 0.000000e+00 : f32
    %520 = vector.shape_cast %460 : vector<1x1xf32> to vector<1x1xf32>
    %521 = vector.broadcast %520 : vector<1x1xf32> to vector<1x128xf32>
    %522 = vector.broadcast %cst_289 : f32 to vector<1x128xf32>
    %523 = arith.select %519, %521, %522 : vector<1x128xi1>, vector<1x128xf32>
    %524 = arith.addf %517, %523 : vector<1x128xf32>
    %c2_i32_290 = arith.constant 2 : i32
    %525 = vector.broadcast %c2_i32_290 : i32 to vector<1x128xi32>
    %526 = arith.cmpi eq, %4, %525 : vector<1x128xi32>
    %cst_291 = arith.constant 0.000000e+00 : f32
    %527 = vector.shape_cast %464 : vector<1x1xf32> to vector<1x1xf32>
    %528 = vector.broadcast %527 : vector<1x1xf32> to vector<1x128xf32>
    %529 = vector.broadcast %cst_291 : f32 to vector<1x128xf32>
    %530 = arith.select %526, %528, %529 : vector<1x128xi1>, vector<1x128xf32>
    %531 = arith.addf %524, %530 : vector<1x128xf32>
    %c3_i32_292 = arith.constant 3 : i32
    %532 = vector.broadcast %c3_i32_292 : i32 to vector<1x128xi32>
    %533 = arith.cmpi eq, %4, %532 : vector<1x128xi32>
    %cst_293 = arith.constant 0.000000e+00 : f32
    %534 = vector.shape_cast %439 : vector<1x1xf32> to vector<1x1xf32>
    %535 = vector.broadcast %534 : vector<1x1xf32> to vector<1x128xf32>
    %536 = vector.broadcast %cst_293 : f32 to vector<1x128xf32>
    %537 = arith.select %533, %535, %536 : vector<1x128xi1>, vector<1x128xf32>
    %538 = arith.addf %531, %537 : vector<1x128xf32>
    %c4_294 = arith.constant 4 : index
    %c0_295 = arith.constant 0 : index
    %539 = vector.load %arg6[%c4_294, %c0_295] : memref<8x128xf32, #tpu.memory_space<vmem>>, vector<1x128xf32>
    tpu.vector_store %arg6[%c4_294, %c0_295], %538 {strides = array<i32>} : memref<8x128xf32, #tpu.memory_space<vmem>>, vector<1x128xf32>,
    %c8_i32_296 = arith.constant 8 : i32
    %540 = arith.muli %arg0, %c8_i32_296 : i32
    %c5_i32 = arith.constant 5 : i32
    %541 = arith.addi %540, %c5_i32 : i32
    %c13_i32_297 = arith.constant 13 : i32
    %542 = arith.cmpi slt, %541, %c13_i32_297 : i32
    %c0_298 = arith.constant 0 : index
    %c0_299 = arith.constant 0 : index
    %543 = vector.load %arg9[%c0_298, %c0_299] : memref<1x1xf32, #tpu.memory_space<vmem>>, vector<1x1xf32>
    %c0_300 = arith.constant 0 : index
    %c0_301 = arith.constant 0 : index
    %544 = vector.load %arg10[%c0_300, %c0_301] : memref<1x1xf32, #tpu.memory_space<vmem>>, vector<1x1xf32>
    %c0_302 = arith.constant 0 : index
    %c0_303 = arith.constant 0 : index
    %545 = vector.load %arg11[%c0_302, %c0_303] : memref<1x1xf32, #tpu.memory_space<vmem>>, vector<1x1xf32>
    %c0_304 = arith.constant 0 : index
    %c0_305 = arith.constant 0 : index
    %546 = vector.load %arg12[%c0_304, %c0_305] : memref<1x1xf32, #tpu.memory_space<vmem>>, vector<1x1xf32>
    %c0_306 = arith.constant 0 : index
    %c0_307 = arith.constant 0 : index
    %547 = vector.load %arg8[%c0_306, %c0_307] : memref<1x128xf32, #tpu.memory_space<vmem>>, vector<1x128xf32>
    %c5 = arith.constant 5 : index
    %c0_308 = arith.constant 0 : index
    %c0_309 = arith.constant 0 : index
    %548 = vector.load %arg1[%c5, %c0_308, %c0_309] : memref<8x1x128xf32, #tpu.memory_space<vmem>>, vector<1x1x128xf32>
    %549 = vector.shape_cast %548 : vector<1x1x128xf32> to vector<1x128xf32>
    %c5_310 = arith.constant 5 : index
    %c0_311 = arith.constant 0 : index
    %c0_312 = arith.constant 0 : index
    %550 = vector.load %arg2[%c5_310, %c0_311, %c0_312] : memref<8x1x128xf32, #tpu.memory_space<vmem>>, vector<1x1x128xf32>
    %551 = vector.shape_cast %550 : vector<1x1x128xf32> to vector<1x128xf32>
    %c5_313 = arith.constant 5 : index
    %c0_314 = arith.constant 0 : index
    %c0_315 = arith.constant 0 : index
    %552 = vector.load %arg3[%c5_313, %c0_314, %c0_315] : memref<8x1x128xf32, #tpu.memory_space<vmem>>, vector<1x1x128xf32>
    %553 = vector.shape_cast %552 : vector<1x1x128xf32> to vector<1x128xf32>
    %cst_316 = arith.constant 0.899999976 : f32
    %554 = vector.broadcast %cst_316 : f32 to vector<1x1xf32>
    %555 = arith.mulf %554, %543 : vector<1x1xf32>
    %556 = arith.addf %555, %544 : vector<1x1xf32>
    %557 = arith.mulf %545, %543 : vector<1x1xf32>
    %558 = arith.subf %556, %557 : vector<1x1xf32>
    %559 = arith.mulf %549, %547 : vector<1x128xf32>
    %cst_317 = arith.constant dense<0.000000e+00> : vector<1xf32>
    %560 = vector.multi_reduction <add>, %559, %cst_317 [1] : vector<1x128xf32> to vector<1xf32>
    %561 = vector.shape_cast %560 : vector<1xf32> to vector<1x1xf32>
    %cst_318 = arith.constant dense<0.000000e+00> : vector<1xf32>
    %562 = vector.multi_reduction <add>, %561, %cst_318 [0] : vector<1x1xf32> to vector<1xf32>
    %563 = vector.shape_cast %562 : vector<1xf32> to vector<1x1xf32>
    %cst_319 = arith.constant 8.500000e-01 : f32
    %564 = vector.broadcast %cst_319 : f32 to vector<1x1xf32>
    %565 = arith.mulf %564, %544 : vector<1x1xf32>
    %566 = arith.addf %565, %563 : vector<1x1xf32>
    %567 = arith.addf %566, %3 : vector<1x1xf32>
    %cst_320 = arith.constant 1.000000e+00 : f32
    %568 = vector.broadcast %cst_320 : f32 to vector<1x1xf32>
    %569 = arith.cmpf ogt, %558, %568 : vector<1x1xf32>
    %570 = arith.extui %569 : vector<1x1xi1> to vector<1x1xi32>
    %571 = arith.sitofp %570 : vector<1x1xi32> to vector<1x1xf32>
    %cst_321 = arith.constant 0.000000e+00 : f32
    %572 = vector.broadcast %cst_321 : f32 to vector<1x1xf32>
    %573 = arith.cmpf one, %571, %572 : vector<1x1xf32>
    %cst_322 = arith.constant 0.000000e+00 : f32
    %574 = vector.broadcast %cst_322 : f32 to vector<1x128xf32>
    %575 = arith.cmpf one, %551, %574 : vector<1x128xf32>
    %576 = vector.broadcast %573 : vector<1x1xi1> to vector<1x128xi1>
    %577 = arith.andi %575, %576 : vector<1x128xi1>
    %cst_323 = arith.constant 0.000000e+00 : f32
    %578 = vector.broadcast %cst_323 : f32 to vector<1x128xf32>
    %579 = arith.subf %578, %551 : vector<1x128xf32>
    %cst_324 = arith.constant 1.680000e+01 : f32
    %580 = vector.broadcast %cst_324 : f32 to vector<1x128xf32>
    %581 = arith.divf %579, %580 : vector<1x128xf32>
    %582 = math.exp %581 : vector<1x128xf32>
    %cst_325 = arith.constant 3.125000e-02 : f32
    %583 = vector.broadcast %cst_325 : f32 to vector<1x128xf32>
    %584 = arith.mulf %583, %582 : vector<1x128xf32>
    %cst_326 = arith.constant 0.000000e+00 : f32
    %585 = vector.broadcast %cst_326 : f32 to vector<1x128xf32>
    %586 = arith.select %577, %584, %585 : vector<1x128xi1>, vector<1x128xf32>
    %cst_327 = arith.constant 0.000000e+00 : f32
    %587 = vector.broadcast %cst_327 : f32 to vector<1x128xf32>
    %588 = arith.cmpf one, %553, %587 : vector<1x128xf32>
    %cst_328 = arith.constant 0.000000e+00 : f32
    %589 = vector.broadcast %cst_328 : f32 to vector<1x128xf32>
    %590 = arith.cmpf oeq, %551, %589 : vector<1x128xf32>
    %591 = arith.andi %588, %590 : vector<1x128xi1>
    %592 = vector.broadcast %573 : vector<1x1xi1> to vector<1x128xi1>
    %593 = arith.andi %592, %591 : vector<1x128xi1>
    %cst_329 = arith.constant 0.000000e+00 : f32
    %594 = vector.broadcast %cst_329 : f32 to vector<1x128xf32>
    %595 = arith.subf %594, %553 : vector<1x128xf32>
    %cst_330 = arith.constant 3.370000e+01 : f32
    %596 = vector.broadcast %cst_330 : f32 to vector<1x128xf32>
    %597 = arith.divf %595, %596 : vector<1x128xf32>
    %598 = math.exp %597 : vector<1x128xf32>
    %cst_331 = arith.constant 2.656250e-02 : f32
    %599 = vector.broadcast %cst_331 : f32 to vector<1x128xf32>
    %600 = arith.mulf %599, %598 : vector<1x128xf32>
    %cst_332 = arith.constant 0.000000e+00 : f32
    %601 = vector.broadcast %cst_332 : f32 to vector<1x128xf32>
    %602 = arith.select %593, %600, %601 : vector<1x128xi1>, vector<1x128xf32>
    %603 = arith.addf %547, %586 : vector<1x128xf32>
    %604 = arith.subf %603, %602 : vector<1x128xf32>
    %cst_333 = arith.constant 0.000000e+00 : f32
    %cst_334 = arith.constant 1.000000e+00 : f32
    %605 = vector.broadcast %cst_333 : f32 to vector<1x128xf32>
    %606 = arith.maximumf %605, %604 : vector<1x128xf32>
    %607 = vector.broadcast %cst_334 : f32 to vector<1x128xf32>
    %608 = arith.minimumf %607, %606 : vector<1x128xf32>
    %609 = arith.select %542, %558, %543 : vector<1x1xf32>
    %c0_335 = arith.constant 0 : index
    %c0_336 = arith.constant 0 : index
    %610 = vector.load %arg9[%c0_335, %c0_336] : memref<1x1xf32, #tpu.memory_space<vmem>>, vector<1x1xf32>
    tpu.vector_store %arg9[%c0_335, %c0_336], %609 {strides = array<i32>} : memref<1x1xf32, #tpu.memory_space<vmem>>, vector<1x1xf32>,
    %611 = arith.select %542, %567, %544 : vector<1x1xf32>
    %c0_337 = arith.constant 0 : index
    %c0_338 = arith.constant 0 : index
    %612 = vector.load %arg10[%c0_337, %c0_338] : memref<1x1xf32, #tpu.memory_space<vmem>>, vector<1x1xf32>
    tpu.vector_store %arg10[%c0_337, %c0_338], %611 {strides = array<i32>} : memref<1x1xf32, #tpu.memory_space<vmem>>, vector<1x1xf32>,
    %613 = arith.select %542, %571, %545 : vector<1x1xf32>
    %c0_339 = arith.constant 0 : index
    %c0_340 = arith.constant 0 : index
    %614 = vector.load %arg11[%c0_339, %c0_340] : memref<1x1xf32, #tpu.memory_space<vmem>>, vector<1x1xf32>
    tpu.vector_store %arg11[%c0_339, %c0_340], %613 {strides = array<i32>} : memref<1x1xf32, #tpu.memory_space<vmem>>, vector<1x1xf32>,
    %615 = arith.select %542, %546, %546 : vector<1x1xf32>
    %c0_341 = arith.constant 0 : index
    %c0_342 = arith.constant 0 : index
    %616 = vector.load %arg12[%c0_341, %c0_342] : memref<1x1xf32, #tpu.memory_space<vmem>>, vector<1x1xf32>
    tpu.vector_store %arg12[%c0_341, %c0_342], %615 {strides = array<i32>} : memref<1x1xf32, #tpu.memory_space<vmem>>, vector<1x1xf32>,
    %617 = arith.select %542, %608, %547 : vector<1x128xf32>
    %c0_343 = arith.constant 0 : index
    %c0_344 = arith.constant 0 : index
    %618 = vector.load %arg8[%c0_343, %c0_344] : memref<1x128xf32, #tpu.memory_space<vmem>>, vector<1x128xf32>
    tpu.vector_store %arg8[%c0_343, %c0_344], %617 {strides = array<i32>} : memref<1x128xf32, #tpu.memory_space<vmem>>, vector<1x128xf32>,
    %c0_i32_345 = arith.constant 0 : i32
    %619 = vector.broadcast %c0_i32_345 : i32 to vector<1x128xi32>
    %620 = arith.cmpi eq, %4, %619 : vector<1x128xi32>
    %cst_346 = arith.constant 0.000000e+00 : f32
    %621 = vector.shape_cast %558 : vector<1x1xf32> to vector<1x1xf32>
    %622 = vector.broadcast %621 : vector<1x1xf32> to vector<1x128xf32>
    %623 = vector.broadcast %cst_346 : f32 to vector<1x128xf32>
    %624 = arith.select %620, %622, %623 : vector<1x128xi1>, vector<1x128xf32>
    %c1_i32_347 = arith.constant 1 : i32
    %625 = vector.broadcast %c1_i32_347 : i32 to vector<1x128xi32>
    %626 = arith.cmpi eq, %4, %625 : vector<1x128xi32>
    %cst_348 = arith.constant 0.000000e+00 : f32
    %627 = vector.shape_cast %567 : vector<1x1xf32> to vector<1x1xf32>
    %628 = vector.broadcast %627 : vector<1x1xf32> to vector<1x128xf32>
    %629 = vector.broadcast %cst_348 : f32 to vector<1x128xf32>
    %630 = arith.select %626, %628, %629 : vector<1x128xi1>, vector<1x128xf32>
    %631 = arith.addf %624, %630 : vector<1x128xf32>
    %c2_i32_349 = arith.constant 2 : i32
    %632 = vector.broadcast %c2_i32_349 : i32 to vector<1x128xi32>
    %633 = arith.cmpi eq, %4, %632 : vector<1x128xi32>
    %cst_350 = arith.constant 0.000000e+00 : f32
    %634 = vector.shape_cast %571 : vector<1x1xf32> to vector<1x1xf32>
    %635 = vector.broadcast %634 : vector<1x1xf32> to vector<1x128xf32>
    %636 = vector.broadcast %cst_350 : f32 to vector<1x128xf32>
    %637 = arith.select %633, %635, %636 : vector<1x128xi1>, vector<1x128xf32>
    %638 = arith.addf %631, %637 : vector<1x128xf32>
    %c3_i32_351 = arith.constant 3 : i32
    %639 = vector.broadcast %c3_i32_351 : i32 to vector<1x128xi32>
    %640 = arith.cmpi eq, %4, %639 : vector<1x128xi32>
    %cst_352 = arith.constant 0.000000e+00 : f32
    %641 = vector.shape_cast %546 : vector<1x1xf32> to vector<1x1xf32>
    %642 = vector.broadcast %641 : vector<1x1xf32> to vector<1x128xf32>
    %643 = vector.broadcast %cst_352 : f32 to vector<1x128xf32>
    %644 = arith.select %640, %642, %643 : vector<1x128xi1>, vector<1x128xf32>
    %645 = arith.addf %638, %644 : vector<1x128xf32>
    %c5_353 = arith.constant 5 : index
    %c0_354 = arith.constant 0 : index
    %646 = vector.load %arg6[%c5_353, %c0_354] : memref<8x128xf32, #tpu.memory_space<vmem>>, vector<1x128xf32>
    tpu.vector_store %arg6[%c5_353, %c0_354], %645 {strides = array<i32>} : memref<8x128xf32, #tpu.memory_space<vmem>>, vector<1x128xf32>,
    %c8_i32_355 = arith.constant 8 : i32
    %647 = arith.muli %arg0, %c8_i32_355 : i32
    %c6_i32 = arith.constant 6 : i32
    %648 = arith.addi %647, %c6_i32 : i32
    %c13_i32_356 = arith.constant 13 : i32
    %649 = arith.cmpi slt, %648, %c13_i32_356 : i32
    %c0_357 = arith.constant 0 : index
    %c0_358 = arith.constant 0 : index
    %650 = vector.load %arg9[%c0_357, %c0_358] : memref<1x1xf32, #tpu.memory_space<vmem>>, vector<1x1xf32>
    %c0_359 = arith.constant 0 : index
    %c0_360 = arith.constant 0 : index
    %651 = vector.load %arg10[%c0_359, %c0_360] : memref<1x1xf32, #tpu.memory_space<vmem>>, vector<1x1xf32>
    %c0_361 = arith.constant 0 : index
    %c0_362 = arith.constant 0 : index
    %652 = vector.load %arg11[%c0_361, %c0_362] : memref<1x1xf32, #tpu.memory_space<vmem>>, vector<1x1xf32>
    %c0_363 = arith.constant 0 : index
    %c0_364 = arith.constant 0 : index
    %653 = vector.load %arg12[%c0_363, %c0_364] : memref<1x1xf32, #tpu.memory_space<vmem>>, vector<1x1xf32>
    %c0_365 = arith.constant 0 : index
    %c0_366 = arith.constant 0 : index
    %654 = vector.load %arg8[%c0_365, %c0_366] : memref<1x128xf32, #tpu.memory_space<vmem>>, vector<1x128xf32>
    %c6 = arith.constant 6 : index
    %c0_367 = arith.constant 0 : index
    %c0_368 = arith.constant 0 : index
    %655 = vector.load %arg1[%c6, %c0_367, %c0_368] : memref<8x1x128xf32, #tpu.memory_space<vmem>>, vector<1x1x128xf32>
    %656 = vector.shape_cast %655 : vector<1x1x128xf32> to vector<1x128xf32>
    %c6_369 = arith.constant 6 : index
    %c0_370 = arith.constant 0 : index
    %c0_371 = arith.constant 0 : index
    %657 = vector.load %arg2[%c6_369, %c0_370, %c0_371] : memref<8x1x128xf32, #tpu.memory_space<vmem>>, vector<1x1x128xf32>
    %658 = vector.shape_cast %657 : vector<1x1x128xf32> to vector<1x128xf32>
    %c6_372 = arith.constant 6 : index
    %c0_373 = arith.constant 0 : index
    %c0_374 = arith.constant 0 : index
    %659 = vector.load %arg3[%c6_372, %c0_373, %c0_374] : memref<8x1x128xf32, #tpu.memory_space<vmem>>, vector<1x1x128xf32>
    %660 = vector.shape_cast %659 : vector<1x1x128xf32> to vector<1x128xf32>
    %cst_375 = arith.constant 0.899999976 : f32
    %661 = vector.broadcast %cst_375 : f32 to vector<1x1xf32>
    %662 = arith.mulf %661, %650 : vector<1x1xf32>
    %663 = arith.addf %662, %651 : vector<1x1xf32>
    %664 = arith.mulf %652, %650 : vector<1x1xf32>
    %665 = arith.subf %663, %664 : vector<1x1xf32>
    %666 = arith.mulf %656, %654 : vector<1x128xf32>
    %cst_376 = arith.constant dense<0.000000e+00> : vector<1xf32>
    %667 = vector.multi_reduction <add>, %666, %cst_376 [1] : vector<1x128xf32> to vector<1xf32>
    %668 = vector.shape_cast %667 : vector<1xf32> to vector<1x1xf32>
    %cst_377 = arith.constant dense<0.000000e+00> : vector<1xf32>
    %669 = vector.multi_reduction <add>, %668, %cst_377 [0] : vector<1x1xf32> to vector<1xf32>
    %670 = vector.shape_cast %669 : vector<1xf32> to vector<1x1xf32>
    %cst_378 = arith.constant 8.500000e-01 : f32
    %671 = vector.broadcast %cst_378 : f32 to vector<1x1xf32>
    %672 = arith.mulf %671, %651 : vector<1x1xf32>
    %673 = arith.addf %672, %670 : vector<1x1xf32>
    %674 = arith.addf %673, %3 : vector<1x1xf32>
    %cst_379 = arith.constant 1.000000e+00 : f32
    %675 = vector.broadcast %cst_379 : f32 to vector<1x1xf32>
    %676 = arith.cmpf ogt, %665, %675 : vector<1x1xf32>
    %677 = arith.extui %676 : vector<1x1xi1> to vector<1x1xi32>
    %678 = arith.sitofp %677 : vector<1x1xi32> to vector<1x1xf32>
    %cst_380 = arith.constant 0.000000e+00 : f32
    %679 = vector.broadcast %cst_380 : f32 to vector<1x1xf32>
    %680 = arith.cmpf one, %678, %679 : vector<1x1xf32>
    %cst_381 = arith.constant 0.000000e+00 : f32
    %681 = vector.broadcast %cst_381 : f32 to vector<1x128xf32>
    %682 = arith.cmpf one, %658, %681 : vector<1x128xf32>
    %683 = vector.broadcast %680 : vector<1x1xi1> to vector<1x128xi1>
    %684 = arith.andi %682, %683 : vector<1x128xi1>
    %cst_382 = arith.constant 0.000000e+00 : f32
    %685 = vector.broadcast %cst_382 : f32 to vector<1x128xf32>
    %686 = arith.subf %685, %658 : vector<1x128xf32>
    %cst_383 = arith.constant 1.680000e+01 : f32
    %687 = vector.broadcast %cst_383 : f32 to vector<1x128xf32>
    %688 = arith.divf %686, %687 : vector<1x128xf32>
    %689 = math.exp %688 : vector<1x128xf32>
    %cst_384 = arith.constant 3.125000e-02 : f32
    %690 = vector.broadcast %cst_384 : f32 to vector<1x128xf32>
    %691 = arith.mulf %690, %689 : vector<1x128xf32>
    %cst_385 = arith.constant 0.000000e+00 : f32
    %692 = vector.broadcast %cst_385 : f32 to vector<1x128xf32>
    %693 = arith.select %684, %691, %692 : vector<1x128xi1>, vector<1x128xf32>
    %cst_386 = arith.constant 0.000000e+00 : f32
    %694 = vector.broadcast %cst_386 : f32 to vector<1x128xf32>
    %695 = arith.cmpf one, %660, %694 : vector<1x128xf32>
    %cst_387 = arith.constant 0.000000e+00 : f32
    %696 = vector.broadcast %cst_387 : f32 to vector<1x128xf32>
    %697 = arith.cmpf oeq, %658, %696 : vector<1x128xf32>
    %698 = arith.andi %695, %697 : vector<1x128xi1>
    %699 = vector.broadcast %680 : vector<1x1xi1> to vector<1x128xi1>
    %700 = arith.andi %699, %698 : vector<1x128xi1>
    %cst_388 = arith.constant 0.000000e+00 : f32
    %701 = vector.broadcast %cst_388 : f32 to vector<1x128xf32>
    %702 = arith.subf %701, %660 : vector<1x128xf32>
    %cst_389 = arith.constant 3.370000e+01 : f32
    %703 = vector.broadcast %cst_389 : f32 to vector<1x128xf32>
    %704 = arith.divf %702, %703 : vector<1x128xf32>
    %705 = math.exp %704 : vector<1x128xf32>
    %cst_390 = arith.constant 2.656250e-02 : f32
    %706 = vector.broadcast %cst_390 : f32 to vector<1x128xf32>
    %707 = arith.mulf %706, %705 : vector<1x128xf32>
    %cst_391 = arith.constant 0.000000e+00 : f32
    %708 = vector.broadcast %cst_391 : f32 to vector<1x128xf32>
    %709 = arith.select %700, %707, %708 : vector<1x128xi1>, vector<1x128xf32>
    %710 = arith.addf %654, %693 : vector<1x128xf32>
    %711 = arith.subf %710, %709 : vector<1x128xf32>
    %cst_392 = arith.constant 0.000000e+00 : f32
    %cst_393 = arith.constant 1.000000e+00 : f32
    %712 = vector.broadcast %cst_392 : f32 to vector<1x128xf32>
    %713 = arith.maximumf %712, %711 : vector<1x128xf32>
    %714 = vector.broadcast %cst_393 : f32 to vector<1x128xf32>
    %715 = arith.minimumf %714, %713 : vector<1x128xf32>
    %716 = arith.select %649, %665, %650 : vector<1x1xf32>
    %c0_394 = arith.constant 0 : index
    %c0_395 = arith.constant 0 : index
    %717 = vector.load %arg9[%c0_394, %c0_395] : memref<1x1xf32, #tpu.memory_space<vmem>>, vector<1x1xf32>
    tpu.vector_store %arg9[%c0_394, %c0_395], %716 {strides = array<i32>} : memref<1x1xf32, #tpu.memory_space<vmem>>, vector<1x1xf32>,
    %718 = arith.select %649, %674, %651 : vector<1x1xf32>
    %c0_396 = arith.constant 0 : index
    %c0_397 = arith.constant 0 : index
    %719 = vector.load %arg10[%c0_396, %c0_397] : memref<1x1xf32, #tpu.memory_space<vmem>>, vector<1x1xf32>
    tpu.vector_store %arg10[%c0_396, %c0_397], %718 {strides = array<i32>} : memref<1x1xf32, #tpu.memory_space<vmem>>, vector<1x1xf32>,
    %720 = arith.select %649, %678, %652 : vector<1x1xf32>
    %c0_398 = arith.constant 0 : index
    %c0_399 = arith.constant 0 : index
    %721 = vector.load %arg11[%c0_398, %c0_399] : memref<1x1xf32, #tpu.memory_space<vmem>>, vector<1x1xf32>
    tpu.vector_store %arg11[%c0_398, %c0_399], %720 {strides = array<i32>} : memref<1x1xf32, #tpu.memory_space<vmem>>, vector<1x1xf32>,
    %722 = arith.select %649, %653, %653 : vector<1x1xf32>
    %c0_400 = arith.constant 0 : index
    %c0_401 = arith.constant 0 : index
    %723 = vector.load %arg12[%c0_400, %c0_401] : memref<1x1xf32, #tpu.memory_space<vmem>>, vector<1x1xf32>
    tpu.vector_store %arg12[%c0_400, %c0_401], %722 {strides = array<i32>} : memref<1x1xf32, #tpu.memory_space<vmem>>, vector<1x1xf32>,
    %724 = arith.select %649, %715, %654 : vector<1x128xf32>
    %c0_402 = arith.constant 0 : index
    %c0_403 = arith.constant 0 : index
    %725 = vector.load %arg8[%c0_402, %c0_403] : memref<1x128xf32, #tpu.memory_space<vmem>>, vector<1x128xf32>
    tpu.vector_store %arg8[%c0_402, %c0_403], %724 {strides = array<i32>} : memref<1x128xf32, #tpu.memory_space<vmem>>, vector<1x128xf32>,
    %c0_i32_404 = arith.constant 0 : i32
    %726 = vector.broadcast %c0_i32_404 : i32 to vector<1x128xi32>
    %727 = arith.cmpi eq, %4, %726 : vector<1x128xi32>
    %cst_405 = arith.constant 0.000000e+00 : f32
    %728 = vector.shape_cast %665 : vector<1x1xf32> to vector<1x1xf32>
    %729 = vector.broadcast %728 : vector<1x1xf32> to vector<1x128xf32>
    %730 = vector.broadcast %cst_405 : f32 to vector<1x128xf32>
    %731 = arith.select %727, %729, %730 : vector<1x128xi1>, vector<1x128xf32>
    %c1_i32_406 = arith.constant 1 : i32
    %732 = vector.broadcast %c1_i32_406 : i32 to vector<1x128xi32>
    %733 = arith.cmpi eq, %4, %732 : vector<1x128xi32>
    %cst_407 = arith.constant 0.000000e+00 : f32
    %734 = vector.shape_cast %674 : vector<1x1xf32> to vector<1x1xf32>
    %735 = vector.broadcast %734 : vector<1x1xf32> to vector<1x128xf32>
    %736 = vector.broadcast %cst_407 : f32 to vector<1x128xf32>
    %737 = arith.select %733, %735, %736 : vector<1x128xi1>, vector<1x128xf32>
    %738 = arith.addf %731, %737 : vector<1x128xf32>
    %c2_i32_408 = arith.constant 2 : i32
    %739 = vector.broadcast %c2_i32_408 : i32 to vector<1x128xi32>
    %740 = arith.cmpi eq, %4, %739 : vector<1x128xi32>
    %cst_409 = arith.constant 0.000000e+00 : f32
    %741 = vector.shape_cast %678 : vector<1x1xf32> to vector<1x1xf32>
    %742 = vector.broadcast %741 : vector<1x1xf32> to vector<1x128xf32>
    %743 = vector.broadcast %cst_409 : f32 to vector<1x128xf32>
    %744 = arith.select %740, %742, %743 : vector<1x128xi1>, vector<1x128xf32>
    %745 = arith.addf %738, %744 : vector<1x128xf32>
    %c3_i32_410 = arith.constant 3 : i32
    %746 = vector.broadcast %c3_i32_410 : i32 to vector<1x128xi32>
    %747 = arith.cmpi eq, %4, %746 : vector<1x128xi32>
    %cst_411 = arith.constant 0.000000e+00 : f32
    %748 = vector.shape_cast %653 : vector<1x1xf32> to vector<1x1xf32>
    %749 = vector.broadcast %748 : vector<1x1xf32> to vector<1x128xf32>
    %750 = vector.broadcast %cst_411 : f32 to vector<1x128xf32>
    %751 = arith.select %747, %749, %750 : vector<1x128xi1>, vector<1x128xf32>
    %752 = arith.addf %745, %751 : vector<1x128xf32>
    %c6_412 = arith.constant 6 : index
    %c0_413 = arith.constant 0 : index
    %753 = vector.load %arg6[%c6_412, %c0_413] : memref<8x128xf32, #tpu.memory_space<vmem>>, vector<1x128xf32>
    tpu.vector_store %arg6[%c6_412, %c0_413], %752 {strides = array<i32>} : memref<8x128xf32, #tpu.memory_space<vmem>>, vector<1x128xf32>,
    %c8_i32_414 = arith.constant 8 : i32
    %754 = arith.muli %arg0, %c8_i32_414 : i32
    %c7_i32 = arith.constant 7 : i32
    %755 = arith.addi %754, %c7_i32 : i32
    %c13_i32_415 = arith.constant 13 : i32
    %756 = arith.cmpi slt, %755, %c13_i32_415 : i32
    %c0_416 = arith.constant 0 : index
    %c0_417 = arith.constant 0 : index
    %757 = vector.load %arg9[%c0_416, %c0_417] : memref<1x1xf32, #tpu.memory_space<vmem>>, vector<1x1xf32>
    %c0_418 = arith.constant 0 : index
    %c0_419 = arith.constant 0 : index
    %758 = vector.load %arg10[%c0_418, %c0_419] : memref<1x1xf32, #tpu.memory_space<vmem>>, vector<1x1xf32>
    %c0_420 = arith.constant 0 : index
    %c0_421 = arith.constant 0 : index
    %759 = vector.load %arg11[%c0_420, %c0_421] : memref<1x1xf32, #tpu.memory_space<vmem>>, vector<1x1xf32>
    %c0_422 = arith.constant 0 : index
    %c0_423 = arith.constant 0 : index
    %760 = vector.load %arg12[%c0_422, %c0_423] : memref<1x1xf32, #tpu.memory_space<vmem>>, vector<1x1xf32>
    %c0_424 = arith.constant 0 : index
    %c0_425 = arith.constant 0 : index
    %761 = vector.load %arg8[%c0_424, %c0_425] : memref<1x128xf32, #tpu.memory_space<vmem>>, vector<1x128xf32>
    %c7 = arith.constant 7 : index
    %c0_426 = arith.constant 0 : index
    %c0_427 = arith.constant 0 : index
    %762 = vector.load %arg1[%c7, %c0_426, %c0_427] : memref<8x1x128xf32, #tpu.memory_space<vmem>>, vector<1x1x128xf32>
    %763 = vector.shape_cast %762 : vector<1x1x128xf32> to vector<1x128xf32>
    %c7_428 = arith.constant 7 : index
    %c0_429 = arith.constant 0 : index
    %c0_430 = arith.constant 0 : index
    %764 = vector.load %arg2[%c7_428, %c0_429, %c0_430] : memref<8x1x128xf32, #tpu.memory_space<vmem>>, vector<1x1x128xf32>
    %765 = vector.shape_cast %764 : vector<1x1x128xf32> to vector<1x128xf32>
    %c7_431 = arith.constant 7 : index
    %c0_432 = arith.constant 0 : index
    %c0_433 = arith.constant 0 : index
    %766 = vector.load %arg3[%c7_431, %c0_432, %c0_433] : memref<8x1x128xf32, #tpu.memory_space<vmem>>, vector<1x1x128xf32>
    %767 = vector.shape_cast %766 : vector<1x1x128xf32> to vector<1x128xf32>
    %cst_434 = arith.constant 0.899999976 : f32
    %768 = vector.broadcast %cst_434 : f32 to vector<1x1xf32>
    %769 = arith.mulf %768, %757 : vector<1x1xf32>
    %770 = arith.addf %769, %758 : vector<1x1xf32>
    %771 = arith.mulf %759, %757 : vector<1x1xf32>
    %772 = arith.subf %770, %771 : vector<1x1xf32>
    %773 = arith.mulf %763, %761 : vector<1x128xf32>
    %cst_435 = arith.constant dense<0.000000e+00> : vector<1xf32>
    %774 = vector.multi_reduction <add>, %773, %cst_435 [1] : vector<1x128xf32> to vector<1xf32>
    %775 = vector.shape_cast %774 : vector<1xf32> to vector<1x1xf32>
    %cst_436 = arith.constant dense<0.000000e+00> : vector<1xf32>
    %776 = vector.multi_reduction <add>, %775, %cst_436 [0] : vector<1x1xf32> to vector<1xf32>
    %777 = vector.shape_cast %776 : vector<1xf32> to vector<1x1xf32>
    %cst_437 = arith.constant 8.500000e-01 : f32
    %778 = vector.broadcast %cst_437 : f32 to vector<1x1xf32>
    %779 = arith.mulf %778, %758 : vector<1x1xf32>
    %780 = arith.addf %779, %777 : vector<1x1xf32>
    %781 = arith.addf %780, %3 : vector<1x1xf32>
    %cst_438 = arith.constant 1.000000e+00 : f32
    %782 = vector.broadcast %cst_438 : f32 to vector<1x1xf32>
    %783 = arith.cmpf ogt, %772, %782 : vector<1x1xf32>
    %784 = arith.extui %783 : vector<1x1xi1> to vector<1x1xi32>
    %785 = arith.sitofp %784 : vector<1x1xi32> to vector<1x1xf32>
    %cst_439 = arith.constant 0.000000e+00 : f32
    %786 = vector.broadcast %cst_439 : f32 to vector<1x1xf32>
    %787 = arith.cmpf one, %785, %786 : vector<1x1xf32>
    %cst_440 = arith.constant 0.000000e+00 : f32
    %788 = vector.broadcast %cst_440 : f32 to vector<1x128xf32>
    %789 = arith.cmpf one, %765, %788 : vector<1x128xf32>
    %790 = vector.broadcast %787 : vector<1x1xi1> to vector<1x128xi1>
    %791 = arith.andi %789, %790 : vector<1x128xi1>
    %cst_441 = arith.constant 0.000000e+00 : f32
    %792 = vector.broadcast %cst_441 : f32 to vector<1x128xf32>
    %793 = arith.subf %792, %765 : vector<1x128xf32>
    %cst_442 = arith.constant 1.680000e+01 : f32
    %794 = vector.broadcast %cst_442 : f32 to vector<1x128xf32>
    %795 = arith.divf %793, %794 : vector<1x128xf32>
    %796 = math.exp %795 : vector<1x128xf32>
    %cst_443 = arith.constant 3.125000e-02 : f32
    %797 = vector.broadcast %cst_443 : f32 to vector<1x128xf32>
    %798 = arith.mulf %797, %796 : vector<1x128xf32>
    %cst_444 = arith.constant 0.000000e+00 : f32
    %799 = vector.broadcast %cst_444 : f32 to vector<1x128xf32>
    %800 = arith.select %791, %798, %799 : vector<1x128xi1>, vector<1x128xf32>
    %cst_445 = arith.constant 0.000000e+00 : f32
    %801 = vector.broadcast %cst_445 : f32 to vector<1x128xf32>
    %802 = arith.cmpf one, %767, %801 : vector<1x128xf32>
    %cst_446 = arith.constant 0.000000e+00 : f32
    %803 = vector.broadcast %cst_446 : f32 to vector<1x128xf32>
    %804 = arith.cmpf oeq, %765, %803 : vector<1x128xf32>
    %805 = arith.andi %802, %804 : vector<1x128xi1>
    %806 = vector.broadcast %787 : vector<1x1xi1> to vector<1x128xi1>
    %807 = arith.andi %806, %805 : vector<1x128xi1>
    %cst_447 = arith.constant 0.000000e+00 : f32
    %808 = vector.broadcast %cst_447 : f32 to vector<1x128xf32>
    %809 = arith.subf %808, %767 : vector<1x128xf32>
    %cst_448 = arith.constant 3.370000e+01 : f32
    %810 = vector.broadcast %cst_448 : f32 to vector<1x128xf32>
    %811 = arith.divf %809, %810 : vector<1x128xf32>
    %812 = math.exp %811 : vector<1x128xf32>
    %cst_449 = arith.constant 2.656250e-02 : f32
    %813 = vector.broadcast %cst_449 : f32 to vector<1x128xf32>
    %814 = arith.mulf %813, %812 : vector<1x128xf32>
    %cst_450 = arith.constant 0.000000e+00 : f32
    %815 = vector.broadcast %cst_450 : f32 to vector<1x128xf32>
    %816 = arith.select %807, %814, %815 : vector<1x128xi1>, vector<1x128xf32>
    %817 = arith.addf %761, %800 : vector<1x128xf32>
    %818 = arith.subf %817, %816 : vector<1x128xf32>
    %cst_451 = arith.constant 0.000000e+00 : f32
    %cst_452 = arith.constant 1.000000e+00 : f32
    %819 = vector.broadcast %cst_451 : f32 to vector<1x128xf32>
    %820 = arith.maximumf %819, %818 : vector<1x128xf32>
    %821 = vector.broadcast %cst_452 : f32 to vector<1x128xf32>
    %822 = arith.minimumf %821, %820 : vector<1x128xf32>
    %823 = arith.select %756, %772, %757 : vector<1x1xf32>
    %c0_453 = arith.constant 0 : index
    %c0_454 = arith.constant 0 : index
    %824 = vector.load %arg9[%c0_453, %c0_454] : memref<1x1xf32, #tpu.memory_space<vmem>>, vector<1x1xf32>
    tpu.vector_store %arg9[%c0_453, %c0_454], %823 {strides = array<i32>} : memref<1x1xf32, #tpu.memory_space<vmem>>, vector<1x1xf32>,
    %825 = arith.select %756, %781, %758 : vector<1x1xf32>
    %c0_455 = arith.constant 0 : index
    %c0_456 = arith.constant 0 : index
    %826 = vector.load %arg10[%c0_455, %c0_456] : memref<1x1xf32, #tpu.memory_space<vmem>>, vector<1x1xf32>
    tpu.vector_store %arg10[%c0_455, %c0_456], %825 {strides = array<i32>} : memref<1x1xf32, #tpu.memory_space<vmem>>, vector<1x1xf32>,
    %827 = arith.select %756, %785, %759 : vector<1x1xf32>
    %c0_457 = arith.constant 0 : index
    %c0_458 = arith.constant 0 : index
    %828 = vector.load %arg11[%c0_457, %c0_458] : memref<1x1xf32, #tpu.memory_space<vmem>>, vector<1x1xf32>
    tpu.vector_store %arg11[%c0_457, %c0_458], %827 {strides = array<i32>} : memref<1x1xf32, #tpu.memory_space<vmem>>, vector<1x1xf32>,
    %829 = arith.select %756, %760, %760 : vector<1x1xf32>
    %c0_459 = arith.constant 0 : index
    %c0_460 = arith.constant 0 : index
    %830 = vector.load %arg12[%c0_459, %c0_460] : memref<1x1xf32, #tpu.memory_space<vmem>>, vector<1x1xf32>
    tpu.vector_store %arg12[%c0_459, %c0_460], %829 {strides = array<i32>} : memref<1x1xf32, #tpu.memory_space<vmem>>, vector<1x1xf32>,
    %831 = arith.select %756, %822, %761 : vector<1x128xf32>
    %c0_461 = arith.constant 0 : index
    %c0_462 = arith.constant 0 : index
    %832 = vector.load %arg8[%c0_461, %c0_462] : memref<1x128xf32, #tpu.memory_space<vmem>>, vector<1x128xf32>
    tpu.vector_store %arg8[%c0_461, %c0_462], %831 {strides = array<i32>} : memref<1x128xf32, #tpu.memory_space<vmem>>, vector<1x128xf32>,
    %c0_i32_463 = arith.constant 0 : i32
    %833 = vector.broadcast %c0_i32_463 : i32 to vector<1x128xi32>
    %834 = arith.cmpi eq, %4, %833 : vector<1x128xi32>
    %cst_464 = arith.constant 0.000000e+00 : f32
    %835 = vector.shape_cast %772 : vector<1x1xf32> to vector<1x1xf32>
    %836 = vector.broadcast %835 : vector<1x1xf32> to vector<1x128xf32>
    %837 = vector.broadcast %cst_464 : f32 to vector<1x128xf32>
    %838 = arith.select %834, %836, %837 : vector<1x128xi1>, vector<1x128xf32>
    %c1_i32_465 = arith.constant 1 : i32
    %839 = vector.broadcast %c1_i32_465 : i32 to vector<1x128xi32>
    %840 = arith.cmpi eq, %4, %839 : vector<1x128xi32>
    %cst_466 = arith.constant 0.000000e+00 : f32
    %841 = vector.shape_cast %781 : vector<1x1xf32> to vector<1x1xf32>
    %842 = vector.broadcast %841 : vector<1x1xf32> to vector<1x128xf32>
    %843 = vector.broadcast %cst_466 : f32 to vector<1x128xf32>
    %844 = arith.select %840, %842, %843 : vector<1x128xi1>, vector<1x128xf32>
    %845 = arith.addf %838, %844 : vector<1x128xf32>
    %c2_i32_467 = arith.constant 2 : i32
    %846 = vector.broadcast %c2_i32_467 : i32 to vector<1x128xi32>
    %847 = arith.cmpi eq, %4, %846 : vector<1x128xi32>
    %cst_468 = arith.constant 0.000000e+00 : f32
    %848 = vector.shape_cast %785 : vector<1x1xf32> to vector<1x1xf32>
    %849 = vector.broadcast %848 : vector<1x1xf32> to vector<1x128xf32>
    %850 = vector.broadcast %cst_468 : f32 to vector<1x128xf32>
    %851 = arith.select %847, %849, %850 : vector<1x128xi1>, vector<1x128xf32>
    %852 = arith.addf %845, %851 : vector<1x128xf32>
    %c3_i32_469 = arith.constant 3 : i32
    %853 = vector.broadcast %c3_i32_469 : i32 to vector<1x128xi32>
    %854 = arith.cmpi eq, %4, %853 : vector<1x128xi32>
    %cst_470 = arith.constant 0.000000e+00 : f32
    %855 = vector.shape_cast %760 : vector<1x1xf32> to vector<1x1xf32>
    %856 = vector.broadcast %855 : vector<1x1xf32> to vector<1x128xf32>
    %857 = vector.broadcast %cst_470 : f32 to vector<1x128xf32>
    %858 = arith.select %854, %856, %857 : vector<1x128xi1>, vector<1x128xf32>
    %859 = arith.addf %852, %858 : vector<1x128xf32>
    %c7_471 = arith.constant 7 : index
    %c0_472 = arith.constant 0 : index
    %860 = vector.load %arg6[%c7_471, %c0_472] : memref<8x128xf32, #tpu.memory_space<vmem>>, vector<1x128xf32>
    tpu.vector_store %arg6[%c7_471, %c0_472], %859 {strides = array<i32>} : memref<8x128xf32, #tpu.memory_space<vmem>>, vector<1x128xf32>,
    %c1_i32_473 = arith.constant 1 : i32
    %861 = arith.cmpi eq, %arg0, %c1_i32_473 : i32
    %862 = arith.extui %861 : i1 to i32
    %c0_i32_474 = arith.constant 0 : i32
    %863 = arith.cmpi ne, %862, %c0_i32_474 : i32
    scf.if %863 {
      %c0_475 = arith.constant 0 : index
      %c0_476 = arith.constant 0 : index
      %864 = vector.load %arg8[%c0_475, %c0_476] : memref<1x128xf32, #tpu.memory_space<vmem>>, vector<1x128xf32>
      %c0_477 = arith.constant 0 : index
      %c0_478 = arith.constant 0 : index
      %865 = vector.load %arg7[%c0_477, %c0_478] : memref<1x128xf32, #tpu.memory_space<vmem>>, vector<1x128xf32>
      tpu.vector_store %arg7[%c0_477, %c0_478], %864 {strides = array<i32>} : memref<1x128xf32, #tpu.memory_space<vmem>>, vector<1x128xf32>,
    } else {
    }
    return
  }
  func.func @transform_0(%arg0: i32) -> (i32, i32, i32) {
    %c0_i32 = arith.constant 0 : i32
    %c0_i32_0 = arith.constant 0 : i32
    %c0_i32_1 = arith.constant 0 : i32
    return %arg0, %c0_i32, %c0_i32_0 : i32, i32, i32
  }
  func.func @transform_1(%arg0: i32) -> (i32, i32, i32) {
    %c0_i32 = arith.constant 0 : i32
    %c0_i32_0 = arith.constant 0 : i32
    %c0_i32_1 = arith.constant 0 : i32
    return %arg0, %c0_i32, %c0_i32_0 : i32, i32, i32
  }
  func.func @transform_2(%arg0: i32) -> (i32, i32, i32) {
    %c0_i32 = arith.constant 0 : i32
    %c0_i32_0 = arith.constant 0 : i32
    %c0_i32_1 = arith.constant 0 : i32
    return %arg0, %c0_i32, %c0_i32_0 : i32, i32, i32
  }
  func.func @transform_3(%arg0: i32) -> (i32, i32) {
    %c0_i32 = arith.constant 0 : i32
    %c0_i32_0 = arith.constant 0 : i32
    %c0_i32_1 = arith.constant 0 : i32
    return %c0_i32, %c0_i32_0 : i32, i32
  }
  func.func @transform_4(%arg0: i32) -> (i32, i32) {
    %c0_i32 = arith.constant 0 : i32
    %c0_i32_0 = arith.constant 0 : i32
    %c0_i32_1 = arith.constant 0 : i32
    return %c0_i32, %c0_i32_0 : i32, i32
  }
  func.func @transform_5(%arg0: i32) -> (i32, i32) {
    %c0_i32 = arith.constant 0 : i32
    %c0_i32_0 = arith.constant 0 : i32
    return %arg0, %c0_i32 : i32, i32
  }
  func.func @transform_6(%arg0: i32) -> (i32, i32) {
    %c0_i32 = arith.constant 0 : i32
    %c0_i32_0 = arith.constant 0 : i32
    %c0_i32_1 = arith.constant 0 : i32
    return %c0_i32, %c0_i32_0 : i32, i32
  }
}

</mosaic_0001>

<llo_original>
// kernel: tpu_custom_call.1
$region0: #{tpu_custom_call.1}
  #allocation0 [shape = 'u32[]', space=smem, size = 0x4, offset = 0x4, fixed_abs, tag = 'smem constant byte address 0x4 - core index']
  #allocation1 [shape = 'u32[144,128]{1,0:T(1,128)}', space=vmem, size = 0x12000, scoped, tag = 'internal scratch']
  #allocation2 [shape = 'f32[1,128]{1,0:T(1,128)}', space=vmem, size = 0x200, scoped, tag = 'scratch operand']
  #allocation3 [shape = 'f32[1,1]{1,0:T(1,128)}', space=vmem, size = 0x200, scoped, tag = 'scratch operand']
  #allocation4 [shape = 'f32[1,1]{1,0:T(1,128)}', space=vmem, size = 0x200, scoped, tag = 'scratch operand']
  #allocation5 [shape = 'f32[1,1]{1,0:T(1,128)}', space=vmem, size = 0x200, scoped, tag = 'scratch operand']
  #allocation6 [shape = 'f32[1,1]{1,0:T(1,128)}', space=vmem, size = 0x200, scoped, tag = 'scratch operand']
  %s0 = inlined_call_operand.hbm [shape: f32[16,1,128], index: 0, kind: input, shape index: {}]
  %s1 = inlined_call_operand.hbm [shape: f32[16,1,128], index: 1, kind: input, shape index: {}]
  %s2 = inlined_call_operand.hbm [shape: f32[16,1,128], index: 2, kind: input, shape index: {}]
  %s3 = inlined_call_operand.hbm [shape: f32[1,128], index: 3, kind: input, shape index: {}, may-alias: {3,6}]
  %s4 = inlined_call_operand.vmem [shape: f32[1,8], index: 4, kind: input, shape index: {}]
  %s5 = inlined_call_operand.hbm [shape: f32[16,128], index: 5, kind: output, shape index: {0}]
  %s6 = inlined_call_operand.hbm [shape: f32[1,128], index: 6, kind: output, shape index: {1}, may-alias: {3,6}]
  %7 = xla_tuple %s5, %s6
  %s8 = sld [smem:[#allocation0]]
  $region85: #{tpu_custom_call.1} parent=0
    _
  %s10 = ssub.s32 1, %s8
  %s11 = scalar_select 0, %s10, %s8
  $region1: #{tpu_custom_call.1} parent=0
    #allocation7 [shape = 'u8[8192]{0}', space=vmem, size = 0x2000, scoped, tag = 'input window, operand 0']
    #allocation8 [shape = 's32[2]{0}', space=sflag, size = 0x8, scoped, tag = 'scoped memory for tpu_custom_call.1']
    #allocation9 [shape = 's32[2]{0}', space=sflag, size = 0x8, scoped, tag = 'scoped memory for tpu_custom_call.1']
    #allocation10 [shape = 'u8[8192]{0}', space=vmem, size = 0x2000, scoped, tag = 'input window, operand 1']
    #allocation11 [shape = 's32[2]{0}', space=sflag, size = 0x8, scoped, tag = 'scoped memory for tpu_custom_call.1']
    #allocation12 [shape = 'u8[8192]{0}', space=vmem, size = 0x2000, scoped, tag = 'input window, operand 2']
    #allocation13 [shape = 'u8[512]{0}', space=vmem, size = 0x400, scoped, tag = 'input window, operand 3, single buffered']
    #allocation14 [shape = 's32[1]{0}', space=sflag, size = 0x4, scoped, tag = 'scoped memory for tpu_custom_call.1']
    #allocation15 [shape = 'u8[8192]{0}', space=vmem, size = 0x2000, scoped, tag = 'output window, operand 0']
    #allocation16 [shape = 'u8[512]{0}', space=vmem, size = 0x400, scoped, tag = 'output window, operand 1, single buffered']
    #allocation17 [shape = 's32[1]{0}', space=sflag, size = 0x4, scoped, tag = 'scoped memory for tpu_custom_call.1']
    %12 = vsyncpa [#allocation8], 0
    %s13 = scalar_lea.sflag [#allocation8], 1
    %14 = vsyncpa %s13, 0
    %15 = vsyncpa [#allocation11], 0
    %s16 = scalar_lea.sflag [#allocation11], 1
    %17 = vsyncpa %s16, 0
    %18 = vsyncpa [#allocation14], 0
    %19 = vsyncpa [#allocation9], 0
    %s20 = scalar_lea.sflag [#allocation9], 1
    %21 = vsyncpa %s20, 0
    %22 = vsyncpa [#allocation17], 0
    loop: start=0, step=1, limit=4
    $region2: #{tpu_custom_call.1} parent=1 // loop_pre_header
      _
    $region3: #{tpu_custom_call.1} parent=1 // loop_header
      %s24 = sphi 0, %s28
      %p25 = scmp.ge.s32.totalorder %s24, 4
      %s34 = sphi 0, %s36
      %s37 = sphi 0, %s34
      %s38 = sphi 0, %s37
      %s54 = sphi 0, %s38
      %s60 = sphi 0, %s62
      %s63 = sphi 0, %s60
      %s64 = sphi 0, %s63
      %s80 = sphi 0, %s64
      %s86 = sphi 0, %s88
      %s89 = sphi 0, %s86
      %s90 = sphi 0, %s89
      %s106 = sphi 0, %s90
      %s110 = sphi 0, %s110
      %s112 = sphi 0, %s110
      %s113 = sphi 0, %s112
      %s127 = sphi 0, %s113
      %s131 = sphi 0, %s131
      %s133 = sphi 0, %s131
      %s134 = sphi 0, %s133
      %s148 = sphi 0, %s134
      %s154 = sphi 0, %s156
      %s157 = sphi 0, %s154
      %s158 = sphi 0, %s157
      %s174 = sphi 0, %s158
      %s178 = sphi 0, %s178
      %s180 = sphi 0, %s178
      %s181 = sphi 0, %s180
      %s195 = sphi 0, %s181
    $region4: #{tpu_custom_call.1} parent=1 // loop_header_branch
      %27 = sbr.rel (%p25) target = $region8
    $region5: #{tpu_custom_call.1} parent=1 // loop_body
      %s29 = ssub.s32 %s24, 1
      %s30 = ssub.s32 %s24, 2
      %s31 = sadd.s32 %s24, 1
      %s32 = ssub.s32 %s24, %s31
      %p33 = scmp.eq.s32.totalorder %s32, 0
      %s35 = sadd.s32 %s34, 1
      %s36 = scalar_select %p33, %s34, %s35
      %p39 = pneg %p33
      %p40 = scmp.eq.s32.totalorder %s24, 1
      %p41 = por %p39, %p40
      %p42 = scmp.ne.s32.totalorder %s34, %s37
      %p43 = scmp.eq.s32.totalorder %s24, 0
      %p44 = por %p42, %p43
      %p45 = scmp.ne.s32.totalorder %s34, %s37
      %p46 = scmp.eq.s32.totalorder %s29, 1
      %p47 = por %p45, %p46
      %p48 = scmp.ne.s32.totalorder %s37, %s38
      %p49 = scmp.eq.s32.totalorder %s29, 0
      %p50 = por %p48, %p49
      %p51 = scmp.ne.s32.totalorder %s37, %s38
      %p52 = scmp.eq.s32.totalorder %s30, 1
      %p53 = por %p51, %p52
      %p55 = scmp.ne.s32.totalorder %s38, %s54
      %p56 = scmp.eq.s32.totalorder %s30, 0
      %p57 = por %p55, %p56
      %s58 = ssub.s32 %s24, %s31
      %p59 = scmp.eq.s32.totalorder %s58, 0
      %s61 = sadd.s32 %s60, 1
      %s62 = scalar_select %p59, %s60, %s61
      %p65 = pneg %p59
      %p66 = scmp.eq.s32.totalorder %s24, 1
      %p67 = por %p65, %p66
      %p68 = scmp.ne.s32.totalorder %s60, %s63
      %p69 = scmp.eq.s32.totalorder %s24, 0
      %p70 = por %p68, %p69
      %p71 = scmp.ne.s32.totalorder %s60, %s63
      %p72 = scmp.eq.s32.totalorder %s29, 1
      %p73 = por %p71, %p72
      %p74 = scmp.ne.s32.totalorder %s63, %s64
      %p75 = scmp.eq.s32.totalorder %s29, 0
      %p76 = por %p74, %p75
      %p77 = scmp.ne.s32.totalorder %s63, %s64
      %p78 = scmp.eq.s32.totalorder %s30, 1
      %p79 = por %p77, %p78
      %p81 = scmp.ne.s32.totalorder %s64, %s80
      %p82 = scmp.eq.s32.totalorder %s30, 0
      %p83 = por %p81, %p82
      %s84 = ssub.s32 %s24, %s31
      %p85 = scmp.eq.s32.totalorder %s84, 0
      %s87 = sadd.s32 %s86, 1
      %s88 = scalar_select %p85, %s86, %s87
      %p91 = pneg %p85
      %p92 = scmp.eq.s32.totalorder %s24, 1
      %p93 = por %p91, %p92
      %p94 = scmp.ne.s32.totalorder %s86, %s89
      %p95 = scmp.eq.s32.totalorder %s24, 0
      %p96 = por %p94, %p95
      %p97 = scmp.ne.s32.totalorder %s86, %s89
      %p98 = scmp.eq.s32.totalorder %s29, 1
      %p99 = por %p97, %p98
      %p100 = scmp.ne.s32.totalorder %s89, %s90
      %p101 = scmp.eq.s32.totalorder %s29, 0
      %p102 = por %p100, %p101
      %p103 = scmp.ne.s32.totalorder %s89, %s90
      %p104 = scmp.eq.s32.totalorder %s30, 1
      %p105 = por %p103, %p104
      %p107 = scmp.ne.s32.totalorder %s90, %s106
      %p108 = scmp.eq.s32.totalorder %s30, 0
      %p109 = por %p107, %p108
      %s111 = sadd.s32 %s110, 1
      %p114 = scmp.eq.s32.totalorder %s24, 1
      %p115 = scmp.ne.s32.totalorder %s110, %s112
      %p116 = scmp.eq.s32.totalorder %s24, 0
      %p117 = por %p115, %p116
      %p118 = scmp.ne.s32.totalorder %s110, %s112
      %p119 = scmp.eq.s32.totalorder %s29, 1
      %p120 = por %p118, %p119
      %p121 = scmp.ne.s32.totalorder %s112, %s113
      %p122 = scmp.eq.s32.totalorder %s29, 0
      %p123 = por %p121, %p122
      %p124 = scmp.ne.s32.totalorder %s112, %s113
      %p125 = scmp.eq.s32.totalorder %s30, 1
      %p126 = por %p124, %p125
      %p128 = scmp.ne.s32.totalorder %s113, %s127
      %p129 = scmp.eq.s32.totalorder %s30, 0
      %p130 = por %p128, %p129
      %s132 = sadd.s32 %s131, 1
      %p135 = scmp.eq.s32.totalorder %s24, 1
      %p136 = scmp.ne.s32.totalorder %s131, %s133
      %p137 = scmp.eq.s32.totalorder %s24, 0
      %p138 = por %p136, %p137
      %p139 = scmp.ne.s32.totalorder %s131, %s133
      %p140 = scmp.eq.s32.totalorder %s29, 1
      %p141 = por %p139, %p140
      %p142 = scmp.ne.s32.totalorder %s133, %s134
      %p143 = scmp.eq.s32.totalorder %s29, 0
      %p144 = por %p142, %p143
      %p145 = scmp.ne.s32.totalorder %s133, %s134
      %p146 = scmp.eq.s32.totalorder %s30, 1
      %p147 = por %p145, %p146
      %p149 = scmp.ne.s32.totalorder %s134, %s148
      %p150 = scmp.eq.s32.totalorder %s30, 0
      %p151 = por %p149, %p150
      %s152 = ssub.s32 %s24, %s31
      %p153 = scmp.eq.s32.totalorder %s152, 0
      %s155 = sadd.s32 %s154, 1
      %s156 = scalar_select %p153, %s154, %s155
      %p159 = pneg %p153
      %p160 = scmp.eq.s32.totalorder %s24, 1
      %p161 = por %p159, %p160
      %p162 = scmp.ne.s32.totalorder %s154, %s157
      %p163 = scmp.eq.s32.totalorder %s24, 0
      %p164 = por %p162, %p163
      %p165 = scmp.ne.s32.totalorder %s154, %s157
      %p166 = scmp.eq.s32.totalorder %s29, 1
      %p167 = por %p165, %p166
      %p168 = scmp.ne.s32.totalorder %s157, %s158
      %p169 = scmp.eq.s32.totalorder %s29, 0
      %p170 = por %p168, %p169
      %p171 = scmp.ne.s32.totalorder %s157, %s158
      %p172 = scmp.eq.s32.totalorder %s30, 1
      %p173 = por %p171, %p172
      %p175 = scmp.ne.s32.totalorder %s158, %s174
      %p176 = scmp.eq.s32.totalorder %s30, 0
      %p177 = por %p175, %p176
      %s179 = sadd.s32 %s178, 1
      %p182 = scmp.eq.s32.totalorder %s24, 1
      %p183 = scmp.ne.s32.totalorder %s178, %s180
      %p184 = scmp.eq.s32.totalorder %s24, 0
      %p185 = por %p183, %p184
      %p186 = scmp.ne.s32.totalorder %s178, %s180
      %p187 = scmp.eq.s32.totalorder %s29, 1
      %p188 = por %p186, %p187
      %p189 = scmp.ne.s32.totalorder %s180, %s181
      %p190 = scmp.eq.s32.totalorder %s29, 0
      %p191 = por %p189, %p190
      %p192 = scmp.ne.s32.totalorder %s180, %s181
      %p193 = scmp.eq.s32.totalorder %s30, 1
      %p194 = por %p192, %p193
      %p196 = scmp.ne.s32.totalorder %s181, %s195
      %p197 = scmp.eq.s32.totalorder %s30, 0
      %p198 = por %p196, %p197
      %p199 = scmp.le.s32.totalorder 1, %s24
      %p200 = scmp.lt.s32.totalorder %s24, 3
      %p201 = pnand %p199, %p200
      %p202 = pneg %p201
      // Predicated region
      $region9: #{tpu_custom_call.1} parent=5 // pred_check
        _
      $region10: #{tpu_custom_call.1} parent=5 // pred_check_branch
        %204 = sbr.rel (%p201) target = $region12
      $region11: #{tpu_custom_call.1} parent=5 // pred_region
        %s205 = ssub.s32 %s24, 1
        // Predicated region
        $region13: #{tpu_custom_call.1} parent=11 // pred_check
          %p206 = pneg %p123
        $region14: #{tpu_custom_call.1} parent=11 // pred_check_branch
          %208 = sbr.rel (%p206) target = $region16
        $region15: #{tpu_custom_call.1} parent=11 // pred_region
          %s210 = ssub.s32 16, 16
          %211 = vsyncadd [#allocation14], %s210
          %s213 = sshll.u32 [#allocation13], 4
          %s214 = int_to_ptr.vmem [resolvable:$true] %s213
          %216 = dma.hbm_to_vmem [thread:$0]  %s3, 16, %s214, [#allocation14]
        $region16: #{tpu_custom_call.1} parent=11 // pred_fallthru
          _
        // Predicated region
        $region17: #{tpu_custom_call.1} parent=11 // pred_check
          %p217 = pneg %p144
        $region18: #{tpu_custom_call.1} parent=11 // pred_check_branch
          %219 = sbr.rel (%p217) target = $region20
        $region19: #{tpu_custom_call.1} parent=11 // pred_region
          _
        $region20: #{tpu_custom_call.1} parent=11 // pred_fallthru
          _
      $region12: #{tpu_custom_call.1} parent=5 // pred_fallthru
        _
      %p220 = scmp.lt.s32.totalorder %s24, 2
      // Predicated region
      $region21: #{tpu_custom_call.1} parent=5 // pred_check
        %p221 = pneg %p220
      $region22: #{tpu_custom_call.1} parent=5 // pred_check_branch
        %223 = sbr.rel (%p221) target = $region24
      $region23: #{tpu_custom_call.1} parent=5 // pred_region
        // Predicated region
        $region25: #{tpu_custom_call.1} parent=23 // pred_check
          %p224 = pneg %p44
        $region26: #{tpu_custom_call.1} parent=23 // pred_check_branch
          %226 = sbr.rel (%p224) target = $region28
        $region27: #{tpu_custom_call.1} parent=23 // pred_region
          %s227 = sand.u32 %s34, 1
          %s228 = scalar_lea.sflag [#allocation8], %s227
          %s229 = sand.u32 %s34, 1
          %s230 = smul.addr %s229, 8
          %s231 = scalar_lea.vmem [#allocation7], %s230
          %s232 = smul.u32 8, %s24
          %s234 = ssub.s32 128, 128
          %235 = vsyncadd %s228, %s234
          %s236 = smul.addr %s232, 16
          %s237 = scalar_lea.hbm %s0, %s236
          %s238 = sshll.u32 %s231, 4
          %s239 = int_to_ptr.vmem [resolvable:$true] %s238
          %244 = dma.hbm_to_vmem [thread:$0]  %s237, 128, %s239, %s228, 16, 16, 1
        $region28: #{tpu_custom_call.1} parent=23 // pred_fallthru
          _
        // Predicated region
        $region29: #{tpu_custom_call.1} parent=23 // pred_check
          %p245 = pneg %p70
        $region30: #{tpu_custom_call.1} parent=23 // pred_check_branch
          %247 = sbr.rel (%p245) target = $region32
        $region31: #{tpu_custom_call.1} parent=23 // pred_region
          %s248 = sand.u32 %s24, 1
          %s249 = scalar_lea.sflag [#allocation11], %s248
          %s250 = sand.u32 %s60, 1
          %s251 = smul.addr %s250, 8
          %s252 = scalar_lea.vmem [#allocation10], %s251
          %s253 = smul.u32 8, %s24
          %s255 = ssub.s32 128, 128
          %256 = vsyncadd %s249, %s255
          %s257 = smul.addr %s253, 16
          %s258 = scalar_lea.hbm %s1, %s257
          %s259 = sshll.u32 %s252, 4
          %s260 = int_to_ptr.vmem [resolvable:$true] %s259
          %265 = dma.hbm_to_vmem [thread:$0]  %s258, 128, %s260, %s249, 16, 16, 1
        $region32: #{tpu_custom_call.1} parent=23 // pred_fallthru
          _
        // Predicated region
        $region33: #{tpu_custom_call.1} parent=23 // pred_check
          %p266 = pneg %p96
        $region34: #{tpu_custom_call.1} parent=23 // pred_check_branch
          %268 = sbr.rel (%p266) target = $region36
        $region35: #{tpu_custom_call.1} parent=23 // pred_region
          %s269 = sand.u32 %s24, 1
          %s270 = scalar_lea.sflag [#allocation11], %s269
          %s271 = sand.u32 %s86, 1
          %s272 = smul.addr %s271, 8
          %s273 = scalar_lea.vmem [#allocation12], %s272
          %s274 = smul.u32 8, %s24
          %s276 = ssub.s32 128, 128
          %277 = vsyncadd %s270, %s276
          %s278 = smul.addr %s274, 16
          %s279 = scalar_lea.hbm %s2, %s278
          %s280 = sshll.u32 %s273, 4
          %s281 = int_to_ptr.vmem [resolvable:$true] %s280
          %286 = dma.hbm_to_vmem [thread:$0]  %s279, 128, %s281, %s270, 16, 16, 1
        $region36: #{tpu_custom_call.1} parent=23 // pred_fallthru
          _
      $region24: #{tpu_custom_call.1} parent=5 // pred_fallthru
        _
      %p287 = scmp.le.s32.totalorder 1, %s24
      %p288 = scmp.lt.s32.totalorder %s24, 3
      %p289 = pnand %p287, %p288
      %p290 = pneg %p289
      // Predicated region
      $region37: #{tpu_custom_call.1} parent=5 // pred_check
        _
      $region38: #{tpu_custom_call.1} parent=5 // pred_check_branch
        %292 = sbr.rel (%p289) target = $region40
      $region39: #{tpu_custom_call.1} parent=5 // pred_region
        %s293 = ssub.s32 %s24, 1
        %s294 = sand.u32 %s37, 1
        %s295 = scalar_lea.sflag [#allocation8], %s294
        %s296 = sand.u32 %s37, 1
        %s297 = smul.addr %s296, 8
        %s298 = scalar_lea.vmem [#allocation7], %s297
        // Predicated region
        $region41: #{tpu_custom_call.1} parent=39 // pred_check
          %p299 = pneg %p50
        $region42: #{tpu_custom_call.1} parent=39 // pred_check_branch
          %301 = sbr.rel (%p299) target = $region44
        $region43: #{tpu_custom_call.1} parent=39 // pred_region
          %302 = dma.done %s295, 128
        $region44: #{tpu_custom_call.1} parent=39 // pred_fallthru
          _
        %s303 = sand.u32 %s29, 1
        %s304 = scalar_lea.sflag [#allocation11], %s303
        %s305 = sand.u32 %s63, 1
        %s306 = smul.addr %s305, 8
        %s307 = scalar_lea.vmem [#allocation10], %s306
        // Predicated region
        $region45: #{tpu_custom_call.1} parent=39 // pred_check
          %p308 = pneg %p76
        $region46: #{tpu_custom_call.1} parent=39 // pred_check_branch
          %310 = sbr.rel (%p308) target = $region48
        $region47: #{tpu_custom_call.1} parent=39 // pred_region
          %311 = dma.done %s304, 128
        $region48: #{tpu_custom_call.1} parent=39 // pred_fallthru
          _
        %s312 = sand.u32 %s29, 1
        %s313 = scalar_lea.sflag [#allocation11], %s312
        %s314 = sand.u32 %s89, 1
        %s315 = smul.addr %s314, 8
        %s316 = scalar_lea.vmem [#allocation12], %s315
        // Predicated region
        $region49: #{tpu_custom_call.1} parent=39 // pred_check
          %p317 = pneg %p102
        $region50: #{tpu_custom_call.1} parent=39 // pred_check_branch
          %319 = sbr.rel (%p317) target = $region52
        $region51: #{tpu_custom_call.1} parent=39 // pred_region
          %320 = dma.done %s313, 128
        $region52: #{tpu_custom_call.1} parent=39 // pred_fallthru
          _
        // Predicated region
        $region53: #{tpu_custom_call.1} parent=39 // pred_check
          %p321 = pneg %p123
        $region54: #{tpu_custom_call.1} parent=39 // pred_check_branch
          %323 = sbr.rel (%p321) target = $region56
        $region55: #{tpu_custom_call.1} parent=39 // pred_region
          %324 = dma.done [#allocation14], 16
        $region56: #{tpu_custom_call.1} parent=39 // pred_fallthru
          _
        %s325 = sand.u32 %s37, 1
        %s326 = scalar_lea.sflag [#allocation8], %s325
        %s327 = sand.u32 %s37, 1
        %s328 = smul.addr %s327, 8
        %s329 = scalar_lea.vmem [#allocation7], %s328
        %p330 = pneg %p50
        %p331 = pneg %p47
        %s332 = sand.u32 %s29, 1
        %s333 = scalar_lea.sflag [#allocation11], %s332
        %s334 = sand.u32 %s63, 1
        %s335 = smul.addr %s334, 8
        %s336 = scalar_lea.vmem [#allocation10], %s335
        %p337 = pneg %p76
        %p338 = pneg %p73
        %s339 = sand.u32 %s29, 1
        %s340 = scalar_lea.sflag [#allocation11], %s339
        %s341 = sand.u32 %s89, 1
        %s342 = smul.addr %s341, 8
        %s343 = scalar_lea.vmem [#allocation12], %s342
        %p344 = pneg %p102
        %p345 = pneg %p99
        %p346 = pneg %p123
        %p347 = pneg %p120
        %p348 = pneg %p144
        %p349 = pneg %p141
        %p350 = pneg %p170
        %p351 = pneg %p167
        %s352 = sand.u32 %s157, 1
        %s353 = scalar_lea.sflag [#allocation9], %s352
        %s354 = sand.u32 %s157, 1
        %s355 = smul.addr %s354, 8
        %s356 = scalar_lea.vmem [#allocation15], %s355
        %p357 = pneg %p191
        %p358 = pneg %p188
        %s359 = smul.u32 8, %s29
        %s360 = smul.u32 8, %s29
        %s361 = smul.u32 8, %s29
        %p362 = scmp.eq.s32.totalorder %s29, 0
        // Predicated region
        $region57: #{tpu_custom_call.1} parent=39 // pred_check
          %p363 = pneg %p362
        $region58: #{tpu_custom_call.1} parent=39 // pred_check_branch
          %365 = sbr.rel (%p363) target = $region60
        $region59: #{tpu_custom_call.1} parent=39 // pred_region
          %v366 = vld [vmem:[#allocation13] sm:$0x1]
          %367 = vst [vmem:[#allocation2] sm:$0x1] %v366
          %v368 = vld [vmem:[%s4] sm:$0x1]
          %vm369 = vcmask 0
          %370 = vst.msk [vmem:[#allocation3] sm:$0x1] %vm369, %v368
          %v371 = vld [vmem:[%s4] sm:$0x1]
          %v373 = vlaneseq
          %v374 = vshrl.u32 %v373, 7
          %v375 = vsub.s32 0, %v374
          %v376 = vrot.slane %v371, %v375
          %377 = vrot.lane.b32.xlu0 %v376, 127
          %v378 = vpop.permute.xlu0 %377
          %380 = vst.msk [vmem:[#allocation4] sm:$0x1] %vm369, %v378
          %v381 = vld [vmem:[%s4] sm:$0x1]
          %v383 = vlaneseq
          %v384 = vshrl.u32 %v383, 7
          %v385 = vsub.s32 0, %v384
          %v386 = vrot.slane %v381, %v385
          %387 = vrot.lane.b32.xlu0 %v386, 126
          %v388 = vpop.permute.xlu0 %387
          %390 = vst.msk [vmem:[#allocation5] sm:$0x1] %vm369, %v388
          %v391 = vld [vmem:[%s4] sm:$0x1]
          %v393 = vlaneseq
          %v394 = vshrl.u32 %v393, 7
          %v395 = vsub.s32 0, %v394
          %v396 = vrot.slane %v391, %v395
          %397 = vrot.lane.b32.xlu0 %v396, 125
          %v398 = vpop.permute.xlu0 %397
          %400 = vst.msk [vmem:[#allocation6] sm:$0x1] %vm369, %v398
        $region60: #{tpu_custom_call.1} parent=39 // pred_fallthru
          _
        %v401 = vld [vmem:[%s4] sm:$0x1]
        %v402 = vlaneseq
        %v403 = vand.u32 %v402, 127
        %s404 = smul.u32 %s29, 8
        %p405 = scmp.lt.s32.totalorder %s404, 13
        %v406 = vld [vmem:[#allocation3] sm:$0x1]
        %v407 = vld [vmem:[#allocation4] sm:$0x1]
        %v408 = vld [vmem:[#allocation5] sm:$0x1]
        %v409 = vld [vmem:[#allocation6] sm:$0x1]
        %v410 = vld [vmem:[#allocation2] sm:$0x1]
        %v411 = vld [vmem:[%s298] sm:$0x1]
        %v412 = vld [vmem:[%s307] sm:$0x1]
        %v413 = vld [vmem:[%s316] sm:$0x1]
        %v414 = vmul.f32 %v406, 0.9
        %v415 = vadd.f32 %v414, %v407
        %v416 = vmul.f32 %v408, %v406
        %v417 = vsub.f32 %v415, %v416
        %v418 = vmul.f32 %v411, %v410
        %vm419 = vcmask 1040384
        %v420 = vsel %vm419, %v418, 0.0
        %421 = vadd.xlane.f32.xlu0 %v420
        %v422 = vpop.xlane.xlu0 %421
        %v423 = vadd.f32 %v422, 0.0
        %v424 = vmul.f32 %v407, 0.85
        %v425 = vadd.f32 %v424, %v423
        %427 = vrot.lane.b32.xlu0 %v401, 124
        %v428 = vpop.permute.xlu0 %427
        %v430 = vadd.f32 %v425, %v428
        %vm431 = vcmp.gt.f32.partialorder %v417, 1.0
        %v432 = vsel %vm431, 1, 0
        %v433 = vcvt.s32.f32 %v432
        %vm434 = vcmp.ne.f32.partialorder %v433, 0.0
        %vm435 = vcmp.ne.f32.partialorder %v412, 0.0
        %v436 = vsel %vm434, 1, 0
        %437 = vset.pattern.permute.xlu0 0
        %438 = vperm.xlu0 %437, %v436
        %v439 = vpop.permute.xlu0 %438
        %v440 = vlaneseq
        %v441 = vshrl.u32 %v440, 7
        %v442 = vsub.s32 0, %v441
        %v443 = vrot.slane %v439, %v442
        %vm444 = vcmp.eq.s32.totalorder %v443, 1
        %vm445 = vmand %vm435, %vm444
        %v446 = vsub.f32 0.0, %v412
        %v447 = vrcp.pop 16.8
        %v448 = vmul.f32 %v446, %v447
        %v449 = vmul.f32 %v448, 1.442695
        %v450 = vpow.pop %v449
        %v451 = vmul.f32 %v450, 0.03125
        %v452 = vsel %vm445, %v451, 0.0
        %vm453 = vcmp.ne.f32.partialorder %v413, 0.0
        %vm454 = vcmp.eq.f32.partialorder %v412, 0.0
        %vm455 = vmand %vm453, %vm454
        %vm456 = vmand %vm444, %vm455
        %v457 = vsub.f32 0.0, %v413
        %v458 = vrcp.pop 33.7
        %v459 = vmul.f32 %v457, %v458
        %v460 = vmul.f32 %v459, 1.442695
        %v461 = vpow.pop %v460
        %v462 = vmul.f32 %v461, 0.0265625
        %v463 = vsel %vm456, %v462, 0.0
        %v464 = vadd.f32 %v410, %v452
        %v465 = vsub.f32 %v464, %v463
        %v466 = vmax.f32 %v465, 0.0
        %v467 = vmin.f32 %v466, 1.0
        %s468 = scalar_select %p405, 1, 0
        %v469 = vstv %s468
        %vm470 = vcmp.eq.s32.totalorder %v469, 1
        %v471 = vsel %vm470, %v417, %v406
        %vm472 = vcmask 0
        %473 = vst.msk [vmem:[#allocation3] sm:$0x1] %vm472, %v471
        %v474 = vsel %vm470, %v430, %v407
        %475 = vst.msk [vmem:[#allocation4] sm:$0x1] %vm472, %v474
        %v476 = vsel %vm470, %v433, %v408
        %477 = vst.msk [vmem:[#allocation5] sm:$0x1] %vm472, %v476
        %478 = vst.msk [vmem:[#allocation6] sm:$0x1] %vm472, %v409
        %v479 = vsel %vm470, %v467, %v410
        %480 = vst [vmem:[#allocation2] sm:$0x1] %v479
        %vm481 = vcmp.eq.s32.totalorder %v403, 0
        %483 = vset.pattern.permute.xlu0 0
        %484 = vperm.xlu0 %483, %v417
        %v485 = vpop.permute.xlu0 %484
        %v487 = vlaneseq
        %v488 = vshrl.u32 %v487, 7
        %v489 = vsub.s32 0, %v488
        %v490 = vrot.slane %v485, %v489
        %v491 = vsel %vm481, %v490, 0.0
        %vm492 = vcmp.eq.s32.totalorder %v403, 1
        %494 = vset.pattern.permute.xlu0 0
        %495 = vperm.xlu0 %494, %v430
        %v496 = vpop.permute.xlu0 %495
        %v498 = vlaneseq
        %v499 = vshrl.u32 %v498, 7
        %v500 = vsub.s32 0, %v499
        %v501 = vrot.slane %v496, %v500
        %v502 = vsel %vm492, %v501, 0.0
        %v503 = vadd.f32 %v491, %v502
        %vm504 = vcmp.eq.s32.totalorder %v403, 2
        %506 = vset.pattern.permute.xlu0 0
        %507 = vperm.xlu0 %506, %v433
        %v508 = vpop.permute.xlu0 %507
        %v510 = vlaneseq
        %v511 = vshrl.u32 %v510, 7
        %v512 = vsub.s32 0, %v511
        %v513 = vrot.slane %v508, %v512
        %v514 = vsel %vm504, %v513, 0.0
        %v515 = vadd.f32 %v503, %v514
        %vm516 = vcmp.eq.s32.totalorder %v403, 3
        %518 = vset.pattern.permute.xlu0 0
        %519 = vperm.xlu0 %518, %v409
        %v520 = vpop.permute.xlu0 %519
        %v522 = vlaneseq
        %v523 = vshrl.u32 %v522, 7
        %v524 = vsub.s32 0, %v523
        %v525 = vrot.slane %v520, %v524
        %v526 = vsel %vm516, %v525, 0.0
        %v527 = vadd.f32 %v515, %v526
        %528 = vst [vmem:[%s356] sm:$0x1] %v527
        %s529 = sadd.s32 %s404, 1
        %p530 = scmp.lt.s32.totalorder %s529, 13
        %v531 = vld [vmem:[#allocation3] sm:$0x1]
        %v532 = vld [vmem:[#allocation4] sm:$0x1]
        %v533 = vld [vmem:[#allocation5] sm:$0x1]
        %v534 = vld [vmem:[#allocation6] sm:$0x1]
        %v535 = vld [vmem:[#allocation2] sm:$0x1]
        %s536 = scalar_lea.vmem %s298, 1 [#allocation7]
        %v537 = vld [vmem:[%s536] sm:$0x1]
        %s538 = scalar_lea.vmem %s307, 1 [#allocation10]
        %v539 = vld [vmem:[%s538] sm:$0x1]
        %s540 = scalar_lea.vmem %s316, 1 [#allocation12]
        %v541 = vld [vmem:[%s540] sm:$0x1]
        %v542 = vmul.f32 %v531, 0.9
        %v543 = vadd.f32 %v542, %v532
        %v544 = vmul.f32 %v533, %v531
        %v545 = vsub.f32 %v543, %v544
        %v546 = vmul.f32 %v537, %v535
        %v547 = vsel %vm419, %v546, 0.0
        %548 = vadd.xlane.f32.xlu0 %v547
        %v549 = vpop.xlane.xlu0 %548
        %v550 = vadd.f32 %v549, 0.0
        %v551 = vmul.f32 %v532, 0.85
        %v552 = vadd.f32 %v551, %v550
        %v553 = vadd.f32 %v552, %v428
        %vm554 = vcmp.gt.f32.partialorder %v545, 1.0
        %v555 = vsel %vm554, 1, 0
        %v556 = vcvt.s32.f32 %v555
        %vm557 = vcmp.ne.f32.partialorder %v556, 0.0
        %vm558 = vcmp.ne.f32.partialorder %v539, 0.0
        %v559 = vsel %vm557, 1, 0
        %560 = vset.pattern.permute.xlu0 0
        %561 = vperm.xlu0 %560, %v559
        %v562 = vpop.permute.xlu0 %561
        %v563 = vlaneseq
        %v564 = vshrl.u32 %v563, 7
        %v565 = vsub.s32 0, %v564
        %v566 = vrot.slane %v562, %v565
        %vm567 = vcmp.eq.s32.totalorder %v566, 1
        %vm568 = vmand %vm558, %vm567
        %v569 = vsub.f32 0.0, %v539
        %v570 = vmul.f32 %v569, %v447
        %v571 = vmul.f32 %v570, 1.442695
        %v572 = vpow.pop %v571
        %v573 = vmul.f32 %v572, 0.03125
        %v574 = vsel %vm568, %v573, 0.0
        %vm575 = vcmp.ne.f32.partialorder %v541, 0.0
        %vm576 = vcmp.eq.f32.partialorder %v539, 0.0
        %vm577 = vmand %vm575, %vm576
        %vm578 = vmand %vm567, %vm577
        %v579 = vsub.f32 0.0, %v541
        %v580 = vmul.f32 %v579, %v458
        %v581 = vmul.f32 %v580, 1.442695
        %v582 = vpow.pop %v581
        %v583 = vmul.f32 %v582, 0.0265625
        %v584 = vsel %vm578, %v583, 0.0
        %v585 = vadd.f32 %v535, %v574
        %v586 = vsub.f32 %v585, %v584
        %v587 = vmax.f32 %v586, 0.0
        %v588 = vmin.f32 %v587, 1.0
        %s589 = scalar_select %p530, 1, 0
        %v590 = vstv %s589
        %vm591 = vcmp.eq.s32.totalorder %v590, 1
        %v592 = vsel %vm591, %v545, %v531
        %593 = vst.msk [vmem:[#allocation3] sm:$0x1] %vm472, %v592
        %v594 = vsel %vm591, %v553, %v532
        %595 = vst.msk [vmem:[#allocation4] sm:$0x1] %vm472, %v594
        %v596 = vsel %vm591, %v556, %v533
        %597 = vst.msk [vmem:[#allocation5] sm:$0x1] %vm472, %v596
        %598 = vst.msk [vmem:[#allocation6] sm:$0x1] %vm472, %v534
        %v599 = vsel %vm591, %v588, %v535
        %600 = vst [vmem:[#allocation2] sm:$0x1] %v599
        %602 = vset.pattern.permute.xlu0 0
        %603 = vperm.xlu0 %602, %v545
        %v604 = vpop.permute.xlu0 %603
        %v606 = vlaneseq
        %v607 = vshrl.u32 %v606, 7
        %v608 = vsub.s32 0, %v607
        %v609 = vrot.slane %v604, %v608
        %v610 = vsel %vm481, %v609, 0.0
        %612 = vset.pattern.permute.xlu0 0
        %613 = vperm.xlu0 %612, %v553
        %v614 = vpop.permute.xlu0 %613
        %v616 = vlaneseq
        %v617 = vshrl.u32 %v616, 7
        %v618 = vsub.s32 0, %v617
        %v619 = vrot.slane %v614, %v618
        %v620 = vsel %vm492, %v619, 0.0
        %v621 = vadd.f32 %v610, %v620
        %623 = vset.pattern.permute.xlu0 0
        %624 = vperm.xlu0 %623, %v556
        %v625 = vpop.permute.xlu0 %624
        %v627 = vlaneseq
        %v628 = vshrl.u32 %v627, 7
        %v629 = vsub.s32 0, %v628
        %v630 = vrot.slane %v625, %v629
        %v631 = vsel %vm504, %v630, 0.0
        %v632 = vadd.f32 %v621, %v631
        %634 = vset.pattern.permute.xlu0 0
        %635 = vperm.xlu0 %634, %v534
        %v636 = vpop.permute.xlu0 %635
        %v638 = vlaneseq
        %v639 = vshrl.u32 %v638, 7
        %v640 = vsub.s32 0, %v639
        %v641 = vrot.slane %v636, %v640
        %v642 = vsel %vm516, %v641, 0.0
        %v643 = vadd.f32 %v632, %v642
        %644 = vst [vmem:[%s356 + $0x1] sm:$0x1] %v643
        %s645 = sadd.s32 %s404, 2
        %p646 = scmp.lt.s32.totalorder %s645, 13
        %v647 = vld [vmem:[#allocation3] sm:$0x1]
        %v648 = vld [vmem:[#allocation4] sm:$0x1]
        %v649 = vld [vmem:[#allocation5] sm:$0x1]
        %v650 = vld [vmem:[#allocation6] sm:$0x1]
        %v651 = vld [vmem:[#allocation2] sm:$0x1]
        %s652 = scalar_lea.vmem %s298, 2 [#allocation7]
        %v653 = vld [vmem:[%s652] sm:$0x1]
        %s654 = scalar_lea.vmem %s307, 2 [#allocation10]
        %v655 = vld [vmem:[%s654] sm:$0x1]
        %s656 = scalar_lea.vmem %s316, 2 [#allocation12]
        %v657 = vld [vmem:[%s656] sm:$0x1]
        %v658 = vmul.f32 %v647, 0.9
        %v659 = vadd.f32 %v658, %v648
        %v660 = vmul.f32 %v649, %v647
        %v661 = vsub.f32 %v659, %v660
        %v662 = vmul.f32 %v653, %v651
        %v663 = vsel %vm419, %v662, 0.0
        %664 = vadd.xlane.f32.xlu0 %v663
        %v665 = vpop.xlane.xlu0 %664
        %v666 = vadd.f32 %v665, 0.0
        %v667 = vmul.f32 %v648, 0.85
        %v668 = vadd.f32 %v667, %v666
        %v669 = vadd.f32 %v668, %v428
        %vm670 = vcmp.gt.f32.partialorder %v661, 1.0
        %v671 = vsel %vm670, 1, 0
        %v672 = vcvt.s32.f32 %v671
        %vm673 = vcmp.ne.f32.partialorder %v672, 0.0
        %vm674 = vcmp.ne.f32.partialorder %v655, 0.0
        %v675 = vsel %vm673, 1, 0
        %676 = vset.pattern.permute.xlu0 0
        %677 = vperm.xlu0 %676, %v675
        %v678 = vpop.permute.xlu0 %677
        %v679 = vlaneseq
        %v680 = vshrl.u32 %v679, 7
        %v681 = vsub.s32 0, %v680
        %v682 = vrot.slane %v678, %v681
        %vm683 = vcmp.eq.s32.totalorder %v682, 1
        %vm684 = vmand %vm674, %vm683
        %v685 = vsub.f32 0.0, %v655
        %v686 = vmul.f32 %v685, %v447
        %v687 = vmul.f32 %v686, 1.442695
        %v688 = vpow.pop %v687
        %v689 = vmul.f32 %v688, 0.03125
        %v690 = vsel %vm684, %v689, 0.0
        %vm691 = vcmp.ne.f32.partialorder %v657, 0.0
        %vm692 = vcmp.eq.f32.partialorder %v655, 0.0
        %vm693 = vmand %vm691, %vm692
        %vm694 = vmand %vm683, %vm693
        %v695 = vsub.f32 0.0, %v657
        %v696 = vmul.f32 %v695, %v458
        %v697 = vmul.f32 %v696, 1.442695
        %v698 = vpow.pop %v697
        %v699 = vmul.f32 %v698, 0.0265625
        %v700 = vsel %vm694, %v699, 0.0
        %v701 = vadd.f32 %v651, %v690
        %v702 = vsub.f32 %v701, %v700
        %v703 = vmax.f32 %v702, 0.0
        %v704 = vmin.f32 %v703, 1.0
        %s705 = scalar_select %p646, 1, 0
        %v706 = vstv %s705
        %vm707 = vcmp.eq.s32.totalorder %v706, 1
        %v708 = vsel %vm707, %v661, %v647
        %709 = vst.msk [vmem:[#allocation3] sm:$0x1] %vm472, %v708
        %v710 = vsel %vm707, %v669, %v648
        %711 = vst.msk [vmem:[#allocation4] sm:$0x1] %vm472, %v710
        %v712 = vsel %vm707, %v672, %v649
        %713 = vst.msk [vmem:[#allocation5] sm:$0x1] %vm472, %v712
        %714 = vst.msk [vmem:[#allocation6] sm:$0x1] %vm472, %v650
        %v715 = vsel %vm707, %v704, %v651
        %716 = vst [vmem:[#allocation2] sm:$0x1] %v715
        %718 = vset.pattern.permute.xlu0 0
        %719 = vperm.xlu0 %718, %v661
        %v720 = vpop.permute.xlu0 %719
        %v722 = vlaneseq
        %v723 = vshrl.u32 %v722, 7
        %v724 = vsub.s32 0, %v723
        %v725 = vrot.slane %v720, %v724
        %v726 = vsel %vm481, %v725, 0.0
        %728 = vset.pattern.permute.xlu0 0
        %729 = vperm.xlu0 %728, %v669
        %v730 = vpop.permute.xlu0 %729
        %v732 = vlaneseq
        %v733 = vshrl.u32 %v732, 7
        %v734 = vsub.s32 0, %v733
        %v735 = vrot.slane %v730, %v734
        %v736 = vsel %vm492, %v735, 0.0
        %v737 = vadd.f32 %v726, %v736
        %739 = vset.pattern.permute.xlu0 0
        %740 = vperm.xlu0 %739, %v672
        %v741 = vpop.permute.xlu0 %740
        %v743 = vlaneseq
        %v744 = vshrl.u32 %v743, 7
        %v745 = vsub.s32 0, %v744
        %v746 = vrot.slane %v741, %v745
        %v747 = vsel %vm504, %v746, 0.0
        %v748 = vadd.f32 %v737, %v747
        %750 = vset.pattern.permute.xlu0 0
        %751 = vperm.xlu0 %750, %v650
        %v752 = vpop.permute.xlu0 %751
        %v754 = vlaneseq
        %v755 = vshrl.u32 %v754, 7
        %v756 = vsub.s32 0, %v755
        %v757 = vrot.slane %v752, %v756
        %v758 = vsel %vm516, %v757, 0.0
        %v759 = vadd.f32 %v748, %v758
        %760 = vst [vmem:[%s356 + $0x2] sm:$0x1] %v759
        %s761 = sadd.s32 %s404, 3
        %p762 = scmp.lt.s32.totalorder %s761, 13
        %v763 = vld [vmem:[#allocation3] sm:$0x1]
        %v764 = vld [vmem:[#allocation4] sm:$0x1]
        %v765 = vld [vmem:[#allocation5] sm:$0x1]
        %v766 = vld [vmem:[#allocation6] sm:$0x1]
        %v767 = vld [vmem:[#allocation2] sm:$0x1]
        %s768 = scalar_lea.vmem %s298, 3 [#allocation7]
        %v769 = vld [vmem:[%s768] sm:$0x1]
        %s770 = scalar_lea.vmem %s307, 3 [#allocation10]
        %v771 = vld [vmem:[%s770] sm:$0x1]
        %s772 = scalar_lea.vmem %s316, 3 [#allocation12]
        %v773 = vld [vmem:[%s772] sm:$0x1]
        %v774 = vmul.f32 %v763, 0.9
        %v775 = vadd.f32 %v774, %v764
        %v776 = vmul.f32 %v765, %v763
        %v777 = vsub.f32 %v775, %v776
        %v778 = vmul.f32 %v769, %v767
        %v779 = vsel %vm419, %v778, 0.0
        %780 = vadd.xlane.f32.xlu0 %v779
        %v781 = vpop.xlane.xlu0 %780
        %v782 = vadd.f32 %v781, 0.0
        %v783 = vmul.f32 %v764, 0.85
        %v784 = vadd.f32 %v783, %v782
        %v785 = vadd.f32 %v784, %v428
        %vm786 = vcmp.gt.f32.partialorder %v777, 1.0
        %v787 = vsel %vm786, 1, 0
        %v788 = vcvt.s32.f32 %v787
        %vm789 = vcmp.ne.f32.partialorder %v788, 0.0
        %vm790 = vcmp.ne.f32.partialorder %v771, 0.0
        %v791 = vsel %vm789, 1, 0
        %792 = vset.pattern.permute.xlu0 0
        %793 = vperm.xlu0 %792, %v791
        %v794 = vpop.permute.xlu0 %793
        %v795 = vlaneseq
        %v796 = vshrl.u32 %v795, 7
        %v797 = vsub.s32 0, %v796
        %v798 = vrot.slane %v794, %v797
        %vm799 = vcmp.eq.s32.totalorder %v798, 1
        %vm800 = vmand %vm790, %vm799
        %v801 = vsub.f32 0.0, %v771
        %v802 = vmul.f32 %v801, %v447
        %v803 = vmul.f32 %v802, 1.442695
        %v804 = vpow.pop %v803
        %v805 = vmul.f32 %v804, 0.03125
        %v806 = vsel %vm800, %v805, 0.0
        %vm807 = vcmp.ne.f32.partialorder %v773, 0.0
        %vm808 = vcmp.eq.f32.partialorder %v771, 0.0
        %vm809 = vmand %vm807, %vm808
        %vm810 = vmand %vm799, %vm809
        %v811 = vsub.f32 0.0, %v773
        %v812 = vmul.f32 %v811, %v458
        %v813 = vmul.f32 %v812, 1.442695
        %v814 = vpow.pop %v813
        %v815 = vmul.f32 %v814, 0.0265625
        %v816 = vsel %vm810, %v815, 0.0
        %v817 = vadd.f32 %v767, %v806
        %v818 = vsub.f32 %v817, %v816
        %v819 = vmax.f32 %v818, 0.0
        %v820 = vmin.f32 %v819, 1.0
        %s821 = scalar_select %p762, 1, 0
        %v822 = vstv %s821
        %vm823 = vcmp.eq.s32.totalorder %v822, 1
        %v824 = vsel %vm823, %v777, %v763
        %825 = vst.msk [vmem:[#allocation3] sm:$0x1] %vm472, %v824
        %v826 = vsel %vm823, %v785, %v764
        %827 = vst.msk [vmem:[#allocation4] sm:$0x1] %vm472, %v826
        %v828 = vsel %vm823, %v788, %v765
        %829 = vst.msk [vmem:[#allocation5] sm:$0x1] %vm472, %v828
        %830 = vst.msk [vmem:[#allocation6] sm:$0x1] %vm472, %v766
        %v831 = vsel %vm823, %v820, %v767
        %832 = vst [vmem:[#allocation2] sm:$0x1] %v831
        %834 = vset.pattern.permute.xlu0 0
        %835 = vperm.xlu0 %834, %v777
        %v836 = vpop.permute.xlu0 %835
        %v838 = vlaneseq
        %v839 = vshrl.u32 %v838, 7
        %v840 = vsub.s32 0, %v839
        %v841 = vrot.slane %v836, %v840
        %v842 = vsel %vm481, %v841, 0.0
        %844 = vset.pattern.permute.xlu0 0
        %845 = vperm.xlu0 %844, %v785
        %v846 = vpop.permute.xlu0 %845
        %v848 = vlaneseq
        %v849 = vshrl.u32 %v848, 7
        %v850 = vsub.s32 0, %v849
        %v851 = vrot.slane %v846, %v850
        %v852 = vsel %vm492, %v851, 0.0
        %v853 = vadd.f32 %v842, %v852
        %855 = vset.pattern.permute.xlu0 0
        %856 = vperm.xlu0 %855, %v788
        %v857 = vpop.permute.xlu0 %856
        %v859 = vlaneseq
        %v860 = vshrl.u32 %v859, 7
        %v861 = vsub.s32 0, %v860
        %v862 = vrot.slane %v857, %v861
        %v863 = vsel %vm504, %v862, 0.0
        %v864 = vadd.f32 %v853, %v863
        %866 = vset.pattern.permute.xlu0 0
        %867 = vperm.xlu0 %866, %v766
        %v868 = vpop.permute.xlu0 %867
        %v870 = vlaneseq
        %v871 = vshrl.u32 %v870, 7
        %v872 = vsub.s32 0, %v871
        %v873 = vrot.slane %v868, %v872
        %v874 = vsel %vm516, %v873, 0.0
        %v875 = vadd.f32 %v864, %v874
        %876 = vst [vmem:[%s356 + $0x3] sm:$0x1] %v875
        %s877 = sadd.s32 %s404, 4
        %p878 = scmp.lt.s32.totalorder %s877, 13
        %v879 = vld [vmem:[#allocation3] sm:$0x1]
        %v880 = vld [vmem:[#allocation4] sm:$0x1]
        %v881 = vld [vmem:[#allocation5] sm:$0x1]
        %v882 = vld [vmem:[#allocation6] sm:$0x1]
        %v883 = vld [vmem:[#allocation2] sm:$0x1]
        %s884 = scalar_lea.vmem %s298, 4 [#allocation7]
        %v885 = vld [vmem:[%s884] sm:$0x1]
        %s886 = scalar_lea.vmem %s307, 4 [#allocation10]
        %v887 = vld [vmem:[%s886] sm:$0x1]
        %s888 = scalar_lea.vmem %s316, 4 [#allocation12]
        %v889 = vld [vmem:[%s888] sm:$0x1]
        %v890 = vmul.f32 %v879, 0.9
        %v891 = vadd.f32 %v890, %v880
        %v892 = vmul.f32 %v881, %v879
        %v893 = vsub.f32 %v891, %v892
        %v894 = vmul.f32 %v885, %v883
        %v895 = vsel %vm419, %v894, 0.0
        %896 = vadd.xlane.f32.xlu0 %v895
        %v897 = vpop.xlane.xlu0 %896
        %v898 = vadd.f32 %v897, 0.0
        %v899 = vmul.f32 %v880, 0.85
        %v900 = vadd.f32 %v899, %v898
        %v901 = vadd.f32 %v900, %v428
        %vm902 = vcmp.gt.f32.partialorder %v893, 1.0
        %v903 = vsel %vm902, 1, 0
        %v904 = vcvt.s32.f32 %v903
        %vm905 = vcmp.ne.f32.partialorder %v904, 0.0
        %vm906 = vcmp.ne.f32.partialorder %v887, 0.0
        %v907 = vsel %vm905, 1, 0
        %908 = vset.pattern.permute.xlu0 0
        %909 = vperm.xlu0 %908, %v907
        %v910 = vpop.permute.xlu0 %909
        %v911 = vlaneseq
        %v912 = vshrl.u32 %v911, 7
        %v913 = vsub.s32 0, %v912
        %v914 = vrot.slane %v910, %v913
        %vm915 = vcmp.eq.s32.totalorder %v914, 1
        %vm916 = vmand %vm906, %vm915
        %v917 = vsub.f32 0.0, %v887
        %v918 = vmul.f32 %v917, %v447
        %v919 = vmul.f32 %v918, 1.442695
        %v920 = vpow.pop %v919
        %v921 = vmul.f32 %v920, 0.03125
        %v922 = vsel %vm916, %v921, 0.0
        %vm923 = vcmp.ne.f32.partialorder %v889, 0.0
        %vm924 = vcmp.eq.f32.partialorder %v887, 0.0
        %vm925 = vmand %vm923, %vm924
        %vm926 = vmand %vm915, %vm925
        %v927 = vsub.f32 0.0, %v889
        %v928 = vmul.f32 %v927, %v458
        %v929 = vmul.f32 %v928, 1.442695
        %v930 = vpow.pop %v929
        %v931 = vmul.f32 %v930, 0.0265625
        %v932 = vsel %vm926, %v931, 0.0
        %v933 = vadd.f32 %v883, %v922
        %v934 = vsub.f32 %v933, %v932
        %v935 = vmax.f32 %v934, 0.0
        %v936 = vmin.f32 %v935, 1.0
        %s937 = scalar_select %p878, 1, 0
        %v938 = vstv %s937
        %vm939 = vcmp.eq.s32.totalorder %v938, 1
        %v940 = vsel %vm939, %v893, %v879
        %941 = vst.msk [vmem:[#allocation3] sm:$0x1] %vm472, %v940
        %v942 = vsel %vm939, %v901, %v880
        %943 = vst.msk [vmem:[#allocation4] sm:$0x1] %vm472, %v942
        %v944 = vsel %vm939, %v904, %v881
        %945 = vst.msk [vmem:[#allocation5] sm:$0x1] %vm472, %v944
        %946 = vst.msk [vmem:[#allocation6] sm:$0x1] %vm472, %v882
        %v947 = vsel %vm939, %v936, %v883
        %948 = vst [vmem:[#allocation2] sm:$0x1] %v947
        %950 = vset.pattern.permute.xlu0 0
        %951 = vperm.xlu0 %950, %v893
        %v952 = vpop.permute.xlu0 %951
        %v954 = vlaneseq
        %v955 = vshrl.u32 %v954, 7
        %v956 = vsub.s32 0, %v955
        %v957 = vrot.slane %v952, %v956
        %v958 = vsel %vm481, %v957, 0.0
        %960 = vset.pattern.permute.xlu0 0
        %961 = vperm.xlu0 %960, %v901
        %v962 = vpop.permute.xlu0 %961
        %v964 = vlaneseq
        %v965 = vshrl.u32 %v964, 7
        %v966 = vsub.s32 0, %v965
        %v967 = vrot.slane %v962, %v966
        %v968 = vsel %vm492, %v967, 0.0
        %v969 = vadd.f32 %v958, %v968
        %971 = vset.pattern.permute.xlu0 0
        %972 = vperm.xlu0 %971, %v904
        %v973 = vpop.permute.xlu0 %972
        %v975 = vlaneseq
        %v976 = vshrl.u32 %v975, 7
        %v977 = vsub.s32 0, %v976
        %v978 = vrot.slane %v973, %v977
        %v979 = vsel %vm504, %v978, 0.0
        %v980 = vadd.f32 %v969, %v979
        %982 = vset.pattern.permute.xlu0 0
        %983 = vperm.xlu0 %982, %v882
        %v984 = vpop.permute.xlu0 %983
        %v986 = vlaneseq
        %v987 = vshrl.u32 %v986, 7
        %v988 = vsub.s32 0, %v987
        %v989 = vrot.slane %v984, %v988
        %v990 = vsel %vm516, %v989, 0.0
        %v991 = vadd.f32 %v980, %v990
        %992 = vst [vmem:[%s356 + $0x4] sm:$0x1] %v991
        %s993 = sadd.s32 %s404, 5
        %p994 = scmp.lt.s32.totalorder %s993, 13
        %v995 = vld [vmem:[#allocation3] sm:$0x1]
        %v996 = vld [vmem:[#allocation4] sm:$0x1]
        %v997 = vld [vmem:[#allocation5] sm:$0x1]
        %v998 = vld [vmem:[#allocation6] sm:$0x1]
        %v999 = vld [vmem:[#allocation2] sm:$0x1]
        %s1000 = scalar_lea.vmem %s298, 5 [#allocation7]
        %v1001 = vld [vmem:[%s1000] sm:$0x1]
        %s1002 = scalar_lea.vmem %s307, 5 [#allocation10]
        %v1003 = vld [vmem:[%s1002] sm:$0x1]
        %s1004 = scalar_lea.vmem %s316, 5 [#allocation12]
        %v1005 = vld [vmem:[%s1004] sm:$0x1]
        %v1006 = vmul.f32 %v995, 0.9
        %v1007 = vadd.f32 %v1006, %v996
        %v1008 = vmul.f32 %v997, %v995
        %v1009 = vsub.f32 %v1007, %v1008
        %v1010 = vmul.f32 %v1001, %v999
        %v1011 = vsel %vm419, %v1010, 0.0
        %1012 = vadd.xlane.f32.xlu0 %v1011
        %v1013 = vpop.xlane.xlu0 %1012
        %v1014 = vadd.f32 %v1013, 0.0
        %v1015 = vmul.f32 %v996, 0.85
        %v1016 = vadd.f32 %v1015, %v1014
        %v1017 = vadd.f32 %v1016, %v428
        %vm1018 = vcmp.gt.f32.partialorder %v1009, 1.0
        %v1019 = vsel %vm1018, 1, 0
        %v1020 = vcvt.s32.f32 %v1019
        %vm1021 = vcmp.ne.f32.partialorder %v1020, 0.0
        %vm1022 = vcmp.ne.f32.partialorder %v1003, 0.0
        %v1023 = vsel %vm1021, 1, 0
        %1024 = vset.pattern.permute.xlu0 0
        %1025 = vperm.xlu0 %1024, %v1023
        %v1026 = vpop.permute.xlu0 %1025
        %v1027 = vlaneseq
        %v1028 = vshrl.u32 %v1027, 7
        %v1029 = vsub.s32 0, %v1028
        %v1030 = vrot.slane %v1026, %v1029
        %vm1031 = vcmp.eq.s32.totalorder %v1030, 1
        %vm1032 = vmand %vm1022, %vm1031
        %v1033 = vsub.f32 0.0, %v1003
        %v1034 = vmul.f32 %v1033, %v447
        %v1035 = vmul.f32 %v1034, 1.442695
        %v1036 = vpow.pop %v1035
        %v1037 = vmul.f32 %v1036, 0.03125
        %v1038 = vsel %vm1032, %v1037, 0.0
        %vm1039 = vcmp.ne.f32.partialorder %v1005, 0.0
        %vm1040 = vcmp.eq.f32.partialorder %v1003, 0.0
        %vm1041 = vmand %vm1039, %vm1040
        %vm1042 = vmand %vm1031, %vm1041
        %v1043 = vsub.f32 0.0, %v1005
        %v1044 = vmul.f32 %v1043, %v458
        %v1045 = vmul.f32 %v1044, 1.442695
        %v1046 = vpow.pop %v1045
        %v1047 = vmul.f32 %v1046, 0.0265625
        %v1048 = vsel %vm1042, %v1047, 0.0
        %v1049 = vadd.f32 %v999, %v1038
        %v1050 = vsub.f32 %v1049, %v1048
        %v1051 = vmax.f32 %v1050, 0.0
        %v1052 = vmin.f32 %v1051, 1.0
        %s1053 = scalar_select %p994, 1, 0
        %v1054 = vstv %s1053
        %vm1055 = vcmp.eq.s32.totalorder %v1054, 1
        %v1056 = vsel %vm1055, %v1009, %v995
        %1057 = vst.msk [vmem:[#allocation3] sm:$0x1] %vm472, %v1056
        %v1058 = vsel %vm1055, %v1017, %v996
        %1059 = vst.msk [vmem:[#allocation4] sm:$0x1] %vm472, %v1058
        %v1060 = vsel %vm1055, %v1020, %v997
        %1061 = vst.msk [vmem:[#allocation5] sm:$0x1] %vm472, %v1060
        %1062 = vst.msk [vmem:[#allocation6] sm:$0x1] %vm472, %v998
        %v1063 = vsel %vm1055, %v1052, %v999
        %1064 = vst [vmem:[#allocation2] sm:$0x1] %v1063
        %1066 = vset.pattern.permute.xlu0 0
        %1067 = vperm.xlu0 %1066, %v1009
        %v1068 = vpop.permute.xlu0 %1067
        %v1070 = vlaneseq
        %v1071 = vshrl.u32 %v1070, 7
        %v1072 = vsub.s32 0, %v1071
        %v1073 = vrot.slane %v1068, %v1072
        %v1074 = vsel %vm481, %v1073, 0.0
        %1076 = vset.pattern.permute.xlu0 0
        %1077 = vperm.xlu0 %1076, %v1017
        %v1078 = vpop.permute.xlu0 %1077
        %v1080 = vlaneseq
        %v1081 = vshrl.u32 %v1080, 7
        %v1082 = vsub.s32 0, %v1081
        %v1083 = vrot.slane %v1078, %v1082
        %v1084 = vsel %vm492, %v1083, 0.0
        %v1085 = vadd.f32 %v1074, %v1084
        %1087 = vset.pattern.permute.xlu0 0
        %1088 = vperm.xlu0 %1087, %v1020
        %v1089 = vpop.permute.xlu0 %1088
        %v1091 = vlaneseq
        %v1092 = vshrl.u32 %v1091, 7
        %v1093 = vsub.s32 0, %v1092
        %v1094 = vrot.slane %v1089, %v1093
        %v1095 = vsel %vm504, %v1094, 0.0
        %v1096 = vadd.f32 %v1085, %v1095
        %1098 = vset.pattern.permute.xlu0 0
        %1099 = vperm.xlu0 %1098, %v998
        %v1100 = vpop.permute.xlu0 %1099
        %v1102 = vlaneseq
        %v1103 = vshrl.u32 %v1102, 7
        %v1104 = vsub.s32 0, %v1103
        %v1105 = vrot.slane %v1100, %v1104
        %v1106 = vsel %vm516, %v1105, 0.0
        %v1107 = vadd.f32 %v1096, %v1106
        %1108 = vst [vmem:[%s356 + $0x5] sm:$0x1] %v1107
        %s1109 = sadd.s32 %s404, 6
        %p1110 = scmp.lt.s32.totalorder %s1109, 13
        %v1111 = vld [vmem:[#allocation3] sm:$0x1]
        %v1112 = vld [vmem:[#allocation4] sm:$0x1]
        %v1113 = vld [vmem:[#allocation5] sm:$0x1]
        %v1114 = vld [vmem:[#allocation6] sm:$0x1]
        %v1115 = vld [vmem:[#allocation2] sm:$0x1]
        %s1116 = scalar_lea.vmem %s298, 6 [#allocation7]
        %v1117 = vld [vmem:[%s1116] sm:$0x1]
        %s1118 = scalar_lea.vmem %s307, 6 [#allocation10]
        %v1119 = vld [vmem:[%s1118] sm:$0x1]
        %s1120 = scalar_lea.vmem %s316, 6 [#allocation12]
        %v1121 = vld [vmem:[%s1120] sm:$0x1]
        %v1122 = vmul.f32 %v1111, 0.9
        %v1123 = vadd.f32 %v1122, %v1112
        %v1124 = vmul.f32 %v1113, %v1111
        %v1125 = vsub.f32 %v1123, %v1124
        %v1126 = vmul.f32 %v1117, %v1115
        %v1127 = vsel %vm419, %v1126, 0.0
        %1128 = vadd.xlane.f32.xlu0 %v1127
        %v1129 = vpop.xlane.xlu0 %1128
        %v1130 = vadd.f32 %v1129, 0.0
        %v1131 = vmul.f32 %v1112, 0.85
        %v1132 = vadd.f32 %v1131, %v1130
        %v1133 = vadd.f32 %v1132, %v428
        %vm1134 = vcmp.gt.f32.partialorder %v1125, 1.0
        %v1135 = vsel %vm1134, 1, 0
        %v1136 = vcvt.s32.f32 %v1135
        %vm1137 = vcmp.ne.f32.partialorder %v1136, 0.0
        %vm1138 = vcmp.ne.f32.partialorder %v1119, 0.0
        %v1139 = vsel %vm1137, 1, 0
        %1140 = vset.pattern.permute.xlu0 0
        %1141 = vperm.xlu0 %1140, %v1139
        %v1142 = vpop.permute.xlu0 %1141
        %v1143 = vlaneseq
        %v1144 = vshrl.u32 %v1143, 7
        %v1145 = vsub.s32 0, %v1144
        %v1146 = vrot.slane %v1142, %v1145
        %vm1147 = vcmp.eq.s32.totalorder %v1146, 1
        %vm1148 = vmand %vm1138, %vm1147
        %v1149 = vsub.f32 0.0, %v1119
        %v1150 = vmul.f32 %v1149, %v447
        %v1151 = vmul.f32 %v1150, 1.442695
        %v1152 = vpow.pop %v1151
        %v1153 = vmul.f32 %v1152, 0.03125
        %v1154 = vsel %vm1148, %v1153, 0.0
        %vm1155 = vcmp.ne.f32.partialorder %v1121, 0.0
        %vm1156 = vcmp.eq.f32.partialorder %v1119, 0.0
        %vm1157 = vmand %vm1155, %vm1156
        %vm1158 = vmand %vm1147, %vm1157
        %v1159 = vsub.f32 0.0, %v1121
        %v1160 = vmul.f32 %v1159, %v458
        %v1161 = vmul.f32 %v1160, 1.442695
        %v1162 = vpow.pop %v1161
        %v1163 = vmul.f32 %v1162, 0.0265625
        %v1164 = vsel %vm1158, %v1163, 0.0
        %v1165 = vadd.f32 %v1115, %v1154
        %v1166 = vsub.f32 %v1165, %v1164
        %v1167 = vmax.f32 %v1166, 0.0
        %v1168 = vmin.f32 %v1167, 1.0
        %s1169 = scalar_select %p1110, 1, 0
        %v1170 = vstv %s1169
        %vm1171 = vcmp.eq.s32.totalorder %v1170, 1
        %v1172 = vsel %vm1171, %v1125, %v1111
        %1173 = vst.msk [vmem:[#allocation3] sm:$0x1] %vm472, %v1172
        %v1174 = vsel %vm1171, %v1133, %v1112
        %1175 = vst.msk [vmem:[#allocation4] sm:$0x1] %vm472, %v1174
        %v1176 = vsel %vm1171, %v1136, %v1113
        %1177 = vst.msk [vmem:[#allocation5] sm:$0x1] %vm472, %v1176
        %1178 = vst.msk [vmem:[#allocation6] sm:$0x1] %vm472, %v1114
        %v1179 = vsel %vm1171, %v1168, %v1115
        %1180 = vst [vmem:[#allocation2] sm:$0x1] %v1179
        %1182 = vset.pattern.permute.xlu0 0
        %1183 = vperm.xlu0 %1182, %v1125
        %v1184 = vpop.permute.xlu0 %1183
        %v1186 = vlaneseq
        %v1187 = vshrl.u32 %v1186, 7
        %v1188 = vsub.s32 0, %v1187
        %v1189 = vrot.slane %v1184, %v1188
        %v1190 = vsel %vm481, %v1189, 0.0
        %1192 = vset.pattern.permute.xlu0 0
        %1193 = vperm.xlu0 %1192, %v1133
        %v1194 = vpop.permute.xlu0 %1193
        %v1196 = vlaneseq
        %v1197 = vshrl.u32 %v1196, 7
        %v1198 = vsub.s32 0, %v1197
        %v1199 = vrot.slane %v1194, %v1198
        %v1200 = vsel %vm492, %v1199, 0.0
        %v1201 = vadd.f32 %v1190, %v1200
        %1203 = vset.pattern.permute.xlu0 0
        %1204 = vperm.xlu0 %1203, %v1136
        %v1205 = vpop.permute.xlu0 %1204
        %v1207 = vlaneseq
        %v1208 = vshrl.u32 %v1207, 7
        %v1209 = vsub.s32 0, %v1208
        %v1210 = vrot.slane %v1205, %v1209
        %v1211 = vsel %vm504, %v1210, 0.0
        %v1212 = vadd.f32 %v1201, %v1211
        %1214 = vset.pattern.permute.xlu0 0
        %1215 = vperm.xlu0 %1214, %v1114
        %v1216 = vpop.permute.xlu0 %1215
        %v1218 = vlaneseq
        %v1219 = vshrl.u32 %v1218, 7
        %v1220 = vsub.s32 0, %v1219
        %v1221 = vrot.slane %v1216, %v1220
        %v1222 = vsel %vm516, %v1221, 0.0
        %v1223 = vadd.f32 %v1212, %v1222
        %1224 = vst [vmem:[%s356 + $0x6] sm:$0x1] %v1223
        %s1225 = sadd.s32 %s404, 7
        %p1226 = scmp.lt.s32.totalorder %s1225, 13
        %v1227 = vld [vmem:[#allocation3] sm:$0x1]
        %v1228 = vld [vmem:[#allocation4] sm:$0x1]
        %v1229 = vld [vmem:[#allocation5] sm:$0x1]
        %v1230 = vld [vmem:[#allocation6] sm:$0x1]
        %v1231 = vld [vmem:[#allocation2] sm:$0x1]
        %s1232 = scalar_lea.vmem %s298, 7 [#allocation7]
        %v1233 = vld [vmem:[%s1232] sm:$0x1]
        %s1234 = scalar_lea.vmem %s307, 7 [#allocation10]
        %v1235 = vld [vmem:[%s1234] sm:$0x1]
        %s1236 = scalar_lea.vmem %s316, 7 [#allocation12]
        %v1237 = vld [vmem:[%s1236] sm:$0x1]
        %v1238 = vmul.f32 %v1227, 0.9
        %v1239 = vadd.f32 %v1238, %v1228
        %v1240 = vmul.f32 %v1229, %v1227
        %v1241 = vsub.f32 %v1239, %v1240
        %v1242 = vmul.f32 %v1233, %v1231
        %v1243 = vsel %vm419, %v1242, 0.0
        %1244 = vadd.xlane.f32.xlu0 %v1243
        %v1245 = vpop.xlane.xlu0 %1244
        %v1246 = vadd.f32 %v1245, 0.0
        %v1247 = vmul.f32 %v1228, 0.85
        %v1248 = vadd.f32 %v1247, %v1246
        %v1249 = vadd.f32 %v1248, %v428
        %vm1250 = vcmp.gt.f32.partialorder %v1241, 1.0
        %v1251 = vsel %vm1250, 1, 0
        %v1252 = vcvt.s32.f32 %v1251
        %vm1253 = vcmp.ne.f32.partialorder %v1252, 0.0
        %vm1254 = vcmp.ne.f32.partialorder %v1235, 0.0
        %v1255 = vsel %vm1253, 1, 0
        %1256 = vset.pattern.permute.xlu0 0
        %1257 = vperm.xlu0 %1256, %v1255
        %v1258 = vpop.permute.xlu0 %1257
        %v1259 = vlaneseq
        %v1260 = vshrl.u32 %v1259, 7
        %v1261 = vsub.s32 0, %v1260
        %v1262 = vrot.slane %v1258, %v1261
        %vm1263 = vcmp.eq.s32.totalorder %v1262, 1
        %vm1264 = vmand %vm1254, %vm1263
        %v1265 = vsub.f32 0.0, %v1235
        %v1266 = vmul.f32 %v1265, %v447
        %v1267 = vmul.f32 %v1266, 1.442695
        %v1268 = vpow.pop %v1267
        %v1269 = vmul.f32 %v1268, 0.03125
        %v1270 = vsel %vm1264, %v1269, 0.0
        %vm1271 = vcmp.ne.f32.partialorder %v1237, 0.0
        %vm1272 = vcmp.eq.f32.partialorder %v1235, 0.0
        %vm1273 = vmand %vm1271, %vm1272
        %vm1274 = vmand %vm1263, %vm1273
        %v1275 = vsub.f32 0.0, %v1237
        %v1276 = vmul.f32 %v1275, %v458
        %v1277 = vmul.f32 %v1276, 1.442695
        %v1278 = vpow.pop %v1277
        %v1279 = vmul.f32 %v1278, 0.0265625
        %v1280 = vsel %vm1274, %v1279, 0.0
        %v1281 = vadd.f32 %v1231, %v1270
        %v1282 = vsub.f32 %v1281, %v1280
        %v1283 = vmax.f32 %v1282, 0.0
        %v1284 = vmin.f32 %v1283, 1.0
        %s1285 = scalar_select %p1226, 1, 0
        %v1286 = vstv %s1285
        %vm1287 = vcmp.eq.s32.totalorder %v1286, 1
        %v1288 = vsel %vm1287, %v1241, %v1227
        %1289 = vst.msk [vmem:[#allocation3] sm:$0x1] %vm472, %v1288
        %v1290 = vsel %vm1287, %v1249, %v1228
        %1291 = vst.msk [vmem:[#allocation4] sm:$0x1] %vm472, %v1290
        %v1292 = vsel %vm1287, %v1252, %v1229
        %1293 = vst.msk [vmem:[#allocation5] sm:$0x1] %vm472, %v1292
        %1294 = vst.msk [vmem:[#allocation6] sm:$0x1] %vm472, %v1230
        %v1295 = vsel %vm1287, %v1284, %v1231
        %1296 = vst [vmem:[#allocation2] sm:$0x1] %v1295
        %1298 = vset.pattern.permute.xlu0 0
        %1299 = vperm.xlu0 %1298, %v1241
        %v1300 = vpop.permute.xlu0 %1299
        %v1302 = vlaneseq
        %v1303 = vshrl.u32 %v1302, 7
        %v1304 = vsub.s32 0, %v1303
        %v1305 = vrot.slane %v1300, %v1304
        %v1306 = vsel %vm481, %v1305, 0.0
        %1308 = vset.pattern.permute.xlu0 0
        %1309 = vperm.xlu0 %1308, %v1249
        %v1310 = vpop.permute.xlu0 %1309
        %v1312 = vlaneseq
        %v1313 = vshrl.u32 %v1312, 7
        %v1314 = vsub.s32 0, %v1313
        %v1315 = vrot.slane %v1310, %v1314
        %v1316 = vsel %vm492, %v1315, 0.0
        %v1317 = vadd.f32 %v1306, %v1316
        %1319 = vset.pattern.permute.xlu0 0
        %1320 = vperm.xlu0 %1319, %v1252
        %v1321 = vpop.permute.xlu0 %1320
        %v1323 = vlaneseq
        %v1324 = vshrl.u32 %v1323, 7
        %v1325 = vsub.s32 0, %v1324
        %v1326 = vrot.slane %v1321, %v1325
        %v1327 = vsel %vm504, %v1326, 0.0
        %v1328 = vadd.f32 %v1317, %v1327
        %1330 = vset.pattern.permute.xlu0 0
        %1331 = vperm.xlu0 %1330, %v1230
        %v1332 = vpop.permute.xlu0 %1331
        %v1334 = vlaneseq
        %v1335 = vshrl.u32 %v1334, 7
        %v1336 = vsub.s32 0, %v1335
        %v1337 = vrot.slane %v1332, %v1336
        %v1338 = vsel %vm516, %v1337, 0.0
        %v1339 = vadd.f32 %v1328, %v1338
        %1340 = vst [vmem:[%s356 + $0x7] sm:$0x1] %v1339
        %p1341 = scmp.eq.s32.totalorder %s29, 1
        // Predicated region
        $region61: #{tpu_custom_call.1} parent=39 // pred_check
          %p1342 = pneg %p1341
        $region62: #{tpu_custom_call.1} parent=39 // pred_check_branch
          %1344 = sbr.rel (%p1342) target = $region64
        $region63: #{tpu_custom_call.1} parent=39 // pred_region
          %v1345 = vld [vmem:[#allocation2] sm:$0x1]
          %1346 = vst [vmem:[#allocation16] sm:$0x1] %v1345
        $region64: #{tpu_custom_call.1} parent=39 // pred_fallthru
          _
        %s1347 = sand.u32 %s157, 1
        %s1348 = scalar_lea.sflag [#allocation9], %s1347
        %s1349 = sand.u32 %s157, 1
        %s1350 = smul.addr %s1349, 8
        %s1351 = scalar_lea.vmem [#allocation15], %s1350
        // Predicated region
        $region65: #{tpu_custom_call.1} parent=39 // pred_check
          %p1352 = pneg %p167
        $region66: #{tpu_custom_call.1} parent=39 // pred_check_branch
          %1354 = sbr.rel (%p1352) target = $region68
        $region67: #{tpu_custom_call.1} parent=39 // pred_region
          %s1356 = ssub.s32 128, 128
          %1357 = vsyncadd %s1348, %s1356
          %s1358 = smul.addr %s29, 128
          %s1359 = scalar_lea.hbm %s5, %s1358
          %s1361 = sshll.u32 %s1351, 4
          %s1362 = int_to_ptr.vmem [resolvable:$true] %s1361
          %1364 = dma.vmem_to_hbm [thread:$0]  %s1362, 128, %s1359, %s1348
        $region68: #{tpu_custom_call.1} parent=39 // pred_fallthru
          _
        // Predicated region
        $region69: #{tpu_custom_call.1} parent=39 // pred_check
          %p1365 = pneg %p188
        $region70: #{tpu_custom_call.1} parent=39 // pred_check_branch
          %1367 = sbr.rel (%p1365) target = $region72
        $region71: #{tpu_custom_call.1} parent=39 // pred_region
          %s1369 = ssub.s32 16, 16
          %1370 = vsyncadd [#allocation17], %s1369
          %s1372 = sshll.u32 [#allocation16], 4
          %s1373 = int_to_ptr.vmem [resolvable:$true] %s1372
          %1375 = dma.vmem_to_hbm [thread:$0]  %s1373, 16, %s6, [#allocation17]
        $region72: #{tpu_custom_call.1} parent=39 // pred_fallthru
          _
        // Predicated region
        $region73: #{tpu_custom_call.1} parent=39 // pred_check
          %p1376 = pneg %p188
        $region74: #{tpu_custom_call.1} parent=39 // pred_check_branch
          %1378 = sbr.rel (%p1376) target = $region76
        $region75: #{tpu_custom_call.1} parent=39 // pred_region
          %1379 = dma.done [#allocation17], 16
        $region76: #{tpu_custom_call.1} parent=39 // pred_fallthru
          _
      $region40: #{tpu_custom_call.1} parent=5 // pred_fallthru
        _
      %p1380 = scmp.le.s32.totalorder 2, %s24
      // Predicated region
      $region77: #{tpu_custom_call.1} parent=5 // pred_check
        %p1381 = pneg %p1380
      $region78: #{tpu_custom_call.1} parent=5 // pred_check_branch
        %1383 = sbr.rel (%p1381) target = $region80
      $region79: #{tpu_custom_call.1} parent=5 // pred_region
        %s1384 = ssub.s32 %s24, 2
        // Predicated region
        $region81: #{tpu_custom_call.1} parent=79 // pred_check
          %p1385 = pneg %p173
        $region82: #{tpu_custom_call.1} parent=79 // pred_check_branch
          %1387 = sbr.rel (%p1385) target = $region84
        $region83: #{tpu_custom_call.1} parent=79 // pred_region
          %s1388 = sand.u32 %s158, 1
          %s1389 = scalar_lea.sflag [#allocation9], %s1388
          %s1390 = sand.u32 %s158, 1
          %s1391 = smul.addr %s1390, 8
          %s1392 = scalar_lea.vmem [#allocation15], %s1391
          %1393 = dma.done %s1389, 128
        $region84: #{tpu_custom_call.1} parent=79 // pred_fallthru
          _
      $region80: #{tpu_custom_call.1} parent=5 // pred_fallthru
        _
    $region6: #{tpu_custom_call.1} parent=1 // loop_footer
      %s28 = sadd.s32 1, %s24
    $region7: #{tpu_custom_call.1} parent=1 // loop_footer_branch
      %23 = sbr.rel target = $region3
    $region8: #{tpu_custom_call.1} parent=1 // loop_exit
      _
    %1394 = vsyncpa [#allocation8], 1
    %s1395 = scalar_lea.sflag [#allocation8], 1
    %1396 = vsyncpa %s1395, 1
    %1397 = vsyncpa [#allocation11], 1
    %s1398 = scalar_lea.sflag [#allocation11], 1
    %1399 = vsyncpa %s1398, 1
    %1400 = vsyncpa [#allocation14], 1
    %1401 = vsyncpa [#allocation9], 1
    %s1402 = scalar_lea.sflag [#allocation9], 1
    %1403 = vsyncpa %s1402, 1
    %1404 = vsyncpa [#allocation17], 1

</llo_original>
